<compile_context>
chip_gen: v7x
topology: tpu7x:2x2x1
jax: 0.10.0
libtpu: 0.0.40
codegen_flags: <defaults>
</compile_context>

<pallas_src>
import functools

import jax
import jax.numpy as jnp
from jax.experimental import pallas as pl
from jax.experimental.pallas import tpu as pltpu

H4 = 256
K_FEATURES = 20 * 20 * H4          # 102400 input features (fixed by the module)
FC1_OUT = 128                      # output width for the synthetic run (lane-dense)


def _linear_relu_kernel(x_ref, w_ref, b_ref, relu_ref, lin_ref):
    k = pl.program_id(0)

    @pl.when(k == 0)
    def _():
        lin_ref[...] = jnp.zeros_like(lin_ref)

    # Accumulate directly into the resident (B, N) f32 output block.
    lin_ref[...] += jnp.dot(
        x_ref[...], w_ref[...], preferred_element_type=jnp.float32
    )

    @pl.when(k == pl.num_programs(0) - 1)
    def _():
        y = lin_ref[...] + b_ref[...]          # bias broadcast over batch
        lin_ref[...] = y                        # pre-activation output
        relu_ref[...] = jnp.maximum(y, 0.0)     # fused ReLU output


@functools.partial(jax.jit, static_argnames=("tk",))
def embedding_forward(x, w_kn, bias, *, tk=12800):
    """x: (B, K), w_kn: (K, N), bias: (N,) -> (relu(y), y), both (B, N) f32.

    x / w_kn may be f32 or bf16 (cast by the caller); accumulation is f32.
    """
    B, K = x.shape
    Kw, N = w_kn.shape
    assert K == Kw and K % tk == 0, "tk must divide K (K = 2^12 * 5^2)"
    assert x.dtype == w_kn.dtype
    bias2d = bias.reshape(1, N).astype(jnp.float32)

    grid = (K // tk,)
    itemsize = jnp.dtype(x.dtype).itemsize
    cost = pl.CostEstimate(
        flops=2 * B * K * N,
        transcendentals=0,
        bytes_accessed=K * N * itemsize + B * K * itemsize + 2 * B * N * 4,
    )

    relu_out, lin_out = pl.pallas_call(
        _linear_relu_kernel,
        out_shape=(
            jax.ShapeDtypeStruct((B, N), jnp.float32),   # relu(y)
            jax.ShapeDtypeStruct((B, N), jnp.float32),   # y (pre-activation)
        ),
        grid_spec=pltpu.PrefetchScalarGridSpec(
            num_scalar_prefetch=0,
            grid=grid,
            in_specs=[
                pl.BlockSpec((B, tk), lambda k: (0, k)),   # x tile along K
                pl.BlockSpec((tk, N), lambda k: (k, 0)),   # weight tile along K
                pl.BlockSpec((1, N), lambda k: (0, 0)),    # bias (resident)
            ],
            out_specs=[
                pl.BlockSpec((B, N), lambda k: (0, 0)),    # relu output (resident)
                pl.BlockSpec((B, N), lambda k: (0, 0)),    # pre-activation accumulator
            ],
        ),
        compiler_params=pltpu.CompilerParams(
            dimension_semantics=("arbitrary",),
            vmem_limit_bytes=32 * 1024 * 1024,
        ),
        cost_estimate=cost,
    )(x, w_kn, bias2d)
    return relu_out, lin_out


if __name__ == "__main__":
    key = jax.random.PRNGKey(0)
    kx, kw, kb = jax.random.split(key, 3)

    B = 2
    # Deterministic synthetic parameters (PyTorch-style uniform fan-in init).
    bound = 1.0 / (K_FEATURES ** 0.5)
    w_pt = jax.random.uniform(
        kw, (FC1_OUT, K_FEATURES), jnp.float32, minval=-bound, maxval=bound
    )  # PyTorch layout (out, in)
    bias = jax.random.uniform(
        kb, (FC1_OUT,), jnp.float32, minval=-bound, maxval=bound
    )
    w_kn = jnp.asarray(w_pt.T)  # kernel layout (K, N)

    x = jax.random.normal(kx, (B, K_FEATURES), jnp.float32)

    # ---- f32 path: exact module semantics -------------------------------
    relu_out, lin_out = embedding_forward(x, w_kn, bias)
    jax.block_until_ready((relu_out, lin_out))

    ref_lin = x @ w_pt.T + bias
    ref_relu = jnp.maximum(ref_lin, 0.0)
    assert jnp.allclose(lin_out, ref_lin, atol=2e-3, rtol=2e-3)
    assert jnp.allclose(relu_out, ref_relu, atol=2e-3, rtol=2e-3)

    # ---- bf16 weight-streaming path: ~2x less HBM traffic, f32 accumulate
    relu_bf, lin_bf = embedding_forward(
        x.astype(jnp.bfloat16), w_kn.astype(jnp.bfloat16), bias
    )
    jax.block_until_ready((relu_bf, lin_bf))
    assert jnp.allclose(lin_bf, ref_lin, atol=2e-2, rtol=2e-2)
    assert jnp.allclose(relu_bf, ref_relu, atol=2e-2, rtol=2e-2)

    print("KERNEL_OK")
</pallas_src>

<mosaic_0001>
module attributes {stable_mosaic.version = 11 : i64} {
  func.func @_linear_relu_kernel(%arg0: i32, %arg1: memref<2x12800xf32, #tpu.memory_space<vmem>>, %arg2: memref<12800x128xf32, #tpu.memory_space<vmem>>, %arg3: memref<1x128xf32, #tpu.memory_space<vmem>>, %arg4: memref<2x128xf32, #tpu.memory_space<vmem>>, %arg5: memref<2x128xf32, #tpu.memory_space<vmem>>) attributes {dimension_semantics = [#tpu.dimension_semantics<arbitrary>], iteration_bounds = array<i64: 8>, scalar_prefetch = 0 : i64, scratch_operands = 0 : i64, tpu.core_type = #tpu.core_type<tc>, window_params = [{transform_indices = @transform_0, window_bounds = array<i64: 2, 12800>}, {transform_indices = @transform_1, window_bounds = array<i64: 12800, 128>}, {pipeline_mode = #tpu.pipeline_mode<synchronous>, transform_indices = @transform_2, window_bounds = array<i64: 1, 128>}, {pipeline_mode = #tpu.pipeline_mode<synchronous>, transform_indices = @transform_3, window_bounds = array<i64: 2, 128>}, {pipeline_mode = #tpu.pipeline_mode<synchronous>, transform_indices = @transform_4, window_bounds = array<i64: 2, 128>}]} {
    %c0_i32 = arith.constant 0 : i32
    %0 = arith.cmpi eq, %arg0, %c0_i32 : i32
    %1 = arith.extui %0 : i1 to i32
    %c0_i32_0 = arith.constant 0 : i32
    %2 = arith.cmpi ne, %1, %c0_i32_0 : i32
    scf.if %2 {
      %cst_9 = arith.constant 0.000000e+00 : f32
      %12 = vector.broadcast %cst_9 : f32 to vector<2x128xf32>
      %c0_10 = arith.constant 0 : index
      %c0_11 = arith.constant 0 : index
      %13 = vector.load %arg5[%c0_10, %c0_11] : memref<2x128xf32, #tpu.memory_space<vmem>>, vector<2x128xf32>
      tpu.vector_store %arg5[%c0_10, %c0_11], %12 {strides = array<i32>} : memref<2x128xf32, #tpu.memory_space<vmem>>, vector<2x128xf32>,
    } else {
    }
    %c0 = arith.constant 0 : index
    %c0_1 = arith.constant 0 : index
    %3 = vector.load %arg5[%c0, %c0_1] : memref<2x128xf32, #tpu.memory_space<vmem>>, vector<2x128xf32>
    %c0_2 = arith.constant 0 : index
    %c0_3 = arith.constant 0 : index
    %4 = vector.load %arg1[%c0_2, %c0_3] : memref<2x12800xf32, #tpu.memory_space<vmem>>, vector<2x12800xf32>
    %c0_4 = arith.constant 0 : index
    %c0_5 = arith.constant 0 : index
    %5 = vector.load %arg2[%c0_4, %c0_5] : memref<12800x128xf32, #tpu.memory_space<vmem>>, vector<12800x128xf32>
    %cst = arith.constant dense<0.000000e+00> : vector<2x128xf32>
    %6 = tpu.matmul %4, %5, %cst {dimension_numbers = #tpu.dot_dimension_numbers<[1], [0], [0], [1], [0, 0, 1, 1], [], []>} : vector<2x12800xf32>, vector<12800x128xf32>, vector<2x128xf32> -> vector<2x128xf32>
    %7 = arith.addf %3, %6 : vector<2x128xf32>
    %c0_6 = arith.constant 0 : index
    %c0_7 = arith.constant 0 : index
    %8 = vector.load %arg5[%c0_6, %c0_7] : memref<2x128xf32, #tpu.memory_space<vmem>>, vector<2x128xf32>
    tpu.vector_store %arg5[%c0_6, %c0_7], %7 {strides = array<i32>} : memref<2x128xf32, #tpu.memory_space<vmem>>, vector<2x128xf32>,
    %c7_i32 = arith.constant 7 : i32
    %9 = arith.cmpi eq, %arg0, %c7_i32 : i32
    %10 = arith.extui %9 : i1 to i32
    %c0_i32_8 = arith.constant 0 : i32
    %11 = arith.cmpi ne, %10, %c0_i32_8 : i32
    scf.if %11 {
      %c0_9 = arith.constant 0 : index
      %c0_10 = arith.constant 0 : index
      %12 = vector.load %arg5[%c0_9, %c0_10] : memref<2x128xf32, #tpu.memory_space<vmem>>, vector<2x128xf32>
      %c0_11 = arith.constant 0 : index
      %c0_12 = arith.constant 0 : index
      %13 = vector.load %arg3[%c0_11, %c0_12] : memref<1x128xf32, #tpu.memory_space<vmem>>, vector<1x128xf32>
      %14 = vector.broadcast %13 : vector<1x128xf32> to vector<2x128xf32>
      %15 = arith.addf %12, %14 : vector<2x128xf32>
      %c0_13 = arith.constant 0 : index
      %c0_14 = arith.constant 0 : index
      %16 = vector.load %arg5[%c0_13, %c0_14] : memref<2x128xf32, #tpu.memory_space<vmem>>, vector<2x128xf32>
      tpu.vector_store %arg5[%c0_13, %c0_14], %15 {strides = array<i32>} : memref<2x128xf32, #tpu.memory_space<vmem>>, vector<2x128xf32>,
      %cst_15 = arith.constant 0.000000e+00 : f32
      %17 = vector.broadcast %cst_15 : f32 to vector<2x128xf32>
      %18 = arith.maximumf %15, %17 : vector<2x128xf32>
      %c0_16 = arith.constant 0 : index
      %c0_17 = arith.constant 0 : index
      %19 = vector.load %arg4[%c0_16, %c0_17] : memref<2x128xf32, #tpu.memory_space<vmem>>, vector<2x128xf32>
      tpu.vector_store %arg4[%c0_16, %c0_17], %18 {strides = array<i32>} : memref<2x128xf32, #tpu.memory_space<vmem>>, vector<2x128xf32>,
    } else {
    }
    return
  }
  func.func @transform_0(%arg0: i32) -> (i32, i32) {
    %c0_i32 = arith.constant 0 : i32
    %c0_i32_0 = arith.constant 0 : i32
    return %c0_i32, %arg0 : i32, i32
  }
  func.func @transform_1(%arg0: i32) -> (i32, i32) {
    %c0_i32 = arith.constant 0 : i32
    %c0_i32_0 = arith.constant 0 : i32
    return %arg0, %c0_i32 : i32, i32
  }
  func.func @transform_2(%arg0: i32) -> (i32, i32) {
    %c0_i32 = arith.constant 0 : i32
    %c0_i32_0 = arith.constant 0 : i32
    %c0_i32_1 = arith.constant 0 : i32
    return %c0_i32, %c0_i32_0 : i32, i32
  }
  func.func @transform_3(%arg0: i32) -> (i32, i32) {
    %c0_i32 = arith.constant 0 : i32
    %c0_i32_0 = arith.constant 0 : i32
    %c0_i32_1 = arith.constant 0 : i32
    return %c0_i32, %c0_i32_0 : i32, i32
  }
  func.func @transform_4(%arg0: i32) -> (i32, i32) {
    %c0_i32 = arith.constant 0 : i32
    %c0_i32_0 = arith.constant 0 : i32
    %c0_i32_1 = arith.constant 0 : i32
    return %c0_i32, %c0_i32_0 : i32, i32
  }
}

</mosaic_0001>

<llo_original>
// kernel: embedding_forward.1
$region0: #{embedding_forward.1}
  #allocation0 [shape = 'u32[]', space=smem, size = 0x4, offset = 0x4, fixed_abs, tag = 'smem constant byte address 0x4 - core index']
  #allocation1 [shape = 'u32[144,128]{1,0:T(1,128)}', space=vmem, size = 0x12000, scoped, tag = 'internal scratch']
  %s0 = inlined_call_operand.hbm [shape: f32[2,102400], index: 0, kind: input, shape index: {}]
  %s1 = inlined_call_operand.hbm [shape: f32[102400,128], index: 1, kind: input, shape index: {}]
  %s2 = inlined_call_operand.hbm [shape: f32[1,128], index: 2, kind: input, shape index: {}]
  %s3 = inlined_call_operand.hbm [shape: f32[2,128], index: 3, kind: output, shape index: {0}]
  %s4 = inlined_call_operand.hbm [shape: f32[2,128], index: 4, kind: output, shape index: {1}]
  %5 = xla_tuple %s3, %s4
  %s6 = sld [smem:[#allocation0]]
  $region73: #{embedding_forward.1} parent=0
    _
  %s8 = ssub.s32 1, %s6
  %s9 = scalar_select 0, %s8, %s6
  $region1: #{embedding_forward.1} parent=0
    #allocation2 [shape = 'u8[204800]{0}', space=vmem, size = 0x32000, scoped, tag = 'input window, operand 0']
    #allocation3 [shape = 's32[2]{0}', space=sflag, size = 0x8, scoped, tag = 'scoped memory for embedding_forward.1']
    #allocation4 [shape = 's32[2]{0}', space=sflag, size = 0x8, scoped, tag = 'scoped memory for embedding_forward.1']
    #allocation5 [shape = 'u8[13107200]{0}', space=vmem, size = 0xc80000, scoped, tag = 'input window, operand 1']
    #allocation6 [shape = 's32[2]{0}', space=sflag, size = 0x8, scoped, tag = 'scoped memory for embedding_forward.1']
    #allocation7 [shape = 'u8[512]{0}', space=vmem, size = 0x400, scoped, tag = 'input window, operand 2, single buffered']
    #allocation8 [shape = 'u8[1024]{0}', space=vmem, size = 0x400, scoped, tag = 'output window, operand 0, single buffered']
    #allocation9 [shape = 'u8[1024]{0}', space=vmem, size = 0x400, scoped, tag = 'output window, operand 1, single buffered']
    #allocation10 [shape = 's32[1]{0}', space=sflag, size = 0x4, scoped, tag = 'scoped memory for embedding_forward.1']
    %10 = vsyncpa [#allocation3], 0
    %s11 = scalar_lea.sflag [#allocation3], 1
    %12 = vsyncpa %s11, 0
    %13 = vsyncpa [#allocation6], 0
    %s14 = scalar_lea.sflag [#allocation6], 1
    %15 = vsyncpa %s14, 0
    %16 = vsyncpa [#allocation4], 0
    %17 = vsyncpa [#allocation10], 0
    loop: start=0, step=1, limit=10
    $region2: #{embedding_forward.1} parent=1 // loop_pre_header
      _
    $region3: #{embedding_forward.1} parent=1 // loop_header
      %s19 = sphi 0, %s23
      %p20 = scmp.ge.s32.totalorder %s19, 10
      %s29 = sphi 0, %s31
      %s32 = sphi 0, %s29
      %s33 = sphi 0, %s32
      %s49 = sphi 0, %s33
      %s55 = sphi 0, %s57
      %s58 = sphi 0, %s55
      %s59 = sphi 0, %s58
      %s75 = sphi 0, %s59
      %s79 = sphi 0, %s79
      %s81 = sphi 0, %s79
      %s82 = sphi 0, %s81
      %s96 = sphi 0, %s82
      %s100 = sphi 0, %s100
      %s102 = sphi 0, %s100
      %s103 = sphi 0, %s102
      %s117 = sphi 0, %s103
      %s121 = sphi 0, %s121
      %s123 = sphi 0, %s121
      %s124 = sphi 0, %s123
      %s138 = sphi 0, %s124
    $region4: #{embedding_forward.1} parent=1 // loop_header_branch
      %22 = sbr.rel (%p20) target = $region8
    $region5: #{embedding_forward.1} parent=1 // loop_body
      %s24 = ssub.s32 %s19, 1
      %s25 = ssub.s32 %s19, 2
      %s26 = sadd.s32 %s19, 1
      %s27 = ssub.s32 %s19, %s26
      %p28 = scmp.eq.s32.totalorder %s27, 0
      %s30 = sadd.s32 %s29, 1
      %s31 = scalar_select %p28, %s29, %s30
      %p34 = pneg %p28
      %p35 = scmp.eq.s32.totalorder %s19, 7
      %p36 = por %p34, %p35
      %p37 = scmp.ne.s32.totalorder %s29, %s32
      %p38 = scmp.eq.s32.totalorder %s19, 0
      %p39 = por %p37, %p38
      %p40 = scmp.ne.s32.totalorder %s29, %s32
      %p41 = scmp.eq.s32.totalorder %s24, 7
      %p42 = por %p40, %p41
      %p43 = scmp.ne.s32.totalorder %s32, %s33
      %p44 = scmp.eq.s32.totalorder %s24, 0
      %p45 = por %p43, %p44
      %p46 = scmp.ne.s32.totalorder %s32, %s33
      %p47 = scmp.eq.s32.totalorder %s25, 7
      %p48 = por %p46, %p47
      %p50 = scmp.ne.s32.totalorder %s33, %s49
      %p51 = scmp.eq.s32.totalorder %s25, 0
      %p52 = por %p50, %p51
      %s53 = ssub.s32 %s19, %s26
      %p54 = scmp.eq.s32.totalorder %s53, 0
      %s56 = sadd.s32 %s55, 1
      %s57 = scalar_select %p54, %s55, %s56
      %p60 = pneg %p54
      %p61 = scmp.eq.s32.totalorder %s19, 7
      %p62 = por %p60, %p61
      %p63 = scmp.ne.s32.totalorder %s55, %s58
      %p64 = scmp.eq.s32.totalorder %s19, 0
      %p65 = por %p63, %p64
      %p66 = scmp.ne.s32.totalorder %s55, %s58
      %p67 = scmp.eq.s32.totalorder %s24, 7
      %p68 = por %p66, %p67
      %p69 = scmp.ne.s32.totalorder %s58, %s59
      %p70 = scmp.eq.s32.totalorder %s24, 0
      %p71 = por %p69, %p70
      %p72 = scmp.ne.s32.totalorder %s58, %s59
      %p73 = scmp.eq.s32.totalorder %s25, 7
      %p74 = por %p72, %p73
      %p76 = scmp.ne.s32.totalorder %s59, %s75
      %p77 = scmp.eq.s32.totalorder %s25, 0
      %p78 = por %p76, %p77
      %s80 = sadd.s32 %s79, 1
      %p83 = scmp.eq.s32.totalorder %s19, 7
      %p84 = scmp.ne.s32.totalorder %s79, %s81
      %p85 = scmp.eq.s32.totalorder %s19, 0
      %p86 = por %p84, %p85
      %p87 = scmp.ne.s32.totalorder %s79, %s81
      %p88 = scmp.eq.s32.totalorder %s24, 7
      %p89 = por %p87, %p88
      %p90 = scmp.ne.s32.totalorder %s81, %s82
      %p91 = scmp.eq.s32.totalorder %s24, 0
      %p92 = por %p90, %p91
      %p93 = scmp.ne.s32.totalorder %s81, %s82
      %p94 = scmp.eq.s32.totalorder %s25, 7
      %p95 = por %p93, %p94
      %p97 = scmp.ne.s32.totalorder %s82, %s96
      %p98 = scmp.eq.s32.totalorder %s25, 0
      %p99 = por %p97, %p98
      %s101 = sadd.s32 %s100, 1
      %p104 = scmp.eq.s32.totalorder %s19, 7
      %p105 = scmp.ne.s32.totalorder %s100, %s102
      %p106 = scmp.eq.s32.totalorder %s19, 0
      %p107 = por %p105, %p106
      %p108 = scmp.ne.s32.totalorder %s100, %s102
      %p109 = scmp.eq.s32.totalorder %s24, 7
      %p110 = por %p108, %p109
      %p111 = scmp.ne.s32.totalorder %s102, %s103
      %p112 = scmp.eq.s32.totalorder %s24, 0
      %p113 = por %p111, %p112
      %p114 = scmp.ne.s32.totalorder %s102, %s103
      %p115 = scmp.eq.s32.totalorder %s25, 7
      %p116 = por %p114, %p115
      %p118 = scmp.ne.s32.totalorder %s103, %s117
      %p119 = scmp.eq.s32.totalorder %s25, 0
      %p120 = por %p118, %p119
      %s122 = sadd.s32 %s121, 1
      %p125 = scmp.eq.s32.totalorder %s19, 7
      %p126 = scmp.ne.s32.totalorder %s121, %s123
      %p127 = scmp.eq.s32.totalorder %s19, 0
      %p128 = por %p126, %p127
      %p129 = scmp.ne.s32.totalorder %s121, %s123
      %p130 = scmp.eq.s32.totalorder %s24, 7
      %p131 = por %p129, %p130
      %p132 = scmp.ne.s32.totalorder %s123, %s124
      %p133 = scmp.eq.s32.totalorder %s24, 0
      %p134 = por %p132, %p133
      %p135 = scmp.ne.s32.totalorder %s123, %s124
      %p136 = scmp.eq.s32.totalorder %s25, 7
      %p137 = por %p135, %p136
      %p139 = scmp.ne.s32.totalorder %s124, %s138
      %p140 = scmp.eq.s32.totalorder %s25, 0
      %p141 = por %p139, %p140
      %p142 = scmp.le.s32.totalorder 1, %s19
      %p143 = scmp.lt.s32.totalorder %s19, 9
      %p144 = pnand %p142, %p143
      %p145 = pneg %p144
      // Predicated region
      $region9: #{embedding_forward.1} parent=5 // pred_check
        _
      $region10: #{embedding_forward.1} parent=5 // pred_check_branch
        %147 = sbr.rel (%p144) target = $region12
      $region11: #{embedding_forward.1} parent=5 // pred_region
        %s148 = ssub.s32 %s19, 1
        // Predicated region
        $region13: #{embedding_forward.1} parent=11 // pred_check
          %p149 = pneg %p92
        $region14: #{embedding_forward.1} parent=11 // pred_check_branch
          %151 = sbr.rel (%p149) target = $region16
        $region15: #{embedding_forward.1} parent=11 // pred_region
          %s153 = ssub.s32 16, 16
          %154 = vsyncadd [#allocation6], %s153
          %s156 = sshll.u32 [#allocation7], 4
          %s157 = int_to_ptr.vmem [resolvable:$true] %s156
          %159 = dma.hbm_to_vmem [thread:$0]  %s2, 16, %s157, [#allocation6]
        $region16: #{embedding_forward.1} parent=11 // pred_fallthru
          _
      $region12: #{embedding_forward.1} parent=5 // pred_fallthru
        _
      %p160 = scmp.lt.s32.totalorder %s19, 8
      // Predicated region
      $region17: #{embedding_forward.1} parent=5 // pred_check
        %p161 = pneg %p160
      $region18: #{embedding_forward.1} parent=5 // pred_check_branch
        %163 = sbr.rel (%p161) target = $region20
      $region19: #{embedding_forward.1} parent=5 // pred_region
        // Predicated region
        $region21: #{embedding_forward.1} parent=19 // pred_check
          %p164 = pneg %p39
        $region22: #{embedding_forward.1} parent=19 // pred_check_branch
          %166 = sbr.rel (%p164) target = $region24
        $region23: #{embedding_forward.1} parent=19 // pred_region
          %s167 = sand.u32 %s29, 1
          %s168 = scalar_lea.sflag [#allocation3], %s167
          %s169 = sand.u32 %s29, 1
          %s170 = smul.addr %s169, 200
          %s171 = scalar_lea.vmem [#allocation2], %s170
          %s172 = smul.u32 100, %s19
          %s174 = ssub.s32 3200, 3200
          %175 = vsyncadd %s168, %s174
          %s176 = smul.addr %s172, 32
          %s177 = scalar_lea.hbm %s0, %s176
          %s179 = sshll.u32 %s171, 4
          %s180 = int_to_ptr.vmem [resolvable:$true] %s179
          %182 = dma.hbm_to_vmem [thread:$0]  %s177, 3200, %s180, %s168
        $region24: #{embedding_forward.1} parent=19 // pred_fallthru
          _
        // Predicated region
        $region25: #{embedding_forward.1} parent=19 // pred_check
          %p183 = pneg %p65
        $region26: #{embedding_forward.1} parent=19 // pred_check_branch
          %185 = sbr.rel (%p183) target = $region28
        $region27: #{embedding_forward.1} parent=19 // pred_region
          %s186 = sand.u32 %s19, 1
          %s187 = scalar_lea.sflag [#allocation6], %s186
          %s188 = sand.u32 %s55, 1
          %s189 = smul.addr %s188, 12800
          %s190 = scalar_lea.vmem [#allocation5], %s189
          %s191 = smul.u32 1600, %s19
          %s193 = ssub.s32 204800, 204800
          %194 = vsyncadd %s187, %s193
          %s195 = smul.addr %s191, 128
          %s196 = scalar_lea.hbm %s1, %s195
          %s197 = sshll.u32 %s190, 4
          %s198 = int_to_ptr.vmem [resolvable:$true] %s197
          %203 = dma.hbm_to_vmem [thread:$0]  %s196, 204800, %s198, %s187, 128, 128, 8
        $region28: #{embedding_forward.1} parent=19 // pred_fallthru
          _
      $region20: #{embedding_forward.1} parent=5 // pred_fallthru
        _
      %p204 = scmp.le.s32.totalorder 1, %s19
      %p205 = scmp.lt.s32.totalorder %s19, 9
      %p206 = pnand %p204, %p205
      %p207 = pneg %p206
      // Predicated region
      $region29: #{embedding_forward.1} parent=5 // pred_check
        _
      $region30: #{embedding_forward.1} parent=5 // pred_check_branch
        %209 = sbr.rel (%p206) target = $region32
      $region31: #{embedding_forward.1} parent=5 // pred_region
        %s210 = ssub.s32 %s19, 1
        %s211 = sand.u32 %s32, 1
        %s212 = scalar_lea.sflag [#allocation3], %s211
        %s213 = sand.u32 %s32, 1
        %s214 = smul.addr %s213, 200
        %s215 = scalar_lea.vmem [#allocation2], %s214
        // Predicated region
        $region33: #{embedding_forward.1} parent=31 // pred_check
          %p216 = pneg %p45
        $region34: #{embedding_forward.1} parent=31 // pred_check_branch
          %218 = sbr.rel (%p216) target = $region36
        $region35: #{embedding_forward.1} parent=31 // pred_region
          %219 = dma.done %s212, 3200
        $region36: #{embedding_forward.1} parent=31 // pred_fallthru
          _
        %s220 = sand.u32 %s24, 1
        %s221 = scalar_lea.sflag [#allocation6], %s220
        %s222 = sand.u32 %s58, 1
        %s223 = smul.addr %s222, 12800
        %s224 = scalar_lea.vmem [#allocation5], %s223
        // Predicated region
        $region37: #{embedding_forward.1} parent=31 // pred_check
          %p225 = pneg %p71
        $region38: #{embedding_forward.1} parent=31 // pred_check_branch
          %227 = sbr.rel (%p225) target = $region40
        $region39: #{embedding_forward.1} parent=31 // pred_region
          %228 = dma.done %s221, 204800
        $region40: #{embedding_forward.1} parent=31 // pred_fallthru
          _
        // Predicated region
        $region41: #{embedding_forward.1} parent=31 // pred_check
          %p229 = pneg %p92
        $region42: #{embedding_forward.1} parent=31 // pred_check_branch
          %231 = sbr.rel (%p229) target = $region44
        $region43: #{embedding_forward.1} parent=31 // pred_region
          %232 = dma.done [#allocation6], 16
        $region44: #{embedding_forward.1} parent=31 // pred_fallthru
          _
        %s233 = sand.u32 %s32, 1
        %s234 = scalar_lea.sflag [#allocation3], %s233
        %s235 = sand.u32 %s32, 1
        %s236 = smul.addr %s235, 200
        %s237 = scalar_lea.vmem [#allocation2], %s236
        %p238 = pneg %p45
        %p239 = pneg %p42
        %s240 = sand.u32 %s24, 1
        %s241 = scalar_lea.sflag [#allocation6], %s240
        %s242 = sand.u32 %s58, 1
        %s243 = smul.addr %s242, 12800
        %s244 = scalar_lea.vmem [#allocation5], %s243
        %p245 = pneg %p71
        %p246 = pneg %p68
        %p247 = pneg %p92
        %p248 = pneg %p89
        %p249 = pneg %p113
        %p250 = pneg %p110
        %p251 = pneg %p134
        %p252 = pneg %p131
        %s253 = smul.u32 100, %s24
        %s254 = smul.u32 1600, %s24
        %p255 = scmp.eq.s32.totalorder %s24, 0
        // Predicated region
        $region45: #{embedding_forward.1} parent=31 // pred_check
          %p256 = pneg %p255
        $region46: #{embedding_forward.1} parent=31 // pred_check_branch
          %258 = sbr.rel (%p256) target = $region48
        $region47: #{embedding_forward.1} parent=31 // pred_region
          %259 = vst [vmem:[#allocation9] sm:$0x3] 0.0
        $region48: #{embedding_forward.1} parent=31 // pred_fallthru
          _
        %v260 = vld [vmem:[#allocation9] sm:$0x3]
        %v261 = vld [vmem:[%s215] sm:$0xff]
        %v262 = vld [vmem:[%s215 + $0x8] sm:$0xff]
        %v263 = vld [vmem:[%s215 + $0x10] sm:$0xff]
        %v264 = vld [vmem:[%s215 + $0x18] sm:$0xff]
        %v265 = vld [vmem:[%s215 + $0x20] sm:$0xff]
        %v266 = vld [vmem:[%s215 + $0x28] sm:$0xff]
        %v267 = vld [vmem:[%s215 + $0x30] sm:$0xff]
        %v268 = vld [vmem:[%s215 + $0x38] sm:$0xff]
        %v269 = vld [vmem:[%s215 + $0x40] sm:$0xff]
        %v270 = vld [vmem:[%s215 + $0x48] sm:$0xff]
        %v271 = vld [vmem:[%s215 + $0x50] sm:$0xff]
        %v272 = vld [vmem:[%s215 + $0x58] sm:$0xff]
        %v273 = vld [vmem:[%s215 + $0x60] sm:$0xff]
        %v274 = vld [vmem:[%s215 + $0x68] sm:$0xff]
        %v275 = vld [vmem:[%s215 + $0x70] sm:$0xff]
        %v276 = vld [vmem:[%s215 + $0x78] sm:$0xff]
        %v277 = vld [vmem:[%s215 + $0x80] sm:$0xff]
        %v278 = vld [vmem:[%s215 + $0x88] sm:$0xff]
        %v279 = vld [vmem:[%s215 + $0x90] sm:$0xff]
        %v280 = vld [vmem:[%s215 + $0x98] sm:$0xff]
        %v281 = vld [vmem:[%s215 + $0xa0] sm:$0xff]
        %v282 = vld [vmem:[%s215 + $0xa8] sm:$0xff]
        %v283 = vld [vmem:[%s215 + $0xb0] sm:$0xff]
        %v284 = vld [vmem:[%s215 + $0xb8] sm:$0xff]
        %v285 = vld [vmem:[%s215 + $0xc0] sm:$0xff]
        %v286 = vld [vmem:[%s224] sm:$0xff]
        %v287 = vld [vmem:[%s224 + $0x8] sm:$0xff]
        %v288 = vld [vmem:[%s224 + $0x10] sm:$0xff]
        %v289 = vld [vmem:[%s224 + $0x18] sm:$0xff]
        %v290 = vld [vmem:[%s224 + $0x20] sm:$0xff]
        %v291 = vld [vmem:[%s224 + $0x28] sm:$0xff]
        %v292 = vld [vmem:[%s224 + $0x30] sm:$0xff]
        %v293 = vld [vmem:[%s224 + $0x38] sm:$0xff]
        %v294 = vld [vmem:[%s224 + $0x40] sm:$0xff]
        %v295 = vld [vmem:[%s224 + $0x48] sm:$0xff]
        %v296 = vld [vmem:[%s224 + $0x50] sm:$0xff]
        %v297 = vld [vmem:[%s224 + $0x58] sm:$0xff]
        %v298 = vld [vmem:[%s224 + $0x60] sm:$0xff]
        %v299 = vld [vmem:[%s224 + $0x68] sm:$0xff]
        %v300 = vld [vmem:[%s224 + $0x70] sm:$0xff]
        %v301 = vld [vmem:[%s224 + $0x78] sm:$0xff]
        %v302 = vld [vmem:[%s224 + $0x80] sm:$0xff]
        %v303 = vld [vmem:[%s224 + $0x88] sm:$0xff]
        %v304 = vld [vmem:[%s224 + $0x90] sm:$0xff]
        %v305 = vld [vmem:[%s224 + $0x98] sm:$0xff]
        %v306 = vld [vmem:[%s224 + $0xa0] sm:$0xff]
        %v307 = vld [vmem:[%s224 + $0xa8] sm:$0xff]
        %v308 = vld [vmem:[%s224 + $0xb0] sm:$0xff]
        %v309 = vld [vmem:[%s224 + $0xb8] sm:$0xff]
        %v310 = vld [vmem:[%s224 + $0xc0] sm:$0xff]
        %v311 = vld [vmem:[%s224 + $0xc8] sm:$0xff]
        %v312 = vld [vmem:[%s224 + $0xd0] sm:$0xff]
        %v313 = vld [vmem:[%s224 + $0xd8] sm:$0xff]
        %v314 = vld [vmem:[%s224 + $0xe0] sm:$0xff]
        %v315 = vld [vmem:[%s224 + $0xe8] sm:$0xff]
        %v316 = vld [vmem:[%s224 + $0xf0] sm:$0xff]
        %v317 = vld [vmem:[%s224 + $0xf8] sm:$0xff]
        %v318 = vld [vmem:[%s224 + $0x100] sm:$0xff]
        %v319 = vld [vmem:[%s224 + $0x108] sm:$0xff]
        %v320 = vld [vmem:[%s224 + $0x110] sm:$0xff]
        %v321 = vld [vmem:[%s224 + $0x118] sm:$0xff]
        %v322 = vld [vmem:[%s224 + $0x120] sm:$0xff]
        %v323 = vld [vmem:[%s224 + $0x128] sm:$0xff]
        %v324 = vld [vmem:[%s224 + $0x130] sm:$0xff]
        %v325 = vld [vmem:[%s224 + $0x138] sm:$0xff]
        %v326 = vld [vmem:[%s224 + $0x140] sm:$0xff]
        %v327 = vld [vmem:[%s224 + $0x148] sm:$0xff]
        %v328 = vld [vmem:[%s224 + $0x150] sm:$0xff]
        %v329 = vld [vmem:[%s224 + $0x158] sm:$0xff]
        %v330 = vld [vmem:[%s224 + $0x160] sm:$0xff]
        %v331 = vld [vmem:[%s224 + $0x168] sm:$0xff]
        %v332 = vld [vmem:[%s224 + $0x170] sm:$0xff]
        %v333 = vld [vmem:[%s224 + $0x178] sm:$0xff]
        %v334 = vld [vmem:[%s224 + $0x180] sm:$0xff]
        %v335 = vld [vmem:[%s224 + $0x188] sm:$0xff]
        %v336 = vld [vmem:[%s224 + $0x190] sm:$0xff]
        %v337 = vld [vmem:[%s224 + $0x198] sm:$0xff]
        %v338 = vld [vmem:[%s224 + $0x1a0] sm:$0xff]
        %v339 = vld [vmem:[%s224 + $0x1a8] sm:$0xff]
        %v340 = vld [vmem:[%s224 + $0x1b0] sm:$0xff]
        %v341 = vld [vmem:[%s224 + $0x1b8] sm:$0xff]
        %v342 = vld [vmem:[%s224 + $0x1c0] sm:$0xff]
        %v343 = vld [vmem:[%s224 + $0x1c8] sm:$0xff]
        %v344 = vld [vmem:[%s224 + $0x1d0] sm:$0xff]
        %v345 = vld [vmem:[%s224 + $0x1d8] sm:$0xff]
        %v346 = vld [vmem:[%s224 + $0x1e0] sm:$0xff]
        %v347 = vld [vmem:[%s224 + $0x1e8] sm:$0xff]
        %v348 = vld [vmem:[%s224 + $0x1f0] sm:$0xff]
        %v349 = vld [vmem:[%s224 + $0x1f8] sm:$0xff]
        %v350 = vld [vmem:[%s224 + $0x200] sm:$0xff]
        %v351 = vld [vmem:[%s224 + $0x208] sm:$0xff]
        %v352 = vld [vmem:[%s224 + $0x210] sm:$0xff]
        %v353 = vld [vmem:[%s224 + $0x218] sm:$0xff]
        %v354 = vld [vmem:[%s224 + $0x220] sm:$0xff]
        %v355 = vld [vmem:[%s224 + $0x228] sm:$0xff]
        %v356 = vld [vmem:[%s224 + $0x230] sm:$0xff]
        %v357 = vld [vmem:[%s224 + $0x238] sm:$0xff]
        %v358 = vld [vmem:[%s224 + $0x240] sm:$0xff]
        %v359 = vld [vmem:[%s224 + $0x248] sm:$0xff]
        %v360 = vld [vmem:[%s224 + $0x250] sm:$0xff]
        %v361 = vld [vmem:[%s224 + $0x258] sm:$0xff]
        %v362 = vld [vmem:[%s224 + $0x260] sm:$0xff]
        %v363 = vld [vmem:[%s224 + $0x268] sm:$0xff]
        %v364 = vld [vmem:[%s224 + $0x270] sm:$0xff]
        %v365 = vld [vmem:[%s224 + $0x278] sm:$0xff]
        %v366 = vld [vmem:[%s224 + $0x280] sm:$0xff]
        %v367 = vld [vmem:[%s224 + $0x288] sm:$0xff]
        %v368 = vld [vmem:[%s224 + $0x290] sm:$0xff]
        %v369 = vld [vmem:[%s224 + $0x298] sm:$0xff]
        %v370 = vld [vmem:[%s224 + $0x2a0] sm:$0xff]
        %v371 = vld [vmem:[%s224 + $0x2a8] sm:$0xff]
        %v372 = vld [vmem:[%s224 + $0x2b0] sm:$0xff]
        %v373 = vld [vmem:[%s224 + $0x2b8] sm:$0xff]
        %v374 = vld [vmem:[%s224 + $0x2c0] sm:$0xff]
        %v375 = vld [vmem:[%s224 + $0x2c8] sm:$0xff]
        %v376 = vld [vmem:[%s224 + $0x2d0] sm:$0xff]
        %v377 = vld [vmem:[%s224 + $0x2d8] sm:$0xff]
        %v378 = vld [vmem:[%s224 + $0x2e0] sm:$0xff]
        %v379 = vld [vmem:[%s224 + $0x2e8] sm:$0xff]
        %v380 = vld [vmem:[%s224 + $0x2f0] sm:$0xff]
        %v381 = vld [vmem:[%s224 + $0x2f8] sm:$0xff]
        %v382 = vld [vmem:[%s224 + $0x300] sm:$0xff]
        %v383 = vld [vmem:[%s224 + $0x308] sm:$0xff]
        %v384 = vld [vmem:[%s224 + $0x310] sm:$0xff]
        %v385 = vld [vmem:[%s224 + $0x318] sm:$0xff]
        %v386 = vld [vmem:[%s224 + $0x320] sm:$0xff]
        %v387 = vld [vmem:[%s224 + $0x328] sm:$0xff]
        %v388 = vld [vmem:[%s224 + $0x330] sm:$0xff]
        %v389 = vld [vmem:[%s224 + $0x338] sm:$0xff]
        %v390 = vld [vmem:[%s224 + $0x340] sm:$0xff]
        %v391 = vld [vmem:[%s224 + $0x348] sm:$0xff]
        %v392 = vld [vmem:[%s224 + $0x350] sm:$0xff]
        %v393 = vld [vmem:[%s224 + $0x358] sm:$0xff]
        %v394 = vld [vmem:[%s224 + $0x360] sm:$0xff]
        %v395 = vld [vmem:[%s224 + $0x368] sm:$0xff]
        %v396 = vld [vmem:[%s224 + $0x370] sm:$0xff]
        %v397 = vld [vmem:[%s224 + $0x378] sm:$0xff]
        %v398 = vld [vmem:[%s224 + $0x380] sm:$0xff]
        %v399 = vld [vmem:[%s224 + $0x388] sm:$0xff]
        %v400 = vld [vmem:[%s224 + $0x390] sm:$0xff]
        %v401 = vld [vmem:[%s224 + $0x398] sm:$0xff]
        %v402 = vld [vmem:[%s224 + $0x3a0] sm:$0xff]
        %v403 = vld [vmem:[%s224 + $0x3a8] sm:$0xff]
        %v404 = vld [vmem:[%s224 + $0x3b0] sm:$0xff]
        %v405 = vld [vmem:[%s224 + $0x3b8] sm:$0xff]
        %v406 = vld [vmem:[%s224 + $0x3c0] sm:$0xff]
        %v407 = vld [vmem:[%s224 + $0x3c8] sm:$0xff]
        %v408 = vld [vmem:[%s224 + $0x3d0] sm:$0xff]
        %v409 = vld [vmem:[%s224 + $0x3d8] sm:$0xff]
        %v410 = vld [vmem:[%s224 + $0x3e0] sm:$0xff]
        %v411 = vld [vmem:[%s224 + $0x3e8] sm:$0xff]
        %v412 = vld [vmem:[%s224 + $0x3f0] sm:$0xff]
        %v413 = vld [vmem:[%s224 + $0x3f8] sm:$0xff]
        %v414 = vld [vmem:[%s224 + $0x400] sm:$0xff]
        %v415 = vld [vmem:[%s224 + $0x408] sm:$0xff]
        %v416 = vld [vmem:[%s224 + $0x410] sm:$0xff]
        %v417 = vld [vmem:[%s224 + $0x418] sm:$0xff]
        %v418 = vld [vmem:[%s224 + $0x420] sm:$0xff]
        %v419 = vld [vmem:[%s224 + $0x428] sm:$0xff]
        %v420 = vld [vmem:[%s224 + $0x430] sm:$0xff]
        %v421 = vld [vmem:[%s224 + $0x438] sm:$0xff]
        %v422 = vld [vmem:[%s224 + $0x440] sm:$0xff]
        %v423 = vld [vmem:[%s224 + $0x448] sm:$0xff]
        %v424 = vld [vmem:[%s224 + $0x450] sm:$0xff]
        %v425 = vld [vmem:[%s224 + $0x458] sm:$0xff]
        %v426 = vld [vmem:[%s224 + $0x460] sm:$0xff]
        %v427 = vld [vmem:[%s224 + $0x468] sm:$0xff]
        %v428 = vld [vmem:[%s224 + $0x470] sm:$0xff]
        %v429 = vld [vmem:[%s224 + $0x478] sm:$0xff]
        %v430 = vld [vmem:[%s224 + $0x480] sm:$0xff]
        %v431 = vld [vmem:[%s224 + $0x488] sm:$0xff]
        %v432 = vld [vmem:[%s224 + $0x490] sm:$0xff]
        %v433 = vld [vmem:[%s224 + $0x498] sm:$0xff]
        %v434 = vld [vmem:[%s224 + $0x4a0] sm:$0xff]
        %v435 = vld [vmem:[%s224 + $0x4a8] sm:$0xff]
        %v436 = vld [vmem:[%s224 + $0x4b0] sm:$0xff]
        %v437 = vld [vmem:[%s224 + $0x4b8] sm:$0xff]
        %v438 = vld [vmem:[%s224 + $0x4c0] sm:$0xff]
        %v439 = vld [vmem:[%s224 + $0x4c8] sm:$0xff]
        %v440 = vld [vmem:[%s224 + $0x4d0] sm:$0xff]
        %v441 = vld [vmem:[%s224 + $0x4d8] sm:$0xff]
        %v442 = vld [vmem:[%s224 + $0x4e0] sm:$0xff]
        %v443 = vld [vmem:[%s224 + $0x4e8] sm:$0xff]
        %v444 = vld [vmem:[%s224 + $0x4f0] sm:$0xff]
        %v445 = vld [vmem:[%s224 + $0x4f8] sm:$0xff]
        %v446 = vld [vmem:[%s224 + $0x500] sm:$0xff]
        %v447 = vld [vmem:[%s224 + $0x508] sm:$0xff]
        %v448 = vld [vmem:[%s224 + $0x510] sm:$0xff]
        %v449 = vld [vmem:[%s224 + $0x518] sm:$0xff]
        %v450 = vld [vmem:[%s224 + $0x520] sm:$0xff]
        %v451 = vld [vmem:[%s224 + $0x528] sm:$0xff]
        %v452 = vld [vmem:[%s224 + $0x530] sm:$0xff]
        %v453 = vld [vmem:[%s224 + $0x538] sm:$0xff]
        %v454 = vld [vmem:[%s224 + $0x540] sm:$0xff]
        %v455 = vld [vmem:[%s224 + $0x548] sm:$0xff]
        %v456 = vld [vmem:[%s224 + $0x550] sm:$0xff]
        %v457 = vld [vmem:[%s224 + $0x558] sm:$0xff]
        %v458 = vld [vmem:[%s224 + $0x560] sm:$0xff]
        %v459 = vld [vmem:[%s224 + $0x568] sm:$0xff]
        %v460 = vld [vmem:[%s224 + $0x570] sm:$0xff]
        %v461 = vld [vmem:[%s224 + $0x578] sm:$0xff]
        %v462 = vld [vmem:[%s224 + $0x580] sm:$0xff]
        %v463 = vld [vmem:[%s224 + $0x588] sm:$0xff]
        %v464 = vld [vmem:[%s224 + $0x590] sm:$0xff]
        %v465 = vld [vmem:[%s224 + $0x598] sm:$0xff]
        %v466 = vld [vmem:[%s224 + $0x5a0] sm:$0xff]
        %v467 = vld [vmem:[%s224 + $0x5a8] sm:$0xff]
        %v468 = vld [vmem:[%s224 + $0x5b0] sm:$0xff]
        %v469 = vld [vmem:[%s224 + $0x5b8] sm:$0xff]
        %v470 = vld [vmem:[%s224 + $0x5c0] sm:$0xff]
        %v471 = vld [vmem:[%s224 + $0x5c8] sm:$0xff]
        %v472 = vld [vmem:[%s224 + $0x5d0] sm:$0xff]
        %v473 = vld [vmem:[%s224 + $0x5d8] sm:$0xff]
        %v474 = vld [vmem:[%s224 + $0x5e0] sm:$0xff]
        %v475 = vld [vmem:[%s224 + $0x5e8] sm:$0xff]
        %v476 = vld [vmem:[%s224 + $0x5f0] sm:$0xff]
        %v477 = vld [vmem:[%s224 + $0x5f8] sm:$0xff]
        %v478 = vld [vmem:[%s224 + $0x600] sm:$0xff]
        %v479 = vld [vmem:[%s224 + $0x608] sm:$0xff]
        %v480 = vld [vmem:[%s224 + $0x610] sm:$0xff]
        %v481 = vld [vmem:[%s224 + $0x618] sm:$0xff]
        %v482 = vld [vmem:[%s224 + $0x620] sm:$0xff]
        %v483 = vld [vmem:[%s224 + $0x628] sm:$0xff]
        %v484 = vld [vmem:[%s224 + $0x630] sm:$0xff]
        %v485 = vld [vmem:[%s224 + $0x638] sm:$0xff]
        %v486 = vld [vmem:[%s224 + $0x640] sm:$0xff]
        %v487 = vld [vmem:[%s224 + $0x648] sm:$0xff]
        %v488 = vld [vmem:[%s224 + $0x650] sm:$0xff]
        %v489 = vld [vmem:[%s224 + $0x658] sm:$0xff]
        %v490 = vld [vmem:[%s224 + $0x660] sm:$0xff]
        %v491 = vld [vmem:[%s224 + $0x668] sm:$0xff]
        %v492 = vld [vmem:[%s224 + $0x670] sm:$0xff]
        %v493 = vld [vmem:[%s224 + $0x678] sm:$0xff]
        %v494 = vld [vmem:[%s224 + $0x680] sm:$0xff]
        %v495 = vld [vmem:[%s224 + $0x688] sm:$0xff]
        %v496 = vld [vmem:[%s224 + $0x690] sm:$0xff]
        %v497 = vld [vmem:[%s224 + $0x698] sm:$0xff]
        %v498 = vld [vmem:[%s224 + $0x6a0] sm:$0xff]
        %v499 = vld [vmem:[%s224 + $0x6a8] sm:$0xff]
        %v500 = vld [vmem:[%s224 + $0x6b0] sm:$0xff]
        %v501 = vld [vmem:[%s224 + $0x6b8] sm:$0xff]
        %v502 = vld [vmem:[%s224 + $0x6c0] sm:$0xff]
        %v503 = vld [vmem:[%s224 + $0x6c8] sm:$0xff]
        %v504 = vld [vmem:[%s224 + $0x6d0] sm:$0xff]
        %v505 = vld [vmem:[%s224 + $0x6d8] sm:$0xff]
        %v506 = vld [vmem:[%s224 + $0x6e0] sm:$0xff]
        %v507 = vld [vmem:[%s224 + $0x6e8] sm:$0xff]
        %v508 = vld [vmem:[%s224 + $0x6f0] sm:$0xff]
        %v509 = vld [vmem:[%s224 + $0x6f8] sm:$0xff]
        %v510 = vld [vmem:[%s224 + $0x700] sm:$0xff]
        %v511 = vld [vmem:[%s224 + $0x708] sm:$0xff]
        %v512 = vld [vmem:[%s224 + $0x710] sm:$0xff]
        %v513 = vld [vmem:[%s224 + $0x718] sm:$0xff]
        %v514 = vld [vmem:[%s224 + $0x720] sm:$0xff]
        %v515 = vld [vmem:[%s224 + $0x728] sm:$0xff]
        %v516 = vld [vmem:[%s224 + $0x730] sm:$0xff]
        %v517 = vld [vmem:[%s224 + $0x738] sm:$0xff]
        %v518 = vld [vmem:[%s224 + $0x740] sm:$0xff]
        %v519 = vld [vmem:[%s224 + $0x748] sm:$0xff]
        %v520 = vld [vmem:[%s224 + $0x750] sm:$0xff]
        %v521 = vld [vmem:[%s224 + $0x758] sm:$0xff]
        %v522 = vld [vmem:[%s224 + $0x760] sm:$0xff]
        %v523 = vld [vmem:[%s224 + $0x768] sm:$0xff]
        %v524 = vld [vmem:[%s224 + $0x770] sm:$0xff]
        %v525 = vld [vmem:[%s224 + $0x778] sm:$0xff]
        %v526 = vld [vmem:[%s224 + $0x780] sm:$0xff]
        %v527 = vld [vmem:[%s224 + $0x788] sm:$0xff]
        %v528 = vld [vmem:[%s224 + $0x790] sm:$0xff]
        %v529 = vld [vmem:[%s224 + $0x798] sm:$0xff]
        %v530 = vld [vmem:[%s224 + $0x7a0] sm:$0xff]
        %v531 = vld [vmem:[%s224 + $0x7a8] sm:$0xff]
        %v532 = vld [vmem:[%s224 + $0x7b0] sm:$0xff]
        %v533 = vld [vmem:[%s224 + $0x7b8] sm:$0xff]
        %v534 = vld [vmem:[%s224 + $0x7c0] sm:$0xff]
        %v535 = vld [vmem:[%s224 + $0x7c8] sm:$0xff]
        %v536 = vld [vmem:[%s224 + $0x7d0] sm:$0xff]
        %v537 = vld [vmem:[%s224 + $0x7d8] sm:$0xff]
        %v538 = vld [vmem:[%s224 + $0x7e0] sm:$0xff]
        %v539 = vld [vmem:[%s224 + $0x7e8] sm:$0xff]
        %v540 = vld [vmem:[%s224 + $0x7f0] sm:$0xff]
        %v541 = vld [vmem:[%s224 + $0x7f8] sm:$0xff]
        %v542 = vld [vmem:[%s224 + $0x800] sm:$0xff]
        %v543 = vld [vmem:[%s224 + $0x808] sm:$0xff]
        %v544 = vld [vmem:[%s224 + $0x810] sm:$0xff]
        %v545 = vld [vmem:[%s224 + $0x818] sm:$0xff]
        %v546 = vld [vmem:[%s224 + $0x820] sm:$0xff]
        %v547 = vld [vmem:[%s224 + $0x828] sm:$0xff]
        %v548 = vld [vmem:[%s224 + $0x830] sm:$0xff]
        %v549 = vld [vmem:[%s224 + $0x838] sm:$0xff]
        %v550 = vld [vmem:[%s224 + $0x840] sm:$0xff]
        %v551 = vld [vmem:[%s224 + $0x848] sm:$0xff]
        %v552 = vld [vmem:[%s224 + $0x850] sm:$0xff]
        %v553 = vld [vmem:[%s224 + $0x858] sm:$0xff]
        %v554 = vld [vmem:[%s224 + $0x860] sm:$0xff]
        %v555 = vld [vmem:[%s224 + $0x868] sm:$0xff]
        %v556 = vld [vmem:[%s224 + $0x870] sm:$0xff]
        %v557 = vld [vmem:[%s224 + $0x878] sm:$0xff]
        %v558 = vld [vmem:[%s224 + $0x880] sm:$0xff]
        %v559 = vld [vmem:[%s224 + $0x888] sm:$0xff]
        %v560 = vld [vmem:[%s224 + $0x890] sm:$0xff]
        %v561 = vld [vmem:[%s224 + $0x898] sm:$0xff]
        %v562 = vld [vmem:[%s224 + $0x8a0] sm:$0xff]
        %v563 = vld [vmem:[%s224 + $0x8a8] sm:$0xff]
        %v564 = vld [vmem:[%s224 + $0x8b0] sm:$0xff]
        %v565 = vld [vmem:[%s224 + $0x8b8] sm:$0xff]
        %v566 = vld [vmem:[%s224 + $0x8c0] sm:$0xff]
        %v567 = vld [vmem:[%s224 + $0x8c8] sm:$0xff]
        %v568 = vld [vmem:[%s224 + $0x8d0] sm:$0xff]
        %v569 = vld [vmem:[%s224 + $0x8d8] sm:$0xff]
        %v570 = vld [vmem:[%s224 + $0x8e0] sm:$0xff]
        %v571 = vld [vmem:[%s224 + $0x8e8] sm:$0xff]
        %v572 = vld [vmem:[%s224 + $0x8f0] sm:$0xff]
        %v573 = vld [vmem:[%s224 + $0x8f8] sm:$0xff]
        %v574 = vld [vmem:[%s224 + $0x900] sm:$0xff]
        %v575 = vld [vmem:[%s224 + $0x908] sm:$0xff]
        %v576 = vld [vmem:[%s224 + $0x910] sm:$0xff]
        %v577 = vld [vmem:[%s224 + $0x918] sm:$0xff]
        %v578 = vld [vmem:[%s224 + $0x920] sm:$0xff]
        %v579 = vld [vmem:[%s224 + $0x928] sm:$0xff]
        %v580 = vld [vmem:[%s224 + $0x930] sm:$0xff]
        %v581 = vld [vmem:[%s224 + $0x938] sm:$0xff]
        %v582 = vld [vmem:[%s224 + $0x940] sm:$0xff]
        %v583 = vld [vmem:[%s224 + $0x948] sm:$0xff]
        %v584 = vld [vmem:[%s224 + $0x950] sm:$0xff]
        %v585 = vld [vmem:[%s224 + $0x958] sm:$0xff]
        %v586 = vld [vmem:[%s224 + $0x960] sm:$0xff]
        %v587 = vld [vmem:[%s224 + $0x968] sm:$0xff]
        %v588 = vld [vmem:[%s224 + $0x970] sm:$0xff]
        %v589 = vld [vmem:[%s224 + $0x978] sm:$0xff]
        %v590 = vld [vmem:[%s224 + $0x980] sm:$0xff]
        %v591 = vld [vmem:[%s224 + $0x988] sm:$0xff]
        %v592 = vld [vmem:[%s224 + $0x990] sm:$0xff]
        %v593 = vld [vmem:[%s224 + $0x998] sm:$0xff]
        %v594 = vld [vmem:[%s224 + $0x9a0] sm:$0xff]
        %v595 = vld [vmem:[%s224 + $0x9a8] sm:$0xff]
        %v596 = vld [vmem:[%s224 + $0x9b0] sm:$0xff]
        %v597 = vld [vmem:[%s224 + $0x9b8] sm:$0xff]
        %v598 = vld [vmem:[%s224 + $0x9c0] sm:$0xff]
        %v599 = vld [vmem:[%s224 + $0x9c8] sm:$0xff]
        %v600 = vld [vmem:[%s224 + $0x9d0] sm:$0xff]
        %v601 = vld [vmem:[%s224 + $0x9d8] sm:$0xff]
        %v602 = vld [vmem:[%s224 + $0x9e0] sm:$0xff]
        %v603 = vld [vmem:[%s224 + $0x9e8] sm:$0xff]
        %v604 = vld [vmem:[%s224 + $0x9f0] sm:$0xff]
        %v605 = vld [vmem:[%s224 + $0x9f8] sm:$0xff]
        %v606 = vld [vmem:[%s224 + $0xa00] sm:$0xff]
        %v607 = vld [vmem:[%s224 + $0xa08] sm:$0xff]
        %v608 = vld [vmem:[%s224 + $0xa10] sm:$0xff]
        %v609 = vld [vmem:[%s224 + $0xa18] sm:$0xff]
        %v610 = vld [vmem:[%s224 + $0xa20] sm:$0xff]
        %v611 = vld [vmem:[%s224 + $0xa28] sm:$0xff]
        %v612 = vld [vmem:[%s224 + $0xa30] sm:$0xff]
        %v613 = vld [vmem:[%s224 + $0xa38] sm:$0xff]
        %v614 = vld [vmem:[%s224 + $0xa40] sm:$0xff]
        %v615 = vld [vmem:[%s224 + $0xa48] sm:$0xff]
        %v616 = vld [vmem:[%s224 + $0xa50] sm:$0xff]
        %v617 = vld [vmem:[%s224 + $0xa58] sm:$0xff]
        %v618 = vld [vmem:[%s224 + $0xa60] sm:$0xff]
        %v619 = vld [vmem:[%s224 + $0xa68] sm:$0xff]
        %v620 = vld [vmem:[%s224 + $0xa70] sm:$0xff]
        %v621 = vld [vmem:[%s224 + $0xa78] sm:$0xff]
        %v622 = vld [vmem:[%s224 + $0xa80] sm:$0xff]
        %v623 = vld [vmem:[%s224 + $0xa88] sm:$0xff]
        %v624 = vld [vmem:[%s224 + $0xa90] sm:$0xff]
        %v625 = vld [vmem:[%s224 + $0xa98] sm:$0xff]
        %v626 = vld [vmem:[%s224 + $0xaa0] sm:$0xff]
        %v627 = vld [vmem:[%s224 + $0xaa8] sm:$0xff]
        %v628 = vld [vmem:[%s224 + $0xab0] sm:$0xff]
        %v629 = vld [vmem:[%s224 + $0xab8] sm:$0xff]
        %v630 = vld [vmem:[%s224 + $0xac0] sm:$0xff]
        %v631 = vld [vmem:[%s224 + $0xac8] sm:$0xff]
        %v632 = vld [vmem:[%s224 + $0xad0] sm:$0xff]
        %v633 = vld [vmem:[%s224 + $0xad8] sm:$0xff]
        %v634 = vld [vmem:[%s224 + $0xae0] sm:$0xff]
        %v635 = vld [vmem:[%s224 + $0xae8] sm:$0xff]
        %v636 = vld [vmem:[%s224 + $0xaf0] sm:$0xff]
        %v637 = vld [vmem:[%s224 + $0xaf8] sm:$0xff]
        %v638 = vld [vmem:[%s224 + $0xb00] sm:$0xff]
        %v639 = vld [vmem:[%s224 + $0xb08] sm:$0xff]
        %v640 = vld [vmem:[%s224 + $0xb10] sm:$0xff]
        %v641 = vld [vmem:[%s224 + $0xb18] sm:$0xff]
        %v642 = vld [vmem:[%s224 + $0xb20] sm:$0xff]
        %v643 = vld [vmem:[%s224 + $0xb28] sm:$0xff]
        %v644 = vld [vmem:[%s224 + $0xb30] sm:$0xff]
        %v645 = vld [vmem:[%s224 + $0xb38] sm:$0xff]
        %v646 = vld [vmem:[%s224 + $0xb40] sm:$0xff]
        %v647 = vld [vmem:[%s224 + $0xb48] sm:$0xff]
        %v648 = vld [vmem:[%s224 + $0xb50] sm:$0xff]
        %v649 = vld [vmem:[%s224 + $0xb58] sm:$0xff]
        %v650 = vld [vmem:[%s224 + $0xb60] sm:$0xff]
        %v651 = vld [vmem:[%s224 + $0xb68] sm:$0xff]
        %v652 = vld [vmem:[%s224 + $0xb70] sm:$0xff]
        %v653 = vld [vmem:[%s224 + $0xb78] sm:$0xff]
        %v654 = vld [vmem:[%s224 + $0xb80] sm:$0xff]
        %v655 = vld [vmem:[%s224 + $0xb88] sm:$0xff]
        %v656 = vld [vmem:[%s224 + $0xb90] sm:$0xff]
        %v657 = vld [vmem:[%s224 + $0xb98] sm:$0xff]
        %v658 = vld [vmem:[%s224 + $0xba0] sm:$0xff]
        %v659 = vld [vmem:[%s224 + $0xba8] sm:$0xff]
        %v660 = vld [vmem:[%s224 + $0xbb0] sm:$0xff]
        %v661 = vld [vmem:[%s224 + $0xbb8] sm:$0xff]
        %v662 = vld [vmem:[%s224 + $0xbc0] sm:$0xff]
        %v663 = vld [vmem:[%s224 + $0xbc8] sm:$0xff]
        %v664 = vld [vmem:[%s224 + $0xbd0] sm:$0xff]
        %v665 = vld [vmem:[%s224 + $0xbd8] sm:$0xff]
        %v666 = vld [vmem:[%s224 + $0xbe0] sm:$0xff]
        %v667 = vld [vmem:[%s224 + $0xbe8] sm:$0xff]
        %v668 = vld [vmem:[%s224 + $0xbf0] sm:$0xff]
        %v669 = vld [vmem:[%s224 + $0xbf8] sm:$0xff]
        %v670 = vld [vmem:[%s224 + $0xc00] sm:$0xff]
        %v671 = vld [vmem:[%s224 + $0xc08] sm:$0xff]
        %v672 = vld [vmem:[%s224 + $0xc10] sm:$0xff]
        %v673 = vld [vmem:[%s224 + $0xc18] sm:$0xff]
        %v674 = vld [vmem:[%s224 + $0xc20] sm:$0xff]
        %v675 = vld [vmem:[%s224 + $0xc28] sm:$0xff]
        %v676 = vld [vmem:[%s224 + $0xc30] sm:$0xff]
        %v677 = vld [vmem:[%s224 + $0xc38] sm:$0xff]
        %v678 = vld [vmem:[%s224 + $0xc40] sm:$0xff]
        %v679 = vld [vmem:[%s224 + $0xc48] sm:$0xff]
        %v680 = vld [vmem:[%s224 + $0xc50] sm:$0xff]
        %v681 = vld [vmem:[%s224 + $0xc58] sm:$0xff]
        %v682 = vld [vmem:[%s224 + $0xc60] sm:$0xff]
        %v683 = vld [vmem:[%s224 + $0xc68] sm:$0xff]
        %v684 = vld [vmem:[%s224 + $0xc70] sm:$0xff]
        %v685 = vld [vmem:[%s224 + $0xc78] sm:$0xff]
        %v686 = vld [vmem:[%s224 + $0xc80] sm:$0xff]
        %v687 = vld [vmem:[%s224 + $0xc88] sm:$0xff]
        %v688 = vld [vmem:[%s224 + $0xc90] sm:$0xff]
        %v689 = vld [vmem:[%s224 + $0xc98] sm:$0xff]
        %v690 = vld [vmem:[%s224 + $0xca0] sm:$0xff]
        %v691 = vld [vmem:[%s224 + $0xca8] sm:$0xff]
        %v692 = vld [vmem:[%s224 + $0xcb0] sm:$0xff]
        %v693 = vld [vmem:[%s224 + $0xcb8] sm:$0xff]
        %v694 = vld [vmem:[%s224 + $0xcc0] sm:$0xff]
        %v695 = vld [vmem:[%s224 + $0xcc8] sm:$0xff]
        %v696 = vld [vmem:[%s224 + $0xcd0] sm:$0xff]
        %v697 = vld [vmem:[%s224 + $0xcd8] sm:$0xff]
        %v698 = vld [vmem:[%s224 + $0xce0] sm:$0xff]
        %v699 = vld [vmem:[%s224 + $0xce8] sm:$0xff]
        %v700 = vld [vmem:[%s224 + $0xcf0] sm:$0xff]
        %v701 = vld [vmem:[%s224 + $0xcf8] sm:$0xff]
        %v702 = vld [vmem:[%s224 + $0xd00] sm:$0xff]
        %v703 = vld [vmem:[%s224 + $0xd08] sm:$0xff]
        %v704 = vld [vmem:[%s224 + $0xd10] sm:$0xff]
        %v705 = vld [vmem:[%s224 + $0xd18] sm:$0xff]
        %v706 = vld [vmem:[%s224 + $0xd20] sm:$0xff]
        %v707 = vld [vmem:[%s224 + $0xd28] sm:$0xff]
        %v708 = vld [vmem:[%s224 + $0xd30] sm:$0xff]
        %v709 = vld [vmem:[%s224 + $0xd38] sm:$0xff]
        %v710 = vld [vmem:[%s224 + $0xd40] sm:$0xff]
        %v711 = vld [vmem:[%s224 + $0xd48] sm:$0xff]
        %v712 = vld [vmem:[%s224 + $0xd50] sm:$0xff]
        %v713 = vld [vmem:[%s224 + $0xd58] sm:$0xff]
        %v714 = vld [vmem:[%s224 + $0xd60] sm:$0xff]
        %v715 = vld [vmem:[%s224 + $0xd68] sm:$0xff]
        %v716 = vld [vmem:[%s224 + $0xd70] sm:$0xff]
        %v717 = vld [vmem:[%s224 + $0xd78] sm:$0xff]
        %v718 = vld [vmem:[%s224 + $0xd80] sm:$0xff]
        %v719 = vld [vmem:[%s224 + $0xd88] sm:$0xff]
        %v720 = vld [vmem:[%s224 + $0xd90] sm:$0xff]
        %v721 = vld [vmem:[%s224 + $0xd98] sm:$0xff]
        %v722 = vld [vmem:[%s224 + $0xda0] sm:$0xff]
        %v723 = vld [vmem:[%s224 + $0xda8] sm:$0xff]
        %v724 = vld [vmem:[%s224 + $0xdb0] sm:$0xff]
        %v725 = vld [vmem:[%s224 + $0xdb8] sm:$0xff]
        %v726 = vld [vmem:[%s224 + $0xdc0] sm:$0xff]
        %v727 = vld [vmem:[%s224 + $0xdc8] sm:$0xff]
        %v728 = vld [vmem:[%s224 + $0xdd0] sm:$0xff]
        %v729 = vld [vmem:[%s224 + $0xdd8] sm:$0xff]
        %v730 = vld [vmem:[%s224 + $0xde0] sm:$0xff]
        %v731 = vld [vmem:[%s224 + $0xde8] sm:$0xff]
        %v732 = vld [vmem:[%s224 + $0xdf0] sm:$0xff]
        %v733 = vld [vmem:[%s224 + $0xdf8] sm:$0xff]
        %v734 = vld [vmem:[%s224 + $0xe00] sm:$0xff]
        %v735 = vld [vmem:[%s224 + $0xe08] sm:$0xff]
        %v736 = vld [vmem:[%s224 + $0xe10] sm:$0xff]
        %v737 = vld [vmem:[%s224 + $0xe18] sm:$0xff]
        %v738 = vld [vmem:[%s224 + $0xe20] sm:$0xff]
        %v739 = vld [vmem:[%s224 + $0xe28] sm:$0xff]
        %v740 = vld [vmem:[%s224 + $0xe30] sm:$0xff]
        %v741 = vld [vmem:[%s224 + $0xe38] sm:$0xff]
        %v742 = vld [vmem:[%s224 + $0xe40] sm:$0xff]
        %v743 = vld [vmem:[%s224 + $0xe48] sm:$0xff]
        %v744 = vld [vmem:[%s224 + $0xe50] sm:$0xff]
        %v745 = vld [vmem:[%s224 + $0xe58] sm:$0xff]
        %v746 = vld [vmem:[%s224 + $0xe60] sm:$0xff]
        %v747 = vld [vmem:[%s224 + $0xe68] sm:$0xff]
        %v748 = vld [vmem:[%s224 + $0xe70] sm:$0xff]
        %v749 = vld [vmem:[%s224 + $0xe78] sm:$0xff]
        %v750 = vld [vmem:[%s224 + $0xe80] sm:$0xff]
        %v751 = vld [vmem:[%s224 + $0xe88] sm:$0xff]
        %v752 = vld [vmem:[%s224 + $0xe90] sm:$0xff]
        %v753 = vld [vmem:[%s224 + $0xe98] sm:$0xff]
        %v754 = vld [vmem:[%s224 + $0xea0] sm:$0xff]
        %v755 = vld [vmem:[%s224 + $0xea8] sm:$0xff]
        %v756 = vld [vmem:[%s224 + $0xeb0] sm:$0xff]
        %v757 = vld [vmem:[%s224 + $0xeb8] sm:$0xff]
        %v758 = vld [vmem:[%s224 + $0xec0] sm:$0xff]
        %v759 = vld [vmem:[%s224 + $0xec8] sm:$0xff]
        %v760 = vld [vmem:[%s224 + $0xed0] sm:$0xff]
        %v761 = vld [vmem:[%s224 + $0xed8] sm:$0xff]
        %v762 = vld [vmem:[%s224 + $0xee0] sm:$0xff]
        %v763 = vld [vmem:[%s224 + $0xee8] sm:$0xff]
        %v764 = vld [vmem:[%s224 + $0xef0] sm:$0xff]
        %v765 = vld [vmem:[%s224 + $0xef8] sm:$0xff]
        %v766 = vld [vmem:[%s224 + $0xf00] sm:$0xff]
        %v767 = vld [vmem:[%s224 + $0xf08] sm:$0xff]
        %v768 = vld [vmem:[%s224 + $0xf10] sm:$0xff]
        %v769 = vld [vmem:[%s224 + $0xf18] sm:$0xff]
        %v770 = vld [vmem:[%s224 + $0xf20] sm:$0xff]
        %v771 = vld [vmem:[%s224 + $0xf28] sm:$0xff]
        %v772 = vld [vmem:[%s224 + $0xf30] sm:$0xff]
        %v773 = vld [vmem:[%s224 + $0xf38] sm:$0xff]
        %v774 = vld [vmem:[%s224 + $0xf40] sm:$0xff]
        %v775 = vld [vmem:[%s224 + $0xf48] sm:$0xff]
        %v776 = vld [vmem:[%s224 + $0xf50] sm:$0xff]
        %v777 = vld [vmem:[%s224 + $0xf58] sm:$0xff]
        %v778 = vld [vmem:[%s224 + $0xf60] sm:$0xff]
        %v779 = vld [vmem:[%s224 + $0xf68] sm:$0xff]
        %v780 = vld [vmem:[%s224 + $0xf70] sm:$0xff]
        %v781 = vld [vmem:[%s224 + $0xf78] sm:$0xff]
        %v782 = vld [vmem:[%s224 + $0xf80] sm:$0xff]
        %v783 = vld [vmem:[%s224 + $0xf88] sm:$0xff]
        %v784 = vld [vmem:[%s224 + $0xf90] sm:$0xff]
        %v785 = vld [vmem:[%s224 + $0xf98] sm:$0xff]
        %v786 = vld [vmem:[%s224 + $0xfa0] sm:$0xff]
        %v787 = vld [vmem:[%s224 + $0xfa8] sm:$0xff]
        %v788 = vld [vmem:[%s224 + $0xfb0] sm:$0xff]
        %v789 = vld [vmem:[%s224 + $0xfb8] sm:$0xff]
        %v790 = vld [vmem:[%s224 + $0xfc0] sm:$0xff]
        %v791 = vld [vmem:[%s224 + $0xfc8] sm:$0xff]
        %v792 = vld [vmem:[%s224 + $0xfd0] sm:$0xff]
        %v793 = vld [vmem:[%s224 + $0xfd8] sm:$0xff]
        %v794 = vld [vmem:[%s224 + $0xfe0] sm:$0xff]
        %v795 = vld [vmem:[%s224 + $0xfe8] sm:$0xff]
        %v796 = vld [vmem:[%s224 + $0xff0] sm:$0xff]
        %v797 = vld [vmem:[%s224 + $0xff8] sm:$0xff]
        %v798 = vld [vmem:[%s224 + $0x1000] sm:$0xff]
        %v799 = vld [vmem:[%s224 + $0x1008] sm:$0xff]
        %v800 = vld [vmem:[%s224 + $0x1010] sm:$0xff]
        %v801 = vld [vmem:[%s224 + $0x1018] sm:$0xff]
        %v802 = vld [vmem:[%s224 + $0x1020] sm:$0xff]
        %v803 = vld [vmem:[%s224 + $0x1028] sm:$0xff]
        %v804 = vld [vmem:[%s224 + $0x1030] sm:$0xff]
        %v805 = vld [vmem:[%s224 + $0x1038] sm:$0xff]
        %v806 = vld [vmem:[%s224 + $0x1040] sm:$0xff]
        %v807 = vld [vmem:[%s224 + $0x1048] sm:$0xff]
        %v808 = vld [vmem:[%s224 + $0x1050] sm:$0xff]
        %v809 = vld [vmem:[%s224 + $0x1058] sm:$0xff]
        %v810 = vld [vmem:[%s224 + $0x1060] sm:$0xff]
        %v811 = vld [vmem:[%s224 + $0x1068] sm:$0xff]
        %v812 = vld [vmem:[%s224 + $0x1070] sm:$0xff]
        %v813 = vld [vmem:[%s224 + $0x1078] sm:$0xff]
        %v814 = vld [vmem:[%s224 + $0x1080] sm:$0xff]
        %v815 = vld [vmem:[%s224 + $0x1088] sm:$0xff]
        %v816 = vld [vmem:[%s224 + $0x1090] sm:$0xff]
        %v817 = vld [vmem:[%s224 + $0x1098] sm:$0xff]
        %v818 = vld [vmem:[%s224 + $0x10a0] sm:$0xff]
        %v819 = vld [vmem:[%s224 + $0x10a8] sm:$0xff]
        %v820 = vld [vmem:[%s224 + $0x10b0] sm:$0xff]
        %v821 = vld [vmem:[%s224 + $0x10b8] sm:$0xff]
        %v822 = vld [vmem:[%s224 + $0x10c0] sm:$0xff]
        %v823 = vld [vmem:[%s224 + $0x10c8] sm:$0xff]
        %v824 = vld [vmem:[%s224 + $0x10d0] sm:$0xff]
        %v825 = vld [vmem:[%s224 + $0x10d8] sm:$0xff]
        %v826 = vld [vmem:[%s224 + $0x10e0] sm:$0xff]
        %v827 = vld [vmem:[%s224 + $0x10e8] sm:$0xff]
        %v828 = vld [vmem:[%s224 + $0x10f0] sm:$0xff]
        %v829 = vld [vmem:[%s224 + $0x10f8] sm:$0xff]
        %v830 = vld [vmem:[%s224 + $0x1100] sm:$0xff]
        %v831 = vld [vmem:[%s224 + $0x1108] sm:$0xff]
        %v832 = vld [vmem:[%s224 + $0x1110] sm:$0xff]
        %v833 = vld [vmem:[%s224 + $0x1118] sm:$0xff]
        %v834 = vld [vmem:[%s224 + $0x1120] sm:$0xff]
        %v835 = vld [vmem:[%s224 + $0x1128] sm:$0xff]
        %v836 = vld [vmem:[%s224 + $0x1130] sm:$0xff]
        %v837 = vld [vmem:[%s224 + $0x1138] sm:$0xff]
        %v838 = vld [vmem:[%s224 + $0x1140] sm:$0xff]
        %v839 = vld [vmem:[%s224 + $0x1148] sm:$0xff]
        %v840 = vld [vmem:[%s224 + $0x1150] sm:$0xff]
        %v841 = vld [vmem:[%s224 + $0x1158] sm:$0xff]
        %v842 = vld [vmem:[%s224 + $0x1160] sm:$0xff]
        %v843 = vld [vmem:[%s224 + $0x1168] sm:$0xff]
        %v844 = vld [vmem:[%s224 + $0x1170] sm:$0xff]
        %v845 = vld [vmem:[%s224 + $0x1178] sm:$0xff]
        %v846 = vld [vmem:[%s224 + $0x1180] sm:$0xff]
        %v847 = vld [vmem:[%s224 + $0x1188] sm:$0xff]
        %v848 = vld [vmem:[%s224 + $0x1190] sm:$0xff]
        %v849 = vld [vmem:[%s224 + $0x1198] sm:$0xff]
        %v850 = vld [vmem:[%s224 + $0x11a0] sm:$0xff]
        %v851 = vld [vmem:[%s224 + $0x11a8] sm:$0xff]
        %v852 = vld [vmem:[%s224 + $0x11b0] sm:$0xff]
        %v853 = vld [vmem:[%s224 + $0x11b8] sm:$0xff]
        %v854 = vld [vmem:[%s224 + $0x11c0] sm:$0xff]
        %v855 = vld [vmem:[%s224 + $0x11c8] sm:$0xff]
        %v856 = vld [vmem:[%s224 + $0x11d0] sm:$0xff]
        %v857 = vld [vmem:[%s224 + $0x11d8] sm:$0xff]
        %v858 = vld [vmem:[%s224 + $0x11e0] sm:$0xff]
        %v859 = vld [vmem:[%s224 + $0x11e8] sm:$0xff]
        %v860 = vld [vmem:[%s224 + $0x11f0] sm:$0xff]
        %v861 = vld [vmem:[%s224 + $0x11f8] sm:$0xff]
        %v862 = vld [vmem:[%s224 + $0x1200] sm:$0xff]
        %v863 = vld [vmem:[%s224 + $0x1208] sm:$0xff]
        %v864 = vld [vmem:[%s224 + $0x1210] sm:$0xff]
        %v865 = vld [vmem:[%s224 + $0x1218] sm:$0xff]
        %v866 = vld [vmem:[%s224 + $0x1220] sm:$0xff]
        %v867 = vld [vmem:[%s224 + $0x1228] sm:$0xff]
        %v868 = vld [vmem:[%s224 + $0x1230] sm:$0xff]
        %v869 = vld [vmem:[%s224 + $0x1238] sm:$0xff]
        %v870 = vld [vmem:[%s224 + $0x1240] sm:$0xff]
        %v871 = vld [vmem:[%s224 + $0x1248] sm:$0xff]
        %v872 = vld [vmem:[%s224 + $0x1250] sm:$0xff]
        %v873 = vld [vmem:[%s224 + $0x1258] sm:$0xff]
        %v874 = vld [vmem:[%s224 + $0x1260] sm:$0xff]
        %v875 = vld [vmem:[%s224 + $0x1268] sm:$0xff]
        %v876 = vld [vmem:[%s224 + $0x1270] sm:$0xff]
        %v877 = vld [vmem:[%s224 + $0x1278] sm:$0xff]
        %v878 = vld [vmem:[%s224 + $0x1280] sm:$0xff]
        %v879 = vld [vmem:[%s224 + $0x1288] sm:$0xff]
        %v880 = vld [vmem:[%s224 + $0x1290] sm:$0xff]
        %v881 = vld [vmem:[%s224 + $0x1298] sm:$0xff]
        %v882 = vld [vmem:[%s224 + $0x12a0] sm:$0xff]
        %v883 = vld [vmem:[%s224 + $0x12a8] sm:$0xff]
        %v884 = vld [vmem:[%s224 + $0x12b0] sm:$0xff]
        %v885 = vld [vmem:[%s224 + $0x12b8] sm:$0xff]
        %v886 = vld [vmem:[%s224 + $0x12c0] sm:$0xff]
        %v887 = vld [vmem:[%s224 + $0x12c8] sm:$0xff]
        %v888 = vld [vmem:[%s224 + $0x12d0] sm:$0xff]
        %v889 = vld [vmem:[%s224 + $0x12d8] sm:$0xff]
        %v890 = vld [vmem:[%s224 + $0x12e0] sm:$0xff]
        %v891 = vld [vmem:[%s224 + $0x12e8] sm:$0xff]
        %v892 = vld [vmem:[%s224 + $0x12f0] sm:$0xff]
        %v893 = vld [vmem:[%s224 + $0x12f8] sm:$0xff]
        %v894 = vld [vmem:[%s224 + $0x1300] sm:$0xff]
        %v895 = vld [vmem:[%s224 + $0x1308] sm:$0xff]
        %v896 = vld [vmem:[%s224 + $0x1310] sm:$0xff]
        %v897 = vld [vmem:[%s224 + $0x1318] sm:$0xff]
        %v898 = vld [vmem:[%s224 + $0x1320] sm:$0xff]
        %v899 = vld [vmem:[%s224 + $0x1328] sm:$0xff]
        %v900 = vld [vmem:[%s224 + $0x1330] sm:$0xff]
        %v901 = vld [vmem:[%s224 + $0x1338] sm:$0xff]
        %v902 = vld [vmem:[%s224 + $0x1340] sm:$0xff]
        %v903 = vld [vmem:[%s224 + $0x1348] sm:$0xff]
        %v904 = vld [vmem:[%s224 + $0x1350] sm:$0xff]
        %v905 = vld [vmem:[%s224 + $0x1358] sm:$0xff]
        %v906 = vld [vmem:[%s224 + $0x1360] sm:$0xff]
        %v907 = vld [vmem:[%s224 + $0x1368] sm:$0xff]
        %v908 = vld [vmem:[%s224 + $0x1370] sm:$0xff]
        %v909 = vld [vmem:[%s224 + $0x1378] sm:$0xff]
        %v910 = vld [vmem:[%s224 + $0x1380] sm:$0xff]
        %v911 = vld [vmem:[%s224 + $0x1388] sm:$0xff]
        %v912 = vld [vmem:[%s224 + $0x1390] sm:$0xff]
        %v913 = vld [vmem:[%s224 + $0x1398] sm:$0xff]
        %v914 = vld [vmem:[%s224 + $0x13a0] sm:$0xff]
        %v915 = vld [vmem:[%s224 + $0x13a8] sm:$0xff]
        %v916 = vld [vmem:[%s224 + $0x13b0] sm:$0xff]
        %v917 = vld [vmem:[%s224 + $0x13b8] sm:$0xff]
        %v918 = vld [vmem:[%s224 + $0x13c0] sm:$0xff]
        %v919 = vld [vmem:[%s224 + $0x13c8] sm:$0xff]
        %v920 = vld [vmem:[%s224 + $0x13d0] sm:$0xff]
        %v921 = vld [vmem:[%s224 + $0x13d8] sm:$0xff]
        %v922 = vld [vmem:[%s224 + $0x13e0] sm:$0xff]
        %v923 = vld [vmem:[%s224 + $0x13e8] sm:$0xff]
        %v924 = vld [vmem:[%s224 + $0x13f0] sm:$0xff]
        %v925 = vld [vmem:[%s224 + $0x13f8] sm:$0xff]
        %v926 = vld [vmem:[%s224 + $0x1400] sm:$0xff]
        %v927 = vld [vmem:[%s224 + $0x1408] sm:$0xff]
        %v928 = vld [vmem:[%s224 + $0x1410] sm:$0xff]
        %v929 = vld [vmem:[%s224 + $0x1418] sm:$0xff]
        %v930 = vld [vmem:[%s224 + $0x1420] sm:$0xff]
        %v931 = vld [vmem:[%s224 + $0x1428] sm:$0xff]
        %v932 = vld [vmem:[%s224 + $0x1430] sm:$0xff]
        %v933 = vld [vmem:[%s224 + $0x1438] sm:$0xff]
        %v934 = vld [vmem:[%s224 + $0x1440] sm:$0xff]
        %v935 = vld [vmem:[%s224 + $0x1448] sm:$0xff]
        %v936 = vld [vmem:[%s224 + $0x1450] sm:$0xff]
        %v937 = vld [vmem:[%s224 + $0x1458] sm:$0xff]
        %v938 = vld [vmem:[%s224 + $0x1460] sm:$0xff]
        %v939 = vld [vmem:[%s224 + $0x1468] sm:$0xff]
        %v940 = vld [vmem:[%s224 + $0x1470] sm:$0xff]
        %v941 = vld [vmem:[%s224 + $0x1478] sm:$0xff]
        %v942 = vld [vmem:[%s224 + $0x1480] sm:$0xff]
        %v943 = vld [vmem:[%s224 + $0x1488] sm:$0xff]
        %v944 = vld [vmem:[%s224 + $0x1490] sm:$0xff]
        %v945 = vld [vmem:[%s224 + $0x1498] sm:$0xff]
        %v946 = vld [vmem:[%s224 + $0x14a0] sm:$0xff]
        %v947 = vld [vmem:[%s224 + $0x14a8] sm:$0xff]
        %v948 = vld [vmem:[%s224 + $0x14b0] sm:$0xff]
        %v949 = vld [vmem:[%s224 + $0x14b8] sm:$0xff]
        %v950 = vld [vmem:[%s224 + $0x14c0] sm:$0xff]
        %v951 = vld [vmem:[%s224 + $0x14c8] sm:$0xff]
        %v952 = vld [vmem:[%s224 + $0x14d0] sm:$0xff]
        %v953 = vld [vmem:[%s224 + $0x14d8] sm:$0xff]
        %v954 = vld [vmem:[%s224 + $0x14e0] sm:$0xff]
        %v955 = vld [vmem:[%s224 + $0x14e8] sm:$0xff]
        %v956 = vld [vmem:[%s224 + $0x14f0] sm:$0xff]
        %v957 = vld [vmem:[%s224 + $0x14f8] sm:$0xff]
        %v958 = vld [vmem:[%s224 + $0x1500] sm:$0xff]
        %v959 = vld [vmem:[%s224 + $0x1508] sm:$0xff]
        %v960 = vld [vmem:[%s224 + $0x1510] sm:$0xff]
        %v961 = vld [vmem:[%s224 + $0x1518] sm:$0xff]
        %v962 = vld [vmem:[%s224 + $0x1520] sm:$0xff]
        %v963 = vld [vmem:[%s224 + $0x1528] sm:$0xff]
        %v964 = vld [vmem:[%s224 + $0x1530] sm:$0xff]
        %v965 = vld [vmem:[%s224 + $0x1538] sm:$0xff]
        %v966 = vld [vmem:[%s224 + $0x1540] sm:$0xff]
        %v967 = vld [vmem:[%s224 + $0x1548] sm:$0xff]
        %v968 = vld [vmem:[%s224 + $0x1550] sm:$0xff]
        %v969 = vld [vmem:[%s224 + $0x1558] sm:$0xff]
        %v970 = vld [vmem:[%s224 + $0x1560] sm:$0xff]
        %v971 = vld [vmem:[%s224 + $0x1568] sm:$0xff]
        %v972 = vld [vmem:[%s224 + $0x1570] sm:$0xff]
        %v973 = vld [vmem:[%s224 + $0x1578] sm:$0xff]
        %v974 = vld [vmem:[%s224 + $0x1580] sm:$0xff]
        %v975 = vld [vmem:[%s224 + $0x1588] sm:$0xff]
        %v976 = vld [vmem:[%s224 + $0x1590] sm:$0xff]
        %v977 = vld [vmem:[%s224 + $0x1598] sm:$0xff]
        %v978 = vld [vmem:[%s224 + $0x15a0] sm:$0xff]
        %v979 = vld [vmem:[%s224 + $0x15a8] sm:$0xff]
        %v980 = vld [vmem:[%s224 + $0x15b0] sm:$0xff]
        %v981 = vld [vmem:[%s224 + $0x15b8] sm:$0xff]
        %v982 = vld [vmem:[%s224 + $0x15c0] sm:$0xff]
        %v983 = vld [vmem:[%s224 + $0x15c8] sm:$0xff]
        %v984 = vld [vmem:[%s224 + $0x15d0] sm:$0xff]
        %v985 = vld [vmem:[%s224 + $0x15d8] sm:$0xff]
        %v986 = vld [vmem:[%s224 + $0x15e0] sm:$0xff]
        %v987 = vld [vmem:[%s224 + $0x15e8] sm:$0xff]
        %v988 = vld [vmem:[%s224 + $0x15f0] sm:$0xff]
        %v989 = vld [vmem:[%s224 + $0x15f8] sm:$0xff]
        %v990 = vld [vmem:[%s224 + $0x1600] sm:$0xff]
        %v991 = vld [vmem:[%s224 + $0x1608] sm:$0xff]
        %v992 = vld [vmem:[%s224 + $0x1610] sm:$0xff]
        %v993 = vld [vmem:[%s224 + $0x1618] sm:$0xff]
        %v994 = vld [vmem:[%s224 + $0x1620] sm:$0xff]
        %v995 = vld [vmem:[%s224 + $0x1628] sm:$0xff]
        %v996 = vld [vmem:[%s224 + $0x1630] sm:$0xff]
        %v997 = vld [vmem:[%s224 + $0x1638] sm:$0xff]
        %v998 = vld [vmem:[%s224 + $0x1640] sm:$0xff]
        %v999 = vld [vmem:[%s224 + $0x1648] sm:$0xff]
        %v1000 = vld [vmem:[%s224 + $0x1650] sm:$0xff]
        %v1001 = vld [vmem:[%s224 + $0x1658] sm:$0xff]
        %v1002 = vld [vmem:[%s224 + $0x1660] sm:$0xff]
        %v1003 = vld [vmem:[%s224 + $0x1668] sm:$0xff]
        %v1004 = vld [vmem:[%s224 + $0x1670] sm:$0xff]
        %v1005 = vld [vmem:[%s224 + $0x1678] sm:$0xff]
        %v1006 = vld [vmem:[%s224 + $0x1680] sm:$0xff]
        %v1007 = vld [vmem:[%s224 + $0x1688] sm:$0xff]
        %v1008 = vld [vmem:[%s224 + $0x1690] sm:$0xff]
        %v1009 = vld [vmem:[%s224 + $0x1698] sm:$0xff]
        %v1010 = vld [vmem:[%s224 + $0x16a0] sm:$0xff]
        %v1011 = vld [vmem:[%s224 + $0x16a8] sm:$0xff]
        %v1012 = vld [vmem:[%s224 + $0x16b0] sm:$0xff]
        %v1013 = vld [vmem:[%s224 + $0x16b8] sm:$0xff]
        %v1014 = vld [vmem:[%s224 + $0x16c0] sm:$0xff]
        %v1015 = vld [vmem:[%s224 + $0x16c8] sm:$0xff]
        %v1016 = vld [vmem:[%s224 + $0x16d0] sm:$0xff]
        %v1017 = vld [vmem:[%s224 + $0x16d8] sm:$0xff]
        %v1018 = vld [vmem:[%s224 + $0x16e0] sm:$0xff]
        %v1019 = vld [vmem:[%s224 + $0x16e8] sm:$0xff]
        %v1020 = vld [vmem:[%s224 + $0x16f0] sm:$0xff]
        %v1021 = vld [vmem:[%s224 + $0x16f8] sm:$0xff]
        %v1022 = vld [vmem:[%s224 + $0x1700] sm:$0xff]
        %v1023 = vld [vmem:[%s224 + $0x1708] sm:$0xff]
        %v1024 = vld [vmem:[%s224 + $0x1710] sm:$0xff]
        %v1025 = vld [vmem:[%s224 + $0x1718] sm:$0xff]
        %v1026 = vld [vmem:[%s224 + $0x1720] sm:$0xff]
        %v1027 = vld [vmem:[%s224 + $0x1728] sm:$0xff]
        %v1028 = vld [vmem:[%s224 + $0x1730] sm:$0xff]
        %v1029 = vld [vmem:[%s224 + $0x1738] sm:$0xff]
        %v1030 = vld [vmem:[%s224 + $0x1740] sm:$0xff]
        %v1031 = vld [vmem:[%s224 + $0x1748] sm:$0xff]
        %v1032 = vld [vmem:[%s224 + $0x1750] sm:$0xff]
        %v1033 = vld [vmem:[%s224 + $0x1758] sm:$0xff]
        %v1034 = vld [vmem:[%s224 + $0x1760] sm:$0xff]
        %v1035 = vld [vmem:[%s224 + $0x1768] sm:$0xff]
        %v1036 = vld [vmem:[%s224 + $0x1770] sm:$0xff]
        %v1037 = vld [vmem:[%s224 + $0x1778] sm:$0xff]
        %v1038 = vld [vmem:[%s224 + $0x1780] sm:$0xff]
        %v1039 = vld [vmem:[%s224 + $0x1788] sm:$0xff]
        %v1040 = vld [vmem:[%s224 + $0x1790] sm:$0xff]
        %v1041 = vld [vmem:[%s224 + $0x1798] sm:$0xff]
        %v1042 = vld [vmem:[%s224 + $0x17a0] sm:$0xff]
        %v1043 = vld [vmem:[%s224 + $0x17a8] sm:$0xff]
        %v1044 = vld [vmem:[%s224 + $0x17b0] sm:$0xff]
        %v1045 = vld [vmem:[%s224 + $0x17b8] sm:$0xff]
        %v1046 = vld [vmem:[%s224 + $0x17c0] sm:$0xff]
        %v1047 = vld [vmem:[%s224 + $0x17c8] sm:$0xff]
        %v1048 = vld [vmem:[%s224 + $0x17d0] sm:$0xff]
        %v1049 = vld [vmem:[%s224 + $0x17d8] sm:$0xff]
        %v1050 = vld [vmem:[%s224 + $0x17e0] sm:$0xff]
        %v1051 = vld [vmem:[%s224 + $0x17e8] sm:$0xff]
        %v1052 = vld [vmem:[%s224 + $0x17f0] sm:$0xff]
        %v1053 = vld [vmem:[%s224 + $0x17f8] sm:$0xff]
        %v1054 = vld [vmem:[%s224 + $0x1800] sm:$0xff]
        %v1055 = vld [vmem:[%s224 + $0x1808] sm:$0xff]
        %v1056 = vld [vmem:[%s224 + $0x1810] sm:$0xff]
        %v1057 = vld [vmem:[%s224 + $0x1818] sm:$0xff]
        %v1058 = vld [vmem:[%s224 + $0x1820] sm:$0xff]
        %v1059 = vld [vmem:[%s224 + $0x1828] sm:$0xff]
        %v1060 = vld [vmem:[%s224 + $0x1830] sm:$0xff]
        %v1061 = vld [vmem:[%s224 + $0x1838] sm:$0xff]
        %v1062 = vld [vmem:[%s224 + $0x1840] sm:$0xff]
        %v1063 = vld [vmem:[%s224 + $0x1848] sm:$0xff]
        %v1064 = vld [vmem:[%s224 + $0x1850] sm:$0xff]
        %v1065 = vld [vmem:[%s224 + $0x1858] sm:$0xff]
        %v1066 = vld [vmem:[%s224 + $0x1860] sm:$0xff]
        %v1067 = vld [vmem:[%s224 + $0x1868] sm:$0xff]
        %v1068 = vld [vmem:[%s224 + $0x1870] sm:$0xff]
        %v1069 = vld [vmem:[%s224 + $0x1878] sm:$0xff]
        %v1070 = vld [vmem:[%s224 + $0x1880] sm:$0xff]
        %v1071 = vld [vmem:[%s224 + $0x1888] sm:$0xff]
        %v1072 = vld [vmem:[%s224 + $0x1890] sm:$0xff]
        %v1073 = vld [vmem:[%s224 + $0x1898] sm:$0xff]
        %v1074 = vld [vmem:[%s224 + $0x18a0] sm:$0xff]
        %v1075 = vld [vmem:[%s224 + $0x18a8] sm:$0xff]
        %v1076 = vld [vmem:[%s224 + $0x18b0] sm:$0xff]
        %v1077 = vld [vmem:[%s224 + $0x18b8] sm:$0xff]
        %v1078 = vld [vmem:[%s224 + $0x18c0] sm:$0xff]
        %v1079 = vld [vmem:[%s224 + $0x18c8] sm:$0xff]
        %v1080 = vld [vmem:[%s224 + $0x18d0] sm:$0xff]
        %v1081 = vld [vmem:[%s224 + $0x18d8] sm:$0xff]
        %v1082 = vld [vmem:[%s224 + $0x18e0] sm:$0xff]
        %v1083 = vld [vmem:[%s224 + $0x18e8] sm:$0xff]
        %v1084 = vld [vmem:[%s224 + $0x18f0] sm:$0xff]
        %v1085 = vld [vmem:[%s224 + $0x18f8] sm:$0xff]
        %v1086 = vld [vmem:[%s224 + $0x1900] sm:$0xff]
        %v1087 = vld [vmem:[%s224 + $0x1908] sm:$0xff]
        %v1088 = vld [vmem:[%s224 + $0x1910] sm:$0xff]
        %v1089 = vld [vmem:[%s224 + $0x1918] sm:$0xff]
        %v1090 = vld [vmem:[%s224 + $0x1920] sm:$0xff]
        %v1091 = vld [vmem:[%s224 + $0x1928] sm:$0xff]
        %v1092 = vld [vmem:[%s224 + $0x1930] sm:$0xff]
        %v1093 = vld [vmem:[%s224 + $0x1938] sm:$0xff]
        %v1094 = vld [vmem:[%s224 + $0x1940] sm:$0xff]
        %v1095 = vld [vmem:[%s224 + $0x1948] sm:$0xff]
        %v1096 = vld [vmem:[%s224 + $0x1950] sm:$0xff]
        %v1097 = vld [vmem:[%s224 + $0x1958] sm:$0xff]
        %v1098 = vld [vmem:[%s224 + $0x1960] sm:$0xff]
        %v1099 = vld [vmem:[%s224 + $0x1968] sm:$0xff]
        %v1100 = vld [vmem:[%s224 + $0x1970] sm:$0xff]
        %v1101 = vld [vmem:[%s224 + $0x1978] sm:$0xff]
        %v1102 = vld [vmem:[%s224 + $0x1980] sm:$0xff]
        %v1103 = vld [vmem:[%s224 + $0x1988] sm:$0xff]
        %v1104 = vld [vmem:[%s224 + $0x1990] sm:$0xff]
        %v1105 = vld [vmem:[%s224 + $0x1998] sm:$0xff]
        %v1106 = vld [vmem:[%s224 + $0x19a0] sm:$0xff]
        %v1107 = vld [vmem:[%s224 + $0x19a8] sm:$0xff]
        %v1108 = vld [vmem:[%s224 + $0x19b0] sm:$0xff]
        %v1109 = vld [vmem:[%s224 + $0x19b8] sm:$0xff]
        %v1110 = vld [vmem:[%s224 + $0x19c0] sm:$0xff]
        %v1111 = vld [vmem:[%s224 + $0x19c8] sm:$0xff]
        %v1112 = vld [vmem:[%s224 + $0x19d0] sm:$0xff]
        %v1113 = vld [vmem:[%s224 + $0x19d8] sm:$0xff]
        %v1114 = vld [vmem:[%s224 + $0x19e0] sm:$0xff]
        %v1115 = vld [vmem:[%s224 + $0x19e8] sm:$0xff]
        %v1116 = vld [vmem:[%s224 + $0x19f0] sm:$0xff]
        %v1117 = vld [vmem:[%s224 + $0x19f8] sm:$0xff]
        %v1118 = vld [vmem:[%s224 + $0x1a00] sm:$0xff]
        %v1119 = vld [vmem:[%s224 + $0x1a08] sm:$0xff]
        %v1120 = vld [vmem:[%s224 + $0x1a10] sm:$0xff]
        %v1121 = vld [vmem:[%s224 + $0x1a18] sm:$0xff]
        %v1122 = vld [vmem:[%s224 + $0x1a20] sm:$0xff]
        %v1123 = vld [vmem:[%s224 + $0x1a28] sm:$0xff]
        %v1124 = vld [vmem:[%s224 + $0x1a30] sm:$0xff]
        %v1125 = vld [vmem:[%s224 + $0x1a38] sm:$0xff]
        %v1126 = vld [vmem:[%s224 + $0x1a40] sm:$0xff]
        %v1127 = vld [vmem:[%s224 + $0x1a48] sm:$0xff]
        %v1128 = vld [vmem:[%s224 + $0x1a50] sm:$0xff]
        %v1129 = vld [vmem:[%s224 + $0x1a58] sm:$0xff]
        %v1130 = vld [vmem:[%s224 + $0x1a60] sm:$0xff]
        %v1131 = vld [vmem:[%s224 + $0x1a68] sm:$0xff]
        %v1132 = vld [vmem:[%s224 + $0x1a70] sm:$0xff]
        %v1133 = vld [vmem:[%s224 + $0x1a78] sm:$0xff]
        %v1134 = vld [vmem:[%s224 + $0x1a80] sm:$0xff]
        %v1135 = vld [vmem:[%s224 + $0x1a88] sm:$0xff]
        %v1136 = vld [vmem:[%s224 + $0x1a90] sm:$0xff]
        %v1137 = vld [vmem:[%s224 + $0x1a98] sm:$0xff]
        %v1138 = vld [vmem:[%s224 + $0x1aa0] sm:$0xff]
        %v1139 = vld [vmem:[%s224 + $0x1aa8] sm:$0xff]
        %v1140 = vld [vmem:[%s224 + $0x1ab0] sm:$0xff]
        %v1141 = vld [vmem:[%s224 + $0x1ab8] sm:$0xff]
        %v1142 = vld [vmem:[%s224 + $0x1ac0] sm:$0xff]
        %v1143 = vld [vmem:[%s224 + $0x1ac8] sm:$0xff]
        %v1144 = vld [vmem:[%s224 + $0x1ad0] sm:$0xff]
        %v1145 = vld [vmem:[%s224 + $0x1ad8] sm:$0xff]
        %v1146 = vld [vmem:[%s224 + $0x1ae0] sm:$0xff]
        %v1147 = vld [vmem:[%s224 + $0x1ae8] sm:$0xff]
        %v1148 = vld [vmem:[%s224 + $0x1af0] sm:$0xff]
        %v1149 = vld [vmem:[%s224 + $0x1af8] sm:$0xff]
        %v1150 = vld [vmem:[%s224 + $0x1b00] sm:$0xff]
        %v1151 = vld [vmem:[%s224 + $0x1b08] sm:$0xff]
        %v1152 = vld [vmem:[%s224 + $0x1b10] sm:$0xff]
        %v1153 = vld [vmem:[%s224 + $0x1b18] sm:$0xff]
        %v1154 = vld [vmem:[%s224 + $0x1b20] sm:$0xff]
        %v1155 = vld [vmem:[%s224 + $0x1b28] sm:$0xff]
        %v1156 = vld [vmem:[%s224 + $0x1b30] sm:$0xff]
        %v1157 = vld [vmem:[%s224 + $0x1b38] sm:$0xff]
        %v1158 = vld [vmem:[%s224 + $0x1b40] sm:$0xff]
        %v1159 = vld [vmem:[%s224 + $0x1b48] sm:$0xff]
        %v1160 = vld [vmem:[%s224 + $0x1b50] sm:$0xff]
        %v1161 = vld [vmem:[%s224 + $0x1b58] sm:$0xff]
        %v1162 = vld [vmem:[%s224 + $0x1b60] sm:$0xff]
        %v1163 = vld [vmem:[%s224 + $0x1b68] sm:$0xff]
        %v1164 = vld [vmem:[%s224 + $0x1b70] sm:$0xff]
        %v1165 = vld [vmem:[%s224 + $0x1b78] sm:$0xff]
        %v1166 = vld [vmem:[%s224 + $0x1b80] sm:$0xff]
        %v1167 = vld [vmem:[%s224 + $0x1b88] sm:$0xff]
        %v1168 = vld [vmem:[%s224 + $0x1b90] sm:$0xff]
        %v1169 = vld [vmem:[%s224 + $0x1b98] sm:$0xff]
        %v1170 = vld [vmem:[%s224 + $0x1ba0] sm:$0xff]
        %v1171 = vld [vmem:[%s224 + $0x1ba8] sm:$0xff]
        %v1172 = vld [vmem:[%s224 + $0x1bb0] sm:$0xff]
        %v1173 = vld [vmem:[%s224 + $0x1bb8] sm:$0xff]
        %v1174 = vld [vmem:[%s224 + $0x1bc0] sm:$0xff]
        %v1175 = vld [vmem:[%s224 + $0x1bc8] sm:$0xff]
        %v1176 = vld [vmem:[%s224 + $0x1bd0] sm:$0xff]
        %v1177 = vld [vmem:[%s224 + $0x1bd8] sm:$0xff]
        %v1178 = vld [vmem:[%s224 + $0x1be0] sm:$0xff]
        %v1179 = vld [vmem:[%s224 + $0x1be8] sm:$0xff]
        %v1180 = vld [vmem:[%s224 + $0x1bf0] sm:$0xff]
        %v1181 = vld [vmem:[%s224 + $0x1bf8] sm:$0xff]
        %v1182 = vld [vmem:[%s224 + $0x1c00] sm:$0xff]
        %v1183 = vld [vmem:[%s224 + $0x1c08] sm:$0xff]
        %v1184 = vld [vmem:[%s224 + $0x1c10] sm:$0xff]
        %v1185 = vld [vmem:[%s224 + $0x1c18] sm:$0xff]
        %v1186 = vld [vmem:[%s224 + $0x1c20] sm:$0xff]
        %v1187 = vld [vmem:[%s224 + $0x1c28] sm:$0xff]
        %v1188 = vld [vmem:[%s224 + $0x1c30] sm:$0xff]
        %v1189 = vld [vmem:[%s224 + $0x1c38] sm:$0xff]
        %v1190 = vld [vmem:[%s224 + $0x1c40] sm:$0xff]
        %v1191 = vld [vmem:[%s224 + $0x1c48] sm:$0xff]
        %v1192 = vld [vmem:[%s224 + $0x1c50] sm:$0xff]
        %v1193 = vld [vmem:[%s224 + $0x1c58] sm:$0xff]
        %v1194 = vld [vmem:[%s224 + $0x1c60] sm:$0xff]
        %v1195 = vld [vmem:[%s224 + $0x1c68] sm:$0xff]
        %v1196 = vld [vmem:[%s224 + $0x1c70] sm:$0xff]
        %v1197 = vld [vmem:[%s224 + $0x1c78] sm:$0xff]
        %v1198 = vld [vmem:[%s224 + $0x1c80] sm:$0xff]
        %v1199 = vld [vmem:[%s224 + $0x1c88] sm:$0xff]
        %v1200 = vld [vmem:[%s224 + $0x1c90] sm:$0xff]
        %v1201 = vld [vmem:[%s224 + $0x1c98] sm:$0xff]
        %v1202 = vld [vmem:[%s224 + $0x1ca0] sm:$0xff]
        %v1203 = vld [vmem:[%s224 + $0x1ca8] sm:$0xff]
        %v1204 = vld [vmem:[%s224 + $0x1cb0] sm:$0xff]
        %v1205 = vld [vmem:[%s224 + $0x1cb8] sm:$0xff]
        %v1206 = vld [vmem:[%s224 + $0x1cc0] sm:$0xff]
        %v1207 = vld [vmem:[%s224 + $0x1cc8] sm:$0xff]
        %v1208 = vld [vmem:[%s224 + $0x1cd0] sm:$0xff]
        %v1209 = vld [vmem:[%s224 + $0x1cd8] sm:$0xff]
        %v1210 = vld [vmem:[%s224 + $0x1ce0] sm:$0xff]
        %v1211 = vld [vmem:[%s224 + $0x1ce8] sm:$0xff]
        %v1212 = vld [vmem:[%s224 + $0x1cf0] sm:$0xff]
        %v1213 = vld [vmem:[%s224 + $0x1cf8] sm:$0xff]
        %v1214 = vld [vmem:[%s224 + $0x1d00] sm:$0xff]
        %v1215 = vld [vmem:[%s224 + $0x1d08] sm:$0xff]
        %v1216 = vld [vmem:[%s224 + $0x1d10] sm:$0xff]
        %v1217 = vld [vmem:[%s224 + $0x1d18] sm:$0xff]
        %v1218 = vld [vmem:[%s224 + $0x1d20] sm:$0xff]
        %v1219 = vld [vmem:[%s224 + $0x1d28] sm:$0xff]
        %v1220 = vld [vmem:[%s224 + $0x1d30] sm:$0xff]
        %v1221 = vld [vmem:[%s224 + $0x1d38] sm:$0xff]
        %v1222 = vld [vmem:[%s224 + $0x1d40] sm:$0xff]
        %v1223 = vld [vmem:[%s224 + $0x1d48] sm:$0xff]
        %v1224 = vld [vmem:[%s224 + $0x1d50] sm:$0xff]
        %v1225 = vld [vmem:[%s224 + $0x1d58] sm:$0xff]
        %v1226 = vld [vmem:[%s224 + $0x1d60] sm:$0xff]
        %v1227 = vld [vmem:[%s224 + $0x1d68] sm:$0xff]
        %v1228 = vld [vmem:[%s224 + $0x1d70] sm:$0xff]
        %v1229 = vld [vmem:[%s224 + $0x1d78] sm:$0xff]
        %v1230 = vld [vmem:[%s224 + $0x1d80] sm:$0xff]
        %v1231 = vld [vmem:[%s224 + $0x1d88] sm:$0xff]
        %v1232 = vld [vmem:[%s224 + $0x1d90] sm:$0xff]
        %v1233 = vld [vmem:[%s224 + $0x1d98] sm:$0xff]
        %v1234 = vld [vmem:[%s224 + $0x1da0] sm:$0xff]
        %v1235 = vld [vmem:[%s224 + $0x1da8] sm:$0xff]
        %v1236 = vld [vmem:[%s224 + $0x1db0] sm:$0xff]
        %v1237 = vld [vmem:[%s224 + $0x1db8] sm:$0xff]
        %v1238 = vld [vmem:[%s224 + $0x1dc0] sm:$0xff]
        %v1239 = vld [vmem:[%s224 + $0x1dc8] sm:$0xff]
        %v1240 = vld [vmem:[%s224 + $0x1dd0] sm:$0xff]
        %v1241 = vld [vmem:[%s224 + $0x1dd8] sm:$0xff]
        %v1242 = vld [vmem:[%s224 + $0x1de0] sm:$0xff]
        %v1243 = vld [vmem:[%s224 + $0x1de8] sm:$0xff]
        %v1244 = vld [vmem:[%s224 + $0x1df0] sm:$0xff]
        %v1245 = vld [vmem:[%s224 + $0x1df8] sm:$0xff]
        %v1246 = vld [vmem:[%s224 + $0x1e00] sm:$0xff]
        %v1247 = vld [vmem:[%s224 + $0x1e08] sm:$0xff]
        %v1248 = vld [vmem:[%s224 + $0x1e10] sm:$0xff]
        %v1249 = vld [vmem:[%s224 + $0x1e18] sm:$0xff]
        %v1250 = vld [vmem:[%s224 + $0x1e20] sm:$0xff]
        %v1251 = vld [vmem:[%s224 + $0x1e28] sm:$0xff]
        %v1252 = vld [vmem:[%s224 + $0x1e30] sm:$0xff]
        %v1253 = vld [vmem:[%s224 + $0x1e38] sm:$0xff]
        %v1254 = vld [vmem:[%s224 + $0x1e40] sm:$0xff]
        %v1255 = vld [vmem:[%s224 + $0x1e48] sm:$0xff]
        %v1256 = vld [vmem:[%s224 + $0x1e50] sm:$0xff]
        %v1257 = vld [vmem:[%s224 + $0x1e58] sm:$0xff]
        %v1258 = vld [vmem:[%s224 + $0x1e60] sm:$0xff]
        %v1259 = vld [vmem:[%s224 + $0x1e68] sm:$0xff]
        %v1260 = vld [vmem:[%s224 + $0x1e70] sm:$0xff]
        %v1261 = vld [vmem:[%s224 + $0x1e78] sm:$0xff]
        %v1262 = vld [vmem:[%s224 + $0x1e80] sm:$0xff]
        %v1263 = vld [vmem:[%s224 + $0x1e88] sm:$0xff]
        %v1264 = vld [vmem:[%s224 + $0x1e90] sm:$0xff]
        %v1265 = vld [vmem:[%s224 + $0x1e98] sm:$0xff]
        %v1266 = vld [vmem:[%s224 + $0x1ea0] sm:$0xff]
        %v1267 = vld [vmem:[%s224 + $0x1ea8] sm:$0xff]
        %v1268 = vld [vmem:[%s224 + $0x1eb0] sm:$0xff]
        %v1269 = vld [vmem:[%s224 + $0x1eb8] sm:$0xff]
        %v1270 = vld [vmem:[%s224 + $0x1ec0] sm:$0xff]
        %v1271 = vld [vmem:[%s224 + $0x1ec8] sm:$0xff]
        %v1272 = vld [vmem:[%s224 + $0x1ed0] sm:$0xff]
        %v1273 = vld [vmem:[%s224 + $0x1ed8] sm:$0xff]
        %v1274 = vld [vmem:[%s224 + $0x1ee0] sm:$0xff]
        %v1275 = vld [vmem:[%s224 + $0x1ee8] sm:$0xff]
        %v1276 = vld [vmem:[%s224 + $0x1ef0] sm:$0xff]
        %v1277 = vld [vmem:[%s224 + $0x1ef8] sm:$0xff]
        %v1278 = vld [vmem:[%s224 + $0x1f00] sm:$0xff]
        %v1279 = vld [vmem:[%s224 + $0x1f08] sm:$0xff]
        %v1280 = vld [vmem:[%s224 + $0x1f10] sm:$0xff]
        %v1281 = vld [vmem:[%s224 + $0x1f18] sm:$0xff]
        %v1282 = vld [vmem:[%s224 + $0x1f20] sm:$0xff]
        %v1283 = vld [vmem:[%s224 + $0x1f28] sm:$0xff]
        %v1284 = vld [vmem:[%s224 + $0x1f30] sm:$0xff]
        %v1285 = vld [vmem:[%s224 + $0x1f38] sm:$0xff]
        %v1286 = vld [vmem:[%s224 + $0x1f40] sm:$0xff]
        %v1287 = vld [vmem:[%s224 + $0x1f48] sm:$0xff]
        %v1288 = vld [vmem:[%s224 + $0x1f50] sm:$0xff]
        %v1289 = vld [vmem:[%s224 + $0x1f58] sm:$0xff]
        %v1290 = vld [vmem:[%s224 + $0x1f60] sm:$0xff]
        %v1291 = vld [vmem:[%s224 + $0x1f68] sm:$0xff]
        %v1292 = vld [vmem:[%s224 + $0x1f70] sm:$0xff]
        %v1293 = vld [vmem:[%s224 + $0x1f78] sm:$0xff]
        %v1294 = vld [vmem:[%s224 + $0x1f80] sm:$0xff]
        %v1295 = vld [vmem:[%s224 + $0x1f88] sm:$0xff]
        %v1296 = vld [vmem:[%s224 + $0x1f90] sm:$0xff]
        %v1297 = vld [vmem:[%s224 + $0x1f98] sm:$0xff]
        %v1298 = vld [vmem:[%s224 + $0x1fa0] sm:$0xff]
        %v1299 = vld [vmem:[%s224 + $0x1fa8] sm:$0xff]
        %v1300 = vld [vmem:[%s224 + $0x1fb0] sm:$0xff]
        %v1301 = vld [vmem:[%s224 + $0x1fb8] sm:$0xff]
        %v1302 = vld [vmem:[%s224 + $0x1fc0] sm:$0xff]
        %v1303 = vld [vmem:[%s224 + $0x1fc8] sm:$0xff]
        %v1304 = vld [vmem:[%s224 + $0x1fd0] sm:$0xff]
        %v1305 = vld [vmem:[%s224 + $0x1fd8] sm:$0xff]
        %v1306 = vld [vmem:[%s224 + $0x1fe0] sm:$0xff]
        %v1307 = vld [vmem:[%s224 + $0x1fe8] sm:$0xff]
        %v1308 = vld [vmem:[%s224 + $0x1ff0] sm:$0xff]
        %v1309 = vld [vmem:[%s224 + $0x1ff8] sm:$0xff]
        %v1310 = vld [vmem:[%s224 + $0x2000] sm:$0xff]
        %v1311 = vld [vmem:[%s224 + $0x2008] sm:$0xff]
        %v1312 = vld [vmem:[%s224 + $0x2010] sm:$0xff]
        %v1313 = vld [vmem:[%s224 + $0x2018] sm:$0xff]
        %v1314 = vld [vmem:[%s224 + $0x2020] sm:$0xff]
        %v1315 = vld [vmem:[%s224 + $0x2028] sm:$0xff]
        %v1316 = vld [vmem:[%s224 + $0x2030] sm:$0xff]
        %v1317 = vld [vmem:[%s224 + $0x2038] sm:$0xff]
        %v1318 = vld [vmem:[%s224 + $0x2040] sm:$0xff]
        %v1319 = vld [vmem:[%s224 + $0x2048] sm:$0xff]
        %v1320 = vld [vmem:[%s224 + $0x2050] sm:$0xff]
        %v1321 = vld [vmem:[%s224 + $0x2058] sm:$0xff]
        %v1322 = vld [vmem:[%s224 + $0x2060] sm:$0xff]
        %v1323 = vld [vmem:[%s224 + $0x2068] sm:$0xff]
        %v1324 = vld [vmem:[%s224 + $0x2070] sm:$0xff]
        %v1325 = vld [vmem:[%s224 + $0x2078] sm:$0xff]
        %v1326 = vld [vmem:[%s224 + $0x2080] sm:$0xff]
        %v1327 = vld [vmem:[%s224 + $0x2088] sm:$0xff]
        %v1328 = vld [vmem:[%s224 + $0x2090] sm:$0xff]
        %v1329 = vld [vmem:[%s224 + $0x2098] sm:$0xff]
        %v1330 = vld [vmem:[%s224 + $0x20a0] sm:$0xff]
        %v1331 = vld [vmem:[%s224 + $0x20a8] sm:$0xff]
        %v1332 = vld [vmem:[%s224 + $0x20b0] sm:$0xff]
        %v1333 = vld [vmem:[%s224 + $0x20b8] sm:$0xff]
        %v1334 = vld [vmem:[%s224 + $0x20c0] sm:$0xff]
        %v1335 = vld [vmem:[%s224 + $0x20c8] sm:$0xff]
        %v1336 = vld [vmem:[%s224 + $0x20d0] sm:$0xff]
        %v1337 = vld [vmem:[%s224 + $0x20d8] sm:$0xff]
        %v1338 = vld [vmem:[%s224 + $0x20e0] sm:$0xff]
        %v1339 = vld [vmem:[%s224 + $0x20e8] sm:$0xff]
        %v1340 = vld [vmem:[%s224 + $0x20f0] sm:$0xff]
        %v1341 = vld [vmem:[%s224 + $0x20f8] sm:$0xff]
        %v1342 = vld [vmem:[%s224 + $0x2100] sm:$0xff]
        %v1343 = vld [vmem:[%s224 + $0x2108] sm:$0xff]
        %v1344 = vld [vmem:[%s224 + $0x2110] sm:$0xff]
        %v1345 = vld [vmem:[%s224 + $0x2118] sm:$0xff]
        %v1346 = vld [vmem:[%s224 + $0x2120] sm:$0xff]
        %v1347 = vld [vmem:[%s224 + $0x2128] sm:$0xff]
        %v1348 = vld [vmem:[%s224 + $0x2130] sm:$0xff]
        %v1349 = vld [vmem:[%s224 + $0x2138] sm:$0xff]
        %v1350 = vld [vmem:[%s224 + $0x2140] sm:$0xff]
        %v1351 = vld [vmem:[%s224 + $0x2148] sm:$0xff]
        %v1352 = vld [vmem:[%s224 + $0x2150] sm:$0xff]
        %v1353 = vld [vmem:[%s224 + $0x2158] sm:$0xff]
        %v1354 = vld [vmem:[%s224 + $0x2160] sm:$0xff]
        %v1355 = vld [vmem:[%s224 + $0x2168] sm:$0xff]
        %v1356 = vld [vmem:[%s224 + $0x2170] sm:$0xff]
        %v1357 = vld [vmem:[%s224 + $0x2178] sm:$0xff]
        %v1358 = vld [vmem:[%s224 + $0x2180] sm:$0xff]
        %v1359 = vld [vmem:[%s224 + $0x2188] sm:$0xff]
        %v1360 = vld [vmem:[%s224 + $0x2190] sm:$0xff]
        %v1361 = vld [vmem:[%s224 + $0x2198] sm:$0xff]
        %v1362 = vld [vmem:[%s224 + $0x21a0] sm:$0xff]
        %v1363 = vld [vmem:[%s224 + $0x21a8] sm:$0xff]
        %v1364 = vld [vmem:[%s224 + $0x21b0] sm:$0xff]
        %v1365 = vld [vmem:[%s224 + $0x21b8] sm:$0xff]
        %v1366 = vld [vmem:[%s224 + $0x21c0] sm:$0xff]
        %v1367 = vld [vmem:[%s224 + $0x21c8] sm:$0xff]
        %v1368 = vld [vmem:[%s224 + $0x21d0] sm:$0xff]
        %v1369 = vld [vmem:[%s224 + $0x21d8] sm:$0xff]
        %v1370 = vld [vmem:[%s224 + $0x21e0] sm:$0xff]
        %v1371 = vld [vmem:[%s224 + $0x21e8] sm:$0xff]
        %v1372 = vld [vmem:[%s224 + $0x21f0] sm:$0xff]
        %v1373 = vld [vmem:[%s224 + $0x21f8] sm:$0xff]
        %v1374 = vld [vmem:[%s224 + $0x2200] sm:$0xff]
        %v1375 = vld [vmem:[%s224 + $0x2208] sm:$0xff]
        %v1376 = vld [vmem:[%s224 + $0x2210] sm:$0xff]
        %v1377 = vld [vmem:[%s224 + $0x2218] sm:$0xff]
        %v1378 = vld [vmem:[%s224 + $0x2220] sm:$0xff]
        %v1379 = vld [vmem:[%s224 + $0x2228] sm:$0xff]
        %v1380 = vld [vmem:[%s224 + $0x2230] sm:$0xff]
        %v1381 = vld [vmem:[%s224 + $0x2238] sm:$0xff]
        %v1382 = vld [vmem:[%s224 + $0x2240] sm:$0xff]
        %v1383 = vld [vmem:[%s224 + $0x2248] sm:$0xff]
        %v1384 = vld [vmem:[%s224 + $0x2250] sm:$0xff]
        %v1385 = vld [vmem:[%s224 + $0x2258] sm:$0xff]
        %v1386 = vld [vmem:[%s224 + $0x2260] sm:$0xff]
        %v1387 = vld [vmem:[%s224 + $0x2268] sm:$0xff]
        %v1388 = vld [vmem:[%s224 + $0x2270] sm:$0xff]
        %v1389 = vld [vmem:[%s224 + $0x2278] sm:$0xff]
        %v1390 = vld [vmem:[%s224 + $0x2280] sm:$0xff]
        %v1391 = vld [vmem:[%s224 + $0x2288] sm:$0xff]
        %v1392 = vld [vmem:[%s224 + $0x2290] sm:$0xff]
        %v1393 = vld [vmem:[%s224 + $0x2298] sm:$0xff]
        %v1394 = vld [vmem:[%s224 + $0x22a0] sm:$0xff]
        %v1395 = vld [vmem:[%s224 + $0x22a8] sm:$0xff]
        %v1396 = vld [vmem:[%s224 + $0x22b0] sm:$0xff]
        %v1397 = vld [vmem:[%s224 + $0x22b8] sm:$0xff]
        %v1398 = vld [vmem:[%s224 + $0x22c0] sm:$0xff]
        %v1399 = vld [vmem:[%s224 + $0x22c8] sm:$0xff]
        %v1400 = vld [vmem:[%s224 + $0x22d0] sm:$0xff]
        %v1401 = vld [vmem:[%s224 + $0x22d8] sm:$0xff]
        %v1402 = vld [vmem:[%s224 + $0x22e0] sm:$0xff]
        %v1403 = vld [vmem:[%s224 + $0x22e8] sm:$0xff]
        %v1404 = vld [vmem:[%s224 + $0x22f0] sm:$0xff]
        %v1405 = vld [vmem:[%s224 + $0x22f8] sm:$0xff]
        %v1406 = vld [vmem:[%s224 + $0x2300] sm:$0xff]
        %v1407 = vld [vmem:[%s224 + $0x2308] sm:$0xff]
        %v1408 = vld [vmem:[%s224 + $0x2310] sm:$0xff]
        %v1409 = vld [vmem:[%s224 + $0x2318] sm:$0xff]
        %v1410 = vld [vmem:[%s224 + $0x2320] sm:$0xff]
        %v1411 = vld [vmem:[%s224 + $0x2328] sm:$0xff]
        %v1412 = vld [vmem:[%s224 + $0x2330] sm:$0xff]
        %v1413 = vld [vmem:[%s224 + $0x2338] sm:$0xff]
        %v1414 = vld [vmem:[%s224 + $0x2340] sm:$0xff]
        %v1415 = vld [vmem:[%s224 + $0x2348] sm:$0xff]
        %v1416 = vld [vmem:[%s224 + $0x2350] sm:$0xff]
        %v1417 = vld [vmem:[%s224 + $0x2358] sm:$0xff]
        %v1418 = vld [vmem:[%s224 + $0x2360] sm:$0xff]
        %v1419 = vld [vmem:[%s224 + $0x2368] sm:$0xff]
        %v1420 = vld [vmem:[%s224 + $0x2370] sm:$0xff]
        %v1421 = vld [vmem:[%s224 + $0x2378] sm:$0xff]
        %v1422 = vld [vmem:[%s224 + $0x2380] sm:$0xff]
        %v1423 = vld [vmem:[%s224 + $0x2388] sm:$0xff]
        %v1424 = vld [vmem:[%s224 + $0x2390] sm:$0xff]
        %v1425 = vld [vmem:[%s224 + $0x2398] sm:$0xff]
        %v1426 = vld [vmem:[%s224 + $0x23a0] sm:$0xff]
        %v1427 = vld [vmem:[%s224 + $0x23a8] sm:$0xff]
        %v1428 = vld [vmem:[%s224 + $0x23b0] sm:$0xff]
        %v1429 = vld [vmem:[%s224 + $0x23b8] sm:$0xff]
        %v1430 = vld [vmem:[%s224 + $0x23c0] sm:$0xff]
        %v1431 = vld [vmem:[%s224 + $0x23c8] sm:$0xff]
        %v1432 = vld [vmem:[%s224 + $0x23d0] sm:$0xff]
        %v1433 = vld [vmem:[%s224 + $0x23d8] sm:$0xff]
        %v1434 = vld [vmem:[%s224 + $0x23e0] sm:$0xff]
        %v1435 = vld [vmem:[%s224 + $0x23e8] sm:$0xff]
        %v1436 = vld [vmem:[%s224 + $0x23f0] sm:$0xff]
        %v1437 = vld [vmem:[%s224 + $0x23f8] sm:$0xff]
        %v1438 = vld [vmem:[%s224 + $0x2400] sm:$0xff]
        %v1439 = vld [vmem:[%s224 + $0x2408] sm:$0xff]
        %v1440 = vld [vmem:[%s224 + $0x2410] sm:$0xff]
        %v1441 = vld [vmem:[%s224 + $0x2418] sm:$0xff]
        %v1442 = vld [vmem:[%s224 + $0x2420] sm:$0xff]
        %v1443 = vld [vmem:[%s224 + $0x2428] sm:$0xff]
        %v1444 = vld [vmem:[%s224 + $0x2430] sm:$0xff]
        %v1445 = vld [vmem:[%s224 + $0x2438] sm:$0xff]
        %v1446 = vld [vmem:[%s224 + $0x2440] sm:$0xff]
        %v1447 = vld [vmem:[%s224 + $0x2448] sm:$0xff]
        %v1448 = vld [vmem:[%s224 + $0x2450] sm:$0xff]
        %v1449 = vld [vmem:[%s224 + $0x2458] sm:$0xff]
        %v1450 = vld [vmem:[%s224 + $0x2460] sm:$0xff]
        %v1451 = vld [vmem:[%s224 + $0x2468] sm:$0xff]
        %v1452 = vld [vmem:[%s224 + $0x2470] sm:$0xff]
        %v1453 = vld [vmem:[%s224 + $0x2478] sm:$0xff]
        %v1454 = vld [vmem:[%s224 + $0x2480] sm:$0xff]
        %v1455 = vld [vmem:[%s224 + $0x2488] sm:$0xff]
        %v1456 = vld [vmem:[%s224 + $0x2490] sm:$0xff]
        %v1457 = vld [vmem:[%s224 + $0x2498] sm:$0xff]
        %v1458 = vld [vmem:[%s224 + $0x24a0] sm:$0xff]
        %v1459 = vld [vmem:[%s224 + $0x24a8] sm:$0xff]
        %v1460 = vld [vmem:[%s224 + $0x24b0] sm:$0xff]
        %v1461 = vld [vmem:[%s224 + $0x24b8] sm:$0xff]
        %v1462 = vld [vmem:[%s224 + $0x24c0] sm:$0xff]
        %v1463 = vld [vmem:[%s224 + $0x24c8] sm:$0xff]
        %v1464 = vld [vmem:[%s224 + $0x24d0] sm:$0xff]
        %v1465 = vld [vmem:[%s224 + $0x24d8] sm:$0xff]
        %v1466 = vld [vmem:[%s224 + $0x24e0] sm:$0xff]
        %v1467 = vld [vmem:[%s224 + $0x24e8] sm:$0xff]
        %v1468 = vld [vmem:[%s224 + $0x24f0] sm:$0xff]
        %v1469 = vld [vmem:[%s224 + $0x24f8] sm:$0xff]
        %v1470 = vld [vmem:[%s224 + $0x2500] sm:$0xff]
        %v1471 = vld [vmem:[%s224 + $0x2508] sm:$0xff]
        %v1472 = vld [vmem:[%s224 + $0x2510] sm:$0xff]
        %v1473 = vld [vmem:[%s224 + $0x2518] sm:$0xff]
        %v1474 = vld [vmem:[%s224 + $0x2520] sm:$0xff]
        %v1475 = vld [vmem:[%s224 + $0x2528] sm:$0xff]
        %v1476 = vld [vmem:[%s224 + $0x2530] sm:$0xff]
        %v1477 = vld [vmem:[%s224 + $0x2538] sm:$0xff]
        %v1478 = vld [vmem:[%s224 + $0x2540] sm:$0xff]
        %v1479 = vld [vmem:[%s224 + $0x2548] sm:$0xff]
        %v1480 = vld [vmem:[%s224 + $0x2550] sm:$0xff]
        %v1481 = vld [vmem:[%s224 + $0x2558] sm:$0xff]
        %v1482 = vld [vmem:[%s224 + $0x2560] sm:$0xff]
        %v1483 = vld [vmem:[%s224 + $0x2568] sm:$0xff]
        %v1484 = vld [vmem:[%s224 + $0x2570] sm:$0xff]
        %v1485 = vld [vmem:[%s224 + $0x2578] sm:$0xff]
        %v1486 = vld [vmem:[%s224 + $0x2580] sm:$0xff]
        %v1487 = vld [vmem:[%s224 + $0x2588] sm:$0xff]
        %v1488 = vld [vmem:[%s224 + $0x2590] sm:$0xff]
        %v1489 = vld [vmem:[%s224 + $0x2598] sm:$0xff]
        %v1490 = vld [vmem:[%s224 + $0x25a0] sm:$0xff]
        %v1491 = vld [vmem:[%s224 + $0x25a8] sm:$0xff]
        %v1492 = vld [vmem:[%s224 + $0x25b0] sm:$0xff]
        %v1493 = vld [vmem:[%s224 + $0x25b8] sm:$0xff]
        %v1494 = vld [vmem:[%s224 + $0x25c0] sm:$0xff]
        %v1495 = vld [vmem:[%s224 + $0x25c8] sm:$0xff]
        %v1496 = vld [vmem:[%s224 + $0x25d0] sm:$0xff]
        %v1497 = vld [vmem:[%s224 + $0x25d8] sm:$0xff]
        %v1498 = vld [vmem:[%s224 + $0x25e0] sm:$0xff]
        %v1499 = vld [vmem:[%s224 + $0x25e8] sm:$0xff]
        %v1500 = vld [vmem:[%s224 + $0x25f0] sm:$0xff]
        %v1501 = vld [vmem:[%s224 + $0x25f8] sm:$0xff]
        %v1502 = vld [vmem:[%s224 + $0x2600] sm:$0xff]
        %v1503 = vld [vmem:[%s224 + $0x2608] sm:$0xff]
        %v1504 = vld [vmem:[%s224 + $0x2610] sm:$0xff]
        %v1505 = vld [vmem:[%s224 + $0x2618] sm:$0xff]
        %v1506 = vld [vmem:[%s224 + $0x2620] sm:$0xff]
        %v1507 = vld [vmem:[%s224 + $0x2628] sm:$0xff]
        %v1508 = vld [vmem:[%s224 + $0x2630] sm:$0xff]
        %v1509 = vld [vmem:[%s224 + $0x2638] sm:$0xff]
        %v1510 = vld [vmem:[%s224 + $0x2640] sm:$0xff]
        %v1511 = vld [vmem:[%s224 + $0x2648] sm:$0xff]
        %v1512 = vld [vmem:[%s224 + $0x2650] sm:$0xff]
        %v1513 = vld [vmem:[%s224 + $0x2658] sm:$0xff]
        %v1514 = vld [vmem:[%s224 + $0x2660] sm:$0xff]
        %v1515 = vld [vmem:[%s224 + $0x2668] sm:$0xff]
        %v1516 = vld [vmem:[%s224 + $0x2670] sm:$0xff]
        %v1517 = vld [vmem:[%s224 + $0x2678] sm:$0xff]
        %v1518 = vld [vmem:[%s224 + $0x2680] sm:$0xff]
        %v1519 = vld [vmem:[%s224 + $0x2688] sm:$0xff]
        %v1520 = vld [vmem:[%s224 + $0x2690] sm:$0xff]
        %v1521 = vld [vmem:[%s224 + $0x2698] sm:$0xff]
        %v1522 = vld [vmem:[%s224 + $0x26a0] sm:$0xff]
        %v1523 = vld [vmem:[%s224 + $0x26a8] sm:$0xff]
        %v1524 = vld [vmem:[%s224 + $0x26b0] sm:$0xff]
        %v1525 = vld [vmem:[%s224 + $0x26b8] sm:$0xff]
        %v1526 = vld [vmem:[%s224 + $0x26c0] sm:$0xff]
        %v1527 = vld [vmem:[%s224 + $0x26c8] sm:$0xff]
        %v1528 = vld [vmem:[%s224 + $0x26d0] sm:$0xff]
        %v1529 = vld [vmem:[%s224 + $0x26d8] sm:$0xff]
        %v1530 = vld [vmem:[%s224 + $0x26e0] sm:$0xff]
        %v1531 = vld [vmem:[%s224 + $0x26e8] sm:$0xff]
        %v1532 = vld [vmem:[%s224 + $0x26f0] sm:$0xff]
        %v1533 = vld [vmem:[%s224 + $0x26f8] sm:$0xff]
        %v1534 = vld [vmem:[%s224 + $0x2700] sm:$0xff]
        %v1535 = vld [vmem:[%s224 + $0x2708] sm:$0xff]
        %v1536 = vld [vmem:[%s224 + $0x2710] sm:$0xff]
        %v1537 = vld [vmem:[%s224 + $0x2718] sm:$0xff]
        %v1538 = vld [vmem:[%s224 + $0x2720] sm:$0xff]
        %v1539 = vld [vmem:[%s224 + $0x2728] sm:$0xff]
        %v1540 = vld [vmem:[%s224 + $0x2730] sm:$0xff]
        %v1541 = vld [vmem:[%s224 + $0x2738] sm:$0xff]
        %v1542 = vld [vmem:[%s224 + $0x2740] sm:$0xff]
        %v1543 = vld [vmem:[%s224 + $0x2748] sm:$0xff]
        %v1544 = vld [vmem:[%s224 + $0x2750] sm:$0xff]
        %v1545 = vld [vmem:[%s224 + $0x2758] sm:$0xff]
        %v1546 = vld [vmem:[%s224 + $0x2760] sm:$0xff]
        %v1547 = vld [vmem:[%s224 + $0x2768] sm:$0xff]
        %v1548 = vld [vmem:[%s224 + $0x2770] sm:$0xff]
        %v1549 = vld [vmem:[%s224 + $0x2778] sm:$0xff]
        %v1550 = vld [vmem:[%s224 + $0x2780] sm:$0xff]
        %v1551 = vld [vmem:[%s224 + $0x2788] sm:$0xff]
        %v1552 = vld [vmem:[%s224 + $0x2790] sm:$0xff]
        %v1553 = vld [vmem:[%s224 + $0x2798] sm:$0xff]
        %v1554 = vld [vmem:[%s224 + $0x27a0] sm:$0xff]
        %v1555 = vld [vmem:[%s224 + $0x27a8] sm:$0xff]
        %v1556 = vld [vmem:[%s224 + $0x27b0] sm:$0xff]
        %v1557 = vld [vmem:[%s224 + $0x27b8] sm:$0xff]
        %v1558 = vld [vmem:[%s224 + $0x27c0] sm:$0xff]
        %v1559 = vld [vmem:[%s224 + $0x27c8] sm:$0xff]
        %v1560 = vld [vmem:[%s224 + $0x27d0] sm:$0xff]
        %v1561 = vld [vmem:[%s224 + $0x27d8] sm:$0xff]
        %v1562 = vld [vmem:[%s224 + $0x27e0] sm:$0xff]
        %v1563 = vld [vmem:[%s224 + $0x27e8] sm:$0xff]
        %v1564 = vld [vmem:[%s224 + $0x27f0] sm:$0xff]
        %v1565 = vld [vmem:[%s224 + $0x27f8] sm:$0xff]
        %v1566 = vld [vmem:[%s224 + $0x2800] sm:$0xff]
        %v1567 = vld [vmem:[%s224 + $0x2808] sm:$0xff]
        %v1568 = vld [vmem:[%s224 + $0x2810] sm:$0xff]
        %v1569 = vld [vmem:[%s224 + $0x2818] sm:$0xff]
        %v1570 = vld [vmem:[%s224 + $0x2820] sm:$0xff]
        %v1571 = vld [vmem:[%s224 + $0x2828] sm:$0xff]
        %v1572 = vld [vmem:[%s224 + $0x2830] sm:$0xff]
        %v1573 = vld [vmem:[%s224 + $0x2838] sm:$0xff]
        %v1574 = vld [vmem:[%s224 + $0x2840] sm:$0xff]
        %v1575 = vld [vmem:[%s224 + $0x2848] sm:$0xff]
        %v1576 = vld [vmem:[%s224 + $0x2850] sm:$0xff]
        %v1577 = vld [vmem:[%s224 + $0x2858] sm:$0xff]
        %v1578 = vld [vmem:[%s224 + $0x2860] sm:$0xff]
        %v1579 = vld [vmem:[%s224 + $0x2868] sm:$0xff]
        %v1580 = vld [vmem:[%s224 + $0x2870] sm:$0xff]
        %v1581 = vld [vmem:[%s224 + $0x2878] sm:$0xff]
        %v1582 = vld [vmem:[%s224 + $0x2880] sm:$0xff]
        %v1583 = vld [vmem:[%s224 + $0x2888] sm:$0xff]
        %v1584 = vld [vmem:[%s224 + $0x2890] sm:$0xff]
        %v1585 = vld [vmem:[%s224 + $0x2898] sm:$0xff]
        %v1586 = vld [vmem:[%s224 + $0x28a0] sm:$0xff]
        %v1587 = vld [vmem:[%s224 + $0x28a8] sm:$0xff]
        %v1588 = vld [vmem:[%s224 + $0x28b0] sm:$0xff]
        %v1589 = vld [vmem:[%s224 + $0x28b8] sm:$0xff]
        %v1590 = vld [vmem:[%s224 + $0x28c0] sm:$0xff]
        %v1591 = vld [vmem:[%s224 + $0x28c8] sm:$0xff]
        %v1592 = vld [vmem:[%s224 + $0x28d0] sm:$0xff]
        %v1593 = vld [vmem:[%s224 + $0x28d8] sm:$0xff]
        %v1594 = vld [vmem:[%s224 + $0x28e0] sm:$0xff]
        %v1595 = vld [vmem:[%s224 + $0x28e8] sm:$0xff]
        %v1596 = vld [vmem:[%s224 + $0x28f0] sm:$0xff]
        %v1597 = vld [vmem:[%s224 + $0x28f8] sm:$0xff]
        %v1598 = vld [vmem:[%s224 + $0x2900] sm:$0xff]
        %v1599 = vld [vmem:[%s224 + $0x2908] sm:$0xff]
        %v1600 = vld [vmem:[%s224 + $0x2910] sm:$0xff]
        %v1601 = vld [vmem:[%s224 + $0x2918] sm:$0xff]
        %v1602 = vld [vmem:[%s224 + $0x2920] sm:$0xff]
        %v1603 = vld [vmem:[%s224 + $0x2928] sm:$0xff]
        %v1604 = vld [vmem:[%s224 + $0x2930] sm:$0xff]
        %v1605 = vld [vmem:[%s224 + $0x2938] sm:$0xff]
        %v1606 = vld [vmem:[%s224 + $0x2940] sm:$0xff]
        %v1607 = vld [vmem:[%s224 + $0x2948] sm:$0xff]
        %v1608 = vld [vmem:[%s224 + $0x2950] sm:$0xff]
        %v1609 = vld [vmem:[%s224 + $0x2958] sm:$0xff]
        %v1610 = vld [vmem:[%s224 + $0x2960] sm:$0xff]
        %v1611 = vld [vmem:[%s224 + $0x2968] sm:$0xff]
        %v1612 = vld [vmem:[%s224 + $0x2970] sm:$0xff]
        %v1613 = vld [vmem:[%s224 + $0x2978] sm:$0xff]
        %v1614 = vld [vmem:[%s224 + $0x2980] sm:$0xff]
        %v1615 = vld [vmem:[%s224 + $0x2988] sm:$0xff]
        %v1616 = vld [vmem:[%s224 + $0x2990] sm:$0xff]
        %v1617 = vld [vmem:[%s224 + $0x2998] sm:$0xff]
        %v1618 = vld [vmem:[%s224 + $0x29a0] sm:$0xff]
        %v1619 = vld [vmem:[%s224 + $0x29a8] sm:$0xff]
        %v1620 = vld [vmem:[%s224 + $0x29b0] sm:$0xff]
        %v1621 = vld [vmem:[%s224 + $0x29b8] sm:$0xff]
        %v1622 = vld [vmem:[%s224 + $0x29c0] sm:$0xff]
        %v1623 = vld [vmem:[%s224 + $0x29c8] sm:$0xff]
        %v1624 = vld [vmem:[%s224 + $0x29d0] sm:$0xff]
        %v1625 = vld [vmem:[%s224 + $0x29d8] sm:$0xff]
        %v1626 = vld [vmem:[%s224 + $0x29e0] sm:$0xff]
        %v1627 = vld [vmem:[%s224 + $0x29e8] sm:$0xff]
        %v1628 = vld [vmem:[%s224 + $0x29f0] sm:$0xff]
        %v1629 = vld [vmem:[%s224 + $0x29f8] sm:$0xff]
        %v1630 = vld [vmem:[%s224 + $0x2a00] sm:$0xff]
        %v1631 = vld [vmem:[%s224 + $0x2a08] sm:$0xff]
        %v1632 = vld [vmem:[%s224 + $0x2a10] sm:$0xff]
        %v1633 = vld [vmem:[%s224 + $0x2a18] sm:$0xff]
        %v1634 = vld [vmem:[%s224 + $0x2a20] sm:$0xff]
        %v1635 = vld [vmem:[%s224 + $0x2a28] sm:$0xff]
        %v1636 = vld [vmem:[%s224 + $0x2a30] sm:$0xff]
        %v1637 = vld [vmem:[%s224 + $0x2a38] sm:$0xff]
        %v1638 = vld [vmem:[%s224 + $0x2a40] sm:$0xff]
        %v1639 = vld [vmem:[%s224 + $0x2a48] sm:$0xff]
        %v1640 = vld [vmem:[%s224 + $0x2a50] sm:$0xff]
        %v1641 = vld [vmem:[%s224 + $0x2a58] sm:$0xff]
        %v1642 = vld [vmem:[%s224 + $0x2a60] sm:$0xff]
        %v1643 = vld [vmem:[%s224 + $0x2a68] sm:$0xff]
        %v1644 = vld [vmem:[%s224 + $0x2a70] sm:$0xff]
        %v1645 = vld [vmem:[%s224 + $0x2a78] sm:$0xff]
        %v1646 = vld [vmem:[%s224 + $0x2a80] sm:$0xff]
        %v1647 = vld [vmem:[%s224 + $0x2a88] sm:$0xff]
        %v1648 = vld [vmem:[%s224 + $0x2a90] sm:$0xff]
        %v1649 = vld [vmem:[%s224 + $0x2a98] sm:$0xff]
        %v1650 = vld [vmem:[%s224 + $0x2aa0] sm:$0xff]
        %v1651 = vld [vmem:[%s224 + $0x2aa8] sm:$0xff]
        %v1652 = vld [vmem:[%s224 + $0x2ab0] sm:$0xff]
        %v1653 = vld [vmem:[%s224 + $0x2ab8] sm:$0xff]
        %v1654 = vld [vmem:[%s224 + $0x2ac0] sm:$0xff]
        %v1655 = vld [vmem:[%s224 + $0x2ac8] sm:$0xff]
        %v1656 = vld [vmem:[%s224 + $0x2ad0] sm:$0xff]
        %v1657 = vld [vmem:[%s224 + $0x2ad8] sm:$0xff]
        %v1658 = vld [vmem:[%s224 + $0x2ae0] sm:$0xff]
        %v1659 = vld [vmem:[%s224 + $0x2ae8] sm:$0xff]
        %v1660 = vld [vmem:[%s224 + $0x2af0] sm:$0xff]
        %v1661 = vld [vmem:[%s224 + $0x2af8] sm:$0xff]
        %v1662 = vld [vmem:[%s224 + $0x2b00] sm:$0xff]
        %v1663 = vld [vmem:[%s224 + $0x2b08] sm:$0xff]
        %v1664 = vld [vmem:[%s224 + $0x2b10] sm:$0xff]
        %v1665 = vld [vmem:[%s224 + $0x2b18] sm:$0xff]
        %v1666 = vld [vmem:[%s224 + $0x2b20] sm:$0xff]
        %v1667 = vld [vmem:[%s224 + $0x2b28] sm:$0xff]
        %v1668 = vld [vmem:[%s224 + $0x2b30] sm:$0xff]
        %v1669 = vld [vmem:[%s224 + $0x2b38] sm:$0xff]
        %v1670 = vld [vmem:[%s224 + $0x2b40] sm:$0xff]
        %v1671 = vld [vmem:[%s224 + $0x2b48] sm:$0xff]
        %v1672 = vld [vmem:[%s224 + $0x2b50] sm:$0xff]
        %v1673 = vld [vmem:[%s224 + $0x2b58] sm:$0xff]
        %v1674 = vld [vmem:[%s224 + $0x2b60] sm:$0xff]
        %v1675 = vld [vmem:[%s224 + $0x2b68] sm:$0xff]
        %v1676 = vld [vmem:[%s224 + $0x2b70] sm:$0xff]
        %v1677 = vld [vmem:[%s224 + $0x2b78] sm:$0xff]
        %v1678 = vld [vmem:[%s224 + $0x2b80] sm:$0xff]
        %v1679 = vld [vmem:[%s224 + $0x2b88] sm:$0xff]
        %v1680 = vld [vmem:[%s224 + $0x2b90] sm:$0xff]
        %v1681 = vld [vmem:[%s224 + $0x2b98] sm:$0xff]
        %v1682 = vld [vmem:[%s224 + $0x2ba0] sm:$0xff]
        %v1683 = vld [vmem:[%s224 + $0x2ba8] sm:$0xff]
        %v1684 = vld [vmem:[%s224 + $0x2bb0] sm:$0xff]
        %v1685 = vld [vmem:[%s224 + $0x2bb8] sm:$0xff]
        %v1686 = vld [vmem:[%s224 + $0x2bc0] sm:$0xff]
        %v1687 = vld [vmem:[%s224 + $0x2bc8] sm:$0xff]
        %v1688 = vld [vmem:[%s224 + $0x2bd0] sm:$0xff]
        %v1689 = vld [vmem:[%s224 + $0x2bd8] sm:$0xff]
        %v1690 = vld [vmem:[%s224 + $0x2be0] sm:$0xff]
        %v1691 = vld [vmem:[%s224 + $0x2be8] sm:$0xff]
        %v1692 = vld [vmem:[%s224 + $0x2bf0] sm:$0xff]
        %v1693 = vld [vmem:[%s224 + $0x2bf8] sm:$0xff]
        %v1694 = vld [vmem:[%s224 + $0x2c00] sm:$0xff]
        %v1695 = vld [vmem:[%s224 + $0x2c08] sm:$0xff]
        %v1696 = vld [vmem:[%s224 + $0x2c10] sm:$0xff]
        %v1697 = vld [vmem:[%s224 + $0x2c18] sm:$0xff]
        %v1698 = vld [vmem:[%s224 + $0x2c20] sm:$0xff]
        %v1699 = vld [vmem:[%s224 + $0x2c28] sm:$0xff]
        %v1700 = vld [vmem:[%s224 + $0x2c30] sm:$0xff]
        %v1701 = vld [vmem:[%s224 + $0x2c38] sm:$0xff]
        %v1702 = vld [vmem:[%s224 + $0x2c40] sm:$0xff]
        %v1703 = vld [vmem:[%s224 + $0x2c48] sm:$0xff]
        %v1704 = vld [vmem:[%s224 + $0x2c50] sm:$0xff]
        %v1705 = vld [vmem:[%s224 + $0x2c58] sm:$0xff]
        %v1706 = vld [vmem:[%s224 + $0x2c60] sm:$0xff]
        %v1707 = vld [vmem:[%s224 + $0x2c68] sm:$0xff]
        %v1708 = vld [vmem:[%s224 + $0x2c70] sm:$0xff]
        %v1709 = vld [vmem:[%s224 + $0x2c78] sm:$0xff]
        %v1710 = vld [vmem:[%s224 + $0x2c80] sm:$0xff]
        %v1711 = vld [vmem:[%s224 + $0x2c88] sm:$0xff]
        %v1712 = vld [vmem:[%s224 + $0x2c90] sm:$0xff]
        %v1713 = vld [vmem:[%s224 + $0x2c98] sm:$0xff]
        %v1714 = vld [vmem:[%s224 + $0x2ca0] sm:$0xff]
        %v1715 = vld [vmem:[%s224 + $0x2ca8] sm:$0xff]
        %v1716 = vld [vmem:[%s224 + $0x2cb0] sm:$0xff]
        %v1717 = vld [vmem:[%s224 + $0x2cb8] sm:$0xff]
        %v1718 = vld [vmem:[%s224 + $0x2cc0] sm:$0xff]
        %v1719 = vld [vmem:[%s224 + $0x2cc8] sm:$0xff]
        %v1720 = vld [vmem:[%s224 + $0x2cd0] sm:$0xff]
        %v1721 = vld [vmem:[%s224 + $0x2cd8] sm:$0xff]
        %v1722 = vld [vmem:[%s224 + $0x2ce0] sm:$0xff]
        %v1723 = vld [vmem:[%s224 + $0x2ce8] sm:$0xff]
        %v1724 = vld [vmem:[%s224 + $0x2cf0] sm:$0xff]
        %v1725 = vld [vmem:[%s224 + $0x2cf8] sm:$0xff]
        %v1726 = vld [vmem:[%s224 + $0x2d00] sm:$0xff]
        %v1727 = vld [vmem:[%s224 + $0x2d08] sm:$0xff]
        %v1728 = vld [vmem:[%s224 + $0x2d10] sm:$0xff]
        %v1729 = vld [vmem:[%s224 + $0x2d18] sm:$0xff]
        %v1730 = vld [vmem:[%s224 + $0x2d20] sm:$0xff]
        %v1731 = vld [vmem:[%s224 + $0x2d28] sm:$0xff]
        %v1732 = vld [vmem:[%s224 + $0x2d30] sm:$0xff]
        %v1733 = vld [vmem:[%s224 + $0x2d38] sm:$0xff]
        %v1734 = vld [vmem:[%s224 + $0x2d40] sm:$0xff]
        %v1735 = vld [vmem:[%s224 + $0x2d48] sm:$0xff]
        %v1736 = vld [vmem:[%s224 + $0x2d50] sm:$0xff]
        %v1737 = vld [vmem:[%s224 + $0x2d58] sm:$0xff]
        %v1738 = vld [vmem:[%s224 + $0x2d60] sm:$0xff]
        %v1739 = vld [vmem:[%s224 + $0x2d68] sm:$0xff]
        %v1740 = vld [vmem:[%s224 + $0x2d70] sm:$0xff]
        %v1741 = vld [vmem:[%s224 + $0x2d78] sm:$0xff]
        %v1742 = vld [vmem:[%s224 + $0x2d80] sm:$0xff]
        %v1743 = vld [vmem:[%s224 + $0x2d88] sm:$0xff]
        %v1744 = vld [vmem:[%s224 + $0x2d90] sm:$0xff]
        %v1745 = vld [vmem:[%s224 + $0x2d98] sm:$0xff]
        %v1746 = vld [vmem:[%s224 + $0x2da0] sm:$0xff]
        %v1747 = vld [vmem:[%s224 + $0x2da8] sm:$0xff]
        %v1748 = vld [vmem:[%s224 + $0x2db0] sm:$0xff]
        %v1749 = vld [vmem:[%s224 + $0x2db8] sm:$0xff]
        %v1750 = vld [vmem:[%s224 + $0x2dc0] sm:$0xff]
        %v1751 = vld [vmem:[%s224 + $0x2dc8] sm:$0xff]
        %v1752 = vld [vmem:[%s224 + $0x2dd0] sm:$0xff]
        %v1753 = vld [vmem:[%s224 + $0x2dd8] sm:$0xff]
        %v1754 = vld [vmem:[%s224 + $0x2de0] sm:$0xff]
        %v1755 = vld [vmem:[%s224 + $0x2de8] sm:$0xff]
        %v1756 = vld [vmem:[%s224 + $0x2df0] sm:$0xff]
        %v1757 = vld [vmem:[%s224 + $0x2df8] sm:$0xff]
        %v1758 = vld [vmem:[%s224 + $0x2e00] sm:$0xff]
        %v1759 = vld [vmem:[%s224 + $0x2e08] sm:$0xff]
        %v1760 = vld [vmem:[%s224 + $0x2e10] sm:$0xff]
        %v1761 = vld [vmem:[%s224 + $0x2e18] sm:$0xff]
        %v1762 = vld [vmem:[%s224 + $0x2e20] sm:$0xff]
        %v1763 = vld [vmem:[%s224 + $0x2e28] sm:$0xff]
        %v1764 = vld [vmem:[%s224 + $0x2e30] sm:$0xff]
        %v1765 = vld [vmem:[%s224 + $0x2e38] sm:$0xff]
        %v1766 = vld [vmem:[%s224 + $0x2e40] sm:$0xff]
        %v1767 = vld [vmem:[%s224 + $0x2e48] sm:$0xff]
        %v1768 = vld [vmem:[%s224 + $0x2e50] sm:$0xff]
        %v1769 = vld [vmem:[%s224 + $0x2e58] sm:$0xff]
        %v1770 = vld [vmem:[%s224 + $0x2e60] sm:$0xff]
        %v1771 = vld [vmem:[%s224 + $0x2e68] sm:$0xff]
        %v1772 = vld [vmem:[%s224 + $0x2e70] sm:$0xff]
        %v1773 = vld [vmem:[%s224 + $0x2e78] sm:$0xff]
        %v1774 = vld [vmem:[%s224 + $0x2e80] sm:$0xff]
        %v1775 = vld [vmem:[%s224 + $0x2e88] sm:$0xff]
        %v1776 = vld [vmem:[%s224 + $0x2e90] sm:$0xff]
        %v1777 = vld [vmem:[%s224 + $0x2e98] sm:$0xff]
        %v1778 = vld [vmem:[%s224 + $0x2ea0] sm:$0xff]
        %v1779 = vld [vmem:[%s224 + $0x2ea8] sm:$0xff]
        %v1780 = vld [vmem:[%s224 + $0x2eb0] sm:$0xff]
        %v1781 = vld [vmem:[%s224 + $0x2eb8] sm:$0xff]
        %v1782 = vld [vmem:[%s224 + $0x2ec0] sm:$0xff]
        %v1783 = vld [vmem:[%s224 + $0x2ec8] sm:$0xff]
        %v1784 = vld [vmem:[%s224 + $0x2ed0] sm:$0xff]
        %v1785 = vld [vmem:[%s224 + $0x2ed8] sm:$0xff]
        %v1786 = vld [vmem:[%s224 + $0x2ee0] sm:$0xff]
        %v1787 = vld [vmem:[%s224 + $0x2ee8] sm:$0xff]
        %v1788 = vld [vmem:[%s224 + $0x2ef0] sm:$0xff]
        %v1789 = vld [vmem:[%s224 + $0x2ef8] sm:$0xff]
        %v1790 = vld [vmem:[%s224 + $0x2f00] sm:$0xff]
        %v1791 = vld [vmem:[%s224 + $0x2f08] sm:$0xff]
        %v1792 = vld [vmem:[%s224 + $0x2f10] sm:$0xff]
        %v1793 = vld [vmem:[%s224 + $0x2f18] sm:$0xff]
        %v1794 = vld [vmem:[%s224 + $0x2f20] sm:$0xff]
        %v1795 = vld [vmem:[%s224 + $0x2f28] sm:$0xff]
        %v1796 = vld [vmem:[%s224 + $0x2f30] sm:$0xff]
        %v1797 = vld [vmem:[%s224 + $0x2f38] sm:$0xff]
        %v1798 = vld [vmem:[%s224 + $0x2f40] sm:$0xff]
        %v1799 = vld [vmem:[%s224 + $0x2f48] sm:$0xff]
        %v1800 = vld [vmem:[%s224 + $0x2f50] sm:$0xff]
        %v1801 = vld [vmem:[%s224 + $0x2f58] sm:$0xff]
        %v1802 = vld [vmem:[%s224 + $0x2f60] sm:$0xff]
        %v1803 = vld [vmem:[%s224 + $0x2f68] sm:$0xff]
        %v1804 = vld [vmem:[%s224 + $0x2f70] sm:$0xff]
        %v1805 = vld [vmem:[%s224 + $0x2f78] sm:$0xff]
        %v1806 = vld [vmem:[%s224 + $0x2f80] sm:$0xff]
        %v1807 = vld [vmem:[%s224 + $0x2f88] sm:$0xff]
        %v1808 = vld [vmem:[%s224 + $0x2f90] sm:$0xff]
        %v1809 = vld [vmem:[%s224 + $0x2f98] sm:$0xff]
        %v1810 = vld [vmem:[%s224 + $0x2fa0] sm:$0xff]
        %v1811 = vld [vmem:[%s224 + $0x2fa8] sm:$0xff]
        %v1812 = vld [vmem:[%s224 + $0x2fb0] sm:$0xff]
        %v1813 = vld [vmem:[%s224 + $0x2fb8] sm:$0xff]
        %v1814 = vld [vmem:[%s224 + $0x2fc0] sm:$0xff]
        %v1815 = vld [vmem:[%s224 + $0x2fc8] sm:$0xff]
        %v1816 = vld [vmem:[%s224 + $0x2fd0] sm:$0xff]
        %v1817 = vld [vmem:[%s224 + $0x2fd8] sm:$0xff]
        %v1818 = vld [vmem:[%s224 + $0x2fe0] sm:$0xff]
        %v1819 = vld [vmem:[%s224 + $0x2fe8] sm:$0xff]
        %v1820 = vld [vmem:[%s224 + $0x2ff0] sm:$0xff]
        %v1821 = vld [vmem:[%s224 + $0x2ff8] sm:$0xff]
        %v1822 = vld [vmem:[%s224 + $0x3000] sm:$0xff]
        %v1823 = vld [vmem:[%s224 + $0x3008] sm:$0xff]
        %v1824 = vld [vmem:[%s224 + $0x3010] sm:$0xff]
        %v1825 = vld [vmem:[%s224 + $0x3018] sm:$0xff]
        %v1826 = vld [vmem:[%s224 + $0x3020] sm:$0xff]
        %v1827 = vld [vmem:[%s224 + $0x3028] sm:$0xff]
        %v1828 = vld [vmem:[%s224 + $0x3030] sm:$0xff]
        %v1829 = vld [vmem:[%s224 + $0x3038] sm:$0xff]
        %v1830 = vld [vmem:[%s224 + $0x3040] sm:$0xff]
        %v1831 = vld [vmem:[%s224 + $0x3048] sm:$0xff]
        %v1832 = vld [vmem:[%s224 + $0x3050] sm:$0xff]
        %v1833 = vld [vmem:[%s224 + $0x3058] sm:$0xff]
        %v1834 = vld [vmem:[%s224 + $0x3060] sm:$0xff]
        %v1835 = vld [vmem:[%s224 + $0x3068] sm:$0xff]
        %v1836 = vld [vmem:[%s224 + $0x3070] sm:$0xff]
        %v1837 = vld [vmem:[%s224 + $0x3078] sm:$0xff]
        %v1838 = vld [vmem:[%s224 + $0x3080] sm:$0xff]
        %v1839 = vld [vmem:[%s224 + $0x3088] sm:$0xff]
        %v1840 = vld [vmem:[%s224 + $0x3090] sm:$0xff]
        %v1841 = vld [vmem:[%s224 + $0x3098] sm:$0xff]
        %v1842 = vld [vmem:[%s224 + $0x30a0] sm:$0xff]
        %v1843 = vld [vmem:[%s224 + $0x30a8] sm:$0xff]
        %v1844 = vld [vmem:[%s224 + $0x30b0] sm:$0xff]
        %v1845 = vld [vmem:[%s224 + $0x30b8] sm:$0xff]
        %v1846 = vld [vmem:[%s224 + $0x30c0] sm:$0xff]
        %v1847 = vld [vmem:[%s224 + $0x30c8] sm:$0xff]
        %v1848 = vld [vmem:[%s224 + $0x30d0] sm:$0xff]
        %v1849 = vld [vmem:[%s224 + $0x30d8] sm:$0xff]
        %v1850 = vld [vmem:[%s224 + $0x30e0] sm:$0xff]
        %v1851 = vld [vmem:[%s224 + $0x30e8] sm:$0xff]
        %v1852 = vld [vmem:[%s224 + $0x30f0] sm:$0xff]
        %v1853 = vld [vmem:[%s224 + $0x30f8] sm:$0xff]
        %v1854 = vld [vmem:[%s224 + $0x3100] sm:$0xff]
        %v1855 = vld [vmem:[%s224 + $0x3108] sm:$0xff]
        %v1856 = vld [vmem:[%s224 + $0x3110] sm:$0xff]
        %v1857 = vld [vmem:[%s224 + $0x3118] sm:$0xff]
        %v1858 = vld [vmem:[%s224 + $0x3120] sm:$0xff]
        %v1859 = vld [vmem:[%s224 + $0x3128] sm:$0xff]
        %v1860 = vld [vmem:[%s224 + $0x3130] sm:$0xff]
        %v1861 = vld [vmem:[%s224 + $0x3138] sm:$0xff]
        %v1862 = vld [vmem:[%s224 + $0x3140] sm:$0xff]
        %v1863 = vld [vmem:[%s224 + $0x3148] sm:$0xff]
        %v1864 = vld [vmem:[%s224 + $0x3150] sm:$0xff]
        %v1865 = vld [vmem:[%s224 + $0x3158] sm:$0xff]
        %v1866 = vld [vmem:[%s224 + $0x3160] sm:$0xff]
        %v1867 = vld [vmem:[%s224 + $0x3168] sm:$0xff]
        %v1868 = vld [vmem:[%s224 + $0x3170] sm:$0xff]
        %v1869 = vld [vmem:[%s224 + $0x3178] sm:$0xff]
        %v1870 = vld [vmem:[%s224 + $0x3180] sm:$0xff]
        %v1871 = vld [vmem:[%s224 + $0x3188] sm:$0xff]
        %v1872 = vld [vmem:[%s224 + $0x3190] sm:$0xff]
        %v1873 = vld [vmem:[%s224 + $0x3198] sm:$0xff]
        %v1874 = vld [vmem:[%s224 + $0x31a0] sm:$0xff]
        %v1875 = vld [vmem:[%s224 + $0x31a8] sm:$0xff]
        %v1876 = vld [vmem:[%s224 + $0x31b0] sm:$0xff]
        %v1877 = vld [vmem:[%s224 + $0x31b8] sm:$0xff]
        %v1878 = vld [vmem:[%s224 + $0x31c0] sm:$0xff]
        %v1879 = vld [vmem:[%s224 + $0x31c8] sm:$0xff]
        %v1880 = vld [vmem:[%s224 + $0x31d0] sm:$0xff]
        %v1881 = vld [vmem:[%s224 + $0x31d8] sm:$0xff]
        %v1882 = vld [vmem:[%s224 + $0x31e0] sm:$0xff]
        %v1883 = vld [vmem:[%s224 + $0x31e8] sm:$0xff]
        %v1884 = vld [vmem:[%s224 + $0x31f0] sm:$0xff]
        %v1885 = vld [vmem:[%s224 + $0x31f8] sm:$0xff]
        %v1911 = vcombine.high %v261, %v261
        %v1913 = vunpack.c.l.s4 1983009808
        %v1914 = vunpack.c.0.s8 %v1913
        %v1915 = vlaneseq
        %v1916 = vshrl.u32 %v1915, 7
        %v1917 = vsub.s32 %v1914, %v1916
        %v1918 = vrot.slane %v261, %v1917
        %v1920 = vunpack.c.l.s4 1983009808
        %v1921 = vunpack.c.0.s8 %v1920
        %v1922 = vlaneseq
        %v1923 = vshrl.u32 %v1922, 7
        %v1924 = vsub.s32 %v1921, %v1923
        %v1925 = vrot.slane %v1911, %v1924
        %v1926 = vcombine.high %v1918, %v1918
        %v1927 = vcombine.high %v1925, %v1925
        %v1928 = vcombine.high %v262, %v262
        %v1930 = vunpack.c.l.s4 1983009808
        %v1931 = vunpack.c.0.s8 %v1930
        %v1932 = vlaneseq
        %v1933 = vshrl.u32 %v1932, 7
        %v1934 = vsub.s32 %v1931, %v1933
        %v1935 = vrot.slane %v262, %v1934
        %v1937 = vunpack.c.l.s4 1983009808
        %v1938 = vunpack.c.0.s8 %v1937
        %v1939 = vlaneseq
        %v1940 = vshrl.u32 %v1939, 7
        %v1941 = vsub.s32 %v1938, %v1940
        %v1942 = vrot.slane %v1928, %v1941
        %v1943 = vcombine.high %v1935, %v1935
        %v1944 = vcombine.high %v1942, %v1942
        %v1945 = vcombine.high %v263, %v263
        %v1947 = vunpack.c.l.s4 1983009808
        %v1948 = vunpack.c.0.s8 %v1947
        %v1949 = vlaneseq
        %v1950 = vshrl.u32 %v1949, 7
        %v1951 = vsub.s32 %v1948, %v1950
        %v1952 = vrot.slane %v263, %v1951
        %v1954 = vunpack.c.l.s4 1983009808
        %v1955 = vunpack.c.0.s8 %v1954
        %v1956 = vlaneseq
        %v1957 = vshrl.u32 %v1956, 7
        %v1958 = vsub.s32 %v1955, %v1957
        %v1959 = vrot.slane %v1945, %v1958
        %v1960 = vcombine.high %v1952, %v1952
        %v1961 = vcombine.high %v1959, %v1959
        %v1962 = vcombine.high %v264, %v264
        %v1964 = vunpack.c.l.s4 1983009808
        %v1965 = vunpack.c.0.s8 %v1964
        %v1966 = vlaneseq
        %v1967 = vshrl.u32 %v1966, 7
        %v1968 = vsub.s32 %v1965, %v1967
        %v1969 = vrot.slane %v264, %v1968
        %v1971 = vunpack.c.l.s4 1983009808
        %v1972 = vunpack.c.0.s8 %v1971
        %v1973 = vlaneseq
        %v1974 = vshrl.u32 %v1973, 7
        %v1975 = vsub.s32 %v1972, %v1974
        %v1976 = vrot.slane %v1962, %v1975
        %v1977 = vcombine.high %v1969, %v1969
        %v1978 = vcombine.high %v1976, %v1976
        %v1979 = vcombine.high %v265, %v265
        %v1981 = vunpack.c.l.s4 1983009808
        %v1982 = vunpack.c.0.s8 %v1981
        %v1983 = vlaneseq
        %v1984 = vshrl.u32 %v1983, 7
        %v1985 = vsub.s32 %v1982, %v1984
        %v1986 = vrot.slane %v265, %v1985
        %v1988 = vunpack.c.l.s4 1983009808
        %v1989 = vunpack.c.0.s8 %v1988
        %v1990 = vlaneseq
        %v1991 = vshrl.u32 %v1990, 7
        %v1992 = vsub.s32 %v1989, %v1991
        %v1993 = vrot.slane %v1979, %v1992
        %v1994 = vcombine.high %v1986, %v1986
        %v1995 = vcombine.high %v1993, %v1993
        %v1996 = vcombine.high %v266, %v266
        %v1998 = vunpack.c.l.s4 1983009808
        %v1999 = vunpack.c.0.s8 %v1998
        %v2000 = vlaneseq
        %v2001 = vshrl.u32 %v2000, 7
        %v2002 = vsub.s32 %v1999, %v2001
        %v2003 = vrot.slane %v266, %v2002
        %v2005 = vunpack.c.l.s4 1983009808
        %v2006 = vunpack.c.0.s8 %v2005
        %v2007 = vlaneseq
        %v2008 = vshrl.u32 %v2007, 7
        %v2009 = vsub.s32 %v2006, %v2008
        %v2010 = vrot.slane %v1996, %v2009
        %v2011 = vcombine.high %v2003, %v2003
        %v2012 = vcombine.high %v2010, %v2010
        %v2013 = vcombine.high %v267, %v267
        %v2015 = vunpack.c.l.s4 1983009808
        %v2016 = vunpack.c.0.s8 %v2015
        %v2017 = vlaneseq
        %v2018 = vshrl.u32 %v2017, 7
        %v2019 = vsub.s32 %v2016, %v2018
        %v2020 = vrot.slane %v267, %v2019
        %v2022 = vunpack.c.l.s4 1983009808
        %v2023 = vunpack.c.0.s8 %v2022
        %v2024 = vlaneseq
        %v2025 = vshrl.u32 %v2024, 7
        %v2026 = vsub.s32 %v2023, %v2025
        %v2027 = vrot.slane %v2013, %v2026
        %v2028 = vcombine.high %v2020, %v2020
        %v2029 = vcombine.high %v2027, %v2027
        %v2030 = vcombine.high %v268, %v268
        %v2032 = vunpack.c.l.s4 1983009808
        %v2033 = vunpack.c.0.s8 %v2032
        %v2034 = vlaneseq
        %v2035 = vshrl.u32 %v2034, 7
        %v2036 = vsub.s32 %v2033, %v2035
        %v2037 = vrot.slane %v268, %v2036
        %v2039 = vunpack.c.l.s4 1983009808
        %v2040 = vunpack.c.0.s8 %v2039
        %v2041 = vlaneseq
        %v2042 = vshrl.u32 %v2041, 7
        %v2043 = vsub.s32 %v2040, %v2042
        %v2044 = vrot.slane %v2030, %v2043
        %v2045 = vcombine.high %v2037, %v2037
        %v2046 = vcombine.high %v2044, %v2044
        %v2047 = vcombine.high %v269, %v269
        %v2049 = vunpack.c.l.s4 1983009808
        %v2050 = vunpack.c.0.s8 %v2049
        %v2051 = vlaneseq
        %v2052 = vshrl.u32 %v2051, 7
        %v2053 = vsub.s32 %v2050, %v2052
        %v2054 = vrot.slane %v269, %v2053
        %v2056 = vunpack.c.l.s4 1983009808
        %v2057 = vunpack.c.0.s8 %v2056
        %v2058 = vlaneseq
        %v2059 = vshrl.u32 %v2058, 7
        %v2060 = vsub.s32 %v2057, %v2059
        %v2061 = vrot.slane %v2047, %v2060
        %v2062 = vcombine.high %v2054, %v2054
        %v2063 = vcombine.high %v2061, %v2061
        %v2064 = vcombine.high %v270, %v270
        %v2066 = vunpack.c.l.s4 1983009808
        %v2067 = vunpack.c.0.s8 %v2066
        %v2068 = vlaneseq
        %v2069 = vshrl.u32 %v2068, 7
        %v2070 = vsub.s32 %v2067, %v2069
        %v2071 = vrot.slane %v270, %v2070
        %v2073 = vunpack.c.l.s4 1983009808
        %v2074 = vunpack.c.0.s8 %v2073
        %v2075 = vlaneseq
        %v2076 = vshrl.u32 %v2075, 7
        %v2077 = vsub.s32 %v2074, %v2076
        %v2078 = vrot.slane %v2064, %v2077
        %v2079 = vcombine.high %v2071, %v2071
        %v2080 = vcombine.high %v2078, %v2078
        %v2081 = vcombine.high %v271, %v271
        %v2083 = vunpack.c.l.s4 1983009808
        %v2084 = vunpack.c.0.s8 %v2083
        %v2085 = vlaneseq
        %v2086 = vshrl.u32 %v2085, 7
        %v2087 = vsub.s32 %v2084, %v2086
        %v2088 = vrot.slane %v271, %v2087
        %v2090 = vunpack.c.l.s4 1983009808
        %v2091 = vunpack.c.0.s8 %v2090
        %v2092 = vlaneseq
        %v2093 = vshrl.u32 %v2092, 7
        %v2094 = vsub.s32 %v2091, %v2093
        %v2095 = vrot.slane %v2081, %v2094
        %v2096 = vcombine.high %v2088, %v2088
        %v2097 = vcombine.high %v2095, %v2095
        %v2098 = vcombine.high %v272, %v272
        %v2100 = vunpack.c.l.s4 1983009808
        %v2101 = vunpack.c.0.s8 %v2100
        %v2102 = vlaneseq
        %v2103 = vshrl.u32 %v2102, 7
        %v2104 = vsub.s32 %v2101, %v2103
        %v2105 = vrot.slane %v272, %v2104
        %v2107 = vunpack.c.l.s4 1983009808
        %v2108 = vunpack.c.0.s8 %v2107
        %v2109 = vlaneseq
        %v2110 = vshrl.u32 %v2109, 7
        %v2111 = vsub.s32 %v2108, %v2110
        %v2112 = vrot.slane %v2098, %v2111
        %v2113 = vcombine.high %v2105, %v2105
        %v2114 = vcombine.high %v2112, %v2112
        %v2115 = vcombine.high %v273, %v273
        %v2117 = vunpack.c.l.s4 1983009808
        %v2118 = vunpack.c.0.s8 %v2117
        %v2119 = vlaneseq
        %v2120 = vshrl.u32 %v2119, 7
        %v2121 = vsub.s32 %v2118, %v2120
        %v2122 = vrot.slane %v273, %v2121
        %v2124 = vunpack.c.l.s4 1983009808
        %v2125 = vunpack.c.0.s8 %v2124
        %v2126 = vlaneseq
        %v2127 = vshrl.u32 %v2126, 7
        %v2128 = vsub.s32 %v2125, %v2127
        %v2129 = vrot.slane %v2115, %v2128
        %v2130 = vcombine.high %v2122, %v2122
        %v2131 = vcombine.high %v2129, %v2129
        %v2132 = vcombine.high %v274, %v274
        %v2134 = vunpack.c.l.s4 1983009808
        %v2135 = vunpack.c.0.s8 %v2134
        %v2136 = vlaneseq
        %v2137 = vshrl.u32 %v2136, 7
        %v2138 = vsub.s32 %v2135, %v2137
        %v2139 = vrot.slane %v274, %v2138
        %v2141 = vunpack.c.l.s4 1983009808
        %v2142 = vunpack.c.0.s8 %v2141
        %v2143 = vlaneseq
        %v2144 = vshrl.u32 %v2143, 7
        %v2145 = vsub.s32 %v2142, %v2144
        %v2146 = vrot.slane %v2132, %v2145
        %v2147 = vcombine.high %v2139, %v2139
        %v2148 = vcombine.high %v2146, %v2146
        %v2149 = vcombine.high %v275, %v275
        %v2151 = vunpack.c.l.s4 1983009808
        %v2152 = vunpack.c.0.s8 %v2151
        %v2153 = vlaneseq
        %v2154 = vshrl.u32 %v2153, 7
        %v2155 = vsub.s32 %v2152, %v2154
        %v2156 = vrot.slane %v275, %v2155
        %v2158 = vunpack.c.l.s4 1983009808
        %v2159 = vunpack.c.0.s8 %v2158
        %v2160 = vlaneseq
        %v2161 = vshrl.u32 %v2160, 7
        %v2162 = vsub.s32 %v2159, %v2161
        %v2163 = vrot.slane %v2149, %v2162
        %v2164 = vcombine.high %v2156, %v2156
        %v2165 = vcombine.high %v2163, %v2163
        %v2166 = vcombine.high %v276, %v276
        %v2168 = vunpack.c.l.s4 1983009808
        %v2169 = vunpack.c.0.s8 %v2168
        %v2170 = vlaneseq
        %v2171 = vshrl.u32 %v2170, 7
        %v2172 = vsub.s32 %v2169, %v2171
        %v2173 = vrot.slane %v276, %v2172
        %v2175 = vunpack.c.l.s4 1983009808
        %v2176 = vunpack.c.0.s8 %v2175
        %v2177 = vlaneseq
        %v2178 = vshrl.u32 %v2177, 7
        %v2179 = vsub.s32 %v2176, %v2178
        %v2180 = vrot.slane %v2166, %v2179
        %v2181 = vcombine.high %v2173, %v2173
        %v2182 = vcombine.high %v2180, %v2180
        %v2183 = vcombine.high %v277, %v277
        %v2185 = vunpack.c.l.s4 1983009808
        %v2186 = vunpack.c.0.s8 %v2185
        %v2187 = vlaneseq
        %v2188 = vshrl.u32 %v2187, 7
        %v2189 = vsub.s32 %v2186, %v2188
        %v2190 = vrot.slane %v277, %v2189
        %v2192 = vunpack.c.l.s4 1983009808
        %v2193 = vunpack.c.0.s8 %v2192
        %v2194 = vlaneseq
        %v2195 = vshrl.u32 %v2194, 7
        %v2196 = vsub.s32 %v2193, %v2195
        %v2197 = vrot.slane %v2183, %v2196
        %v2198 = vcombine.high %v2190, %v2190
        %v2199 = vcombine.high %v2197, %v2197
        %v2200 = vcombine.high %v278, %v278
        %v2202 = vunpack.c.l.s4 1983009808
        %v2203 = vunpack.c.0.s8 %v2202
        %v2204 = vlaneseq
        %v2205 = vshrl.u32 %v2204, 7
        %v2206 = vsub.s32 %v2203, %v2205
        %v2207 = vrot.slane %v278, %v2206
        %v2209 = vunpack.c.l.s4 1983009808
        %v2210 = vunpack.c.0.s8 %v2209
        %v2211 = vlaneseq
        %v2212 = vshrl.u32 %v2211, 7
        %v2213 = vsub.s32 %v2210, %v2212
        %v2214 = vrot.slane %v2200, %v2213
        %v2215 = vcombine.high %v2207, %v2207
        %v2216 = vcombine.high %v2214, %v2214
        %v2217 = vcombine.high %v279, %v279
        %v2219 = vunpack.c.l.s4 1983009808
        %v2220 = vunpack.c.0.s8 %v2219
        %v2221 = vlaneseq
        %v2222 = vshrl.u32 %v2221, 7
        %v2223 = vsub.s32 %v2220, %v2222
        %v2224 = vrot.slane %v279, %v2223
        %v2226 = vunpack.c.l.s4 1983009808
        %v2227 = vunpack.c.0.s8 %v2226
        %v2228 = vlaneseq
        %v2229 = vshrl.u32 %v2228, 7
        %v2230 = vsub.s32 %v2227, %v2229
        %v2231 = vrot.slane %v2217, %v2230
        %v2232 = vcombine.high %v2224, %v2224
        %v2233 = vcombine.high %v2231, %v2231
        %v2234 = vcombine.high %v280, %v280
        %v2236 = vunpack.c.l.s4 1983009808
        %v2237 = vunpack.c.0.s8 %v2236
        %v2238 = vlaneseq
        %v2239 = vshrl.u32 %v2238, 7
        %v2240 = vsub.s32 %v2237, %v2239
        %v2241 = vrot.slane %v280, %v2240
        %v2243 = vunpack.c.l.s4 1983009808
        %v2244 = vunpack.c.0.s8 %v2243
        %v2245 = vlaneseq
        %v2246 = vshrl.u32 %v2245, 7
        %v2247 = vsub.s32 %v2244, %v2246
        %v2248 = vrot.slane %v2234, %v2247
        %v2249 = vcombine.high %v2241, %v2241
        %v2250 = vcombine.high %v2248, %v2248
        %v2251 = vcombine.high %v281, %v281
        %v2253 = vunpack.c.l.s4 1983009808
        %v2254 = vunpack.c.0.s8 %v2253
        %v2255 = vlaneseq
        %v2256 = vshrl.u32 %v2255, 7
        %v2257 = vsub.s32 %v2254, %v2256
        %v2258 = vrot.slane %v281, %v2257
        %v2260 = vunpack.c.l.s4 1983009808
        %v2261 = vunpack.c.0.s8 %v2260
        %v2262 = vlaneseq
        %v2263 = vshrl.u32 %v2262, 7
        %v2264 = vsub.s32 %v2261, %v2263
        %v2265 = vrot.slane %v2251, %v2264
        %v2266 = vcombine.high %v2258, %v2258
        %v2267 = vcombine.high %v2265, %v2265
        %v2268 = vcombine.high %v282, %v282
        %v2270 = vunpack.c.l.s4 1983009808
        %v2271 = vunpack.c.0.s8 %v2270
        %v2272 = vlaneseq
        %v2273 = vshrl.u32 %v2272, 7
        %v2274 = vsub.s32 %v2271, %v2273
        %v2275 = vrot.slane %v282, %v2274
        %v2277 = vunpack.c.l.s4 1983009808
        %v2278 = vunpack.c.0.s8 %v2277
        %v2279 = vlaneseq
        %v2280 = vshrl.u32 %v2279, 7
        %v2281 = vsub.s32 %v2278, %v2280
        %v2282 = vrot.slane %v2268, %v2281
        %v2283 = vcombine.high %v2275, %v2275
        %v2284 = vcombine.high %v2282, %v2282
        %v2285 = vcombine.high %v283, %v283
        %v2287 = vunpack.c.l.s4 1983009808
        %v2288 = vunpack.c.0.s8 %v2287
        %v2289 = vlaneseq
        %v2290 = vshrl.u32 %v2289, 7
        %v2291 = vsub.s32 %v2288, %v2290
        %v2292 = vrot.slane %v283, %v2291
        %v2294 = vunpack.c.l.s4 1983009808
        %v2295 = vunpack.c.0.s8 %v2294
        %v2296 = vlaneseq
        %v2297 = vshrl.u32 %v2296, 7
        %v2298 = vsub.s32 %v2295, %v2297
        %v2299 = vrot.slane %v2285, %v2298
        %v2300 = vcombine.high %v2292, %v2292
        %v2301 = vcombine.high %v2299, %v2299
        %v2302 = vcombine.high %v284, %v284
        %v2304 = vunpack.c.l.s4 1983009808
        %v2305 = vunpack.c.0.s8 %v2304
        %v2306 = vlaneseq
        %v2307 = vshrl.u32 %v2306, 7
        %v2308 = vsub.s32 %v2305, %v2307
        %v2309 = vrot.slane %v284, %v2308
        %v2311 = vunpack.c.l.s4 1983009808
        %v2312 = vunpack.c.0.s8 %v2311
        %v2313 = vlaneseq
        %v2314 = vshrl.u32 %v2313, 7
        %v2315 = vsub.s32 %v2312, %v2314
        %v2316 = vrot.slane %v2302, %v2315
        %v2317 = vcombine.high %v2309, %v2309
        %v2318 = vcombine.high %v2316, %v2316
        %v2319 = vcombine.high %v285, %v285
        %v2321 = vunpack.c.l.s4 1983009808
        %v2322 = vunpack.c.0.s8 %v2321
        %v2323 = vlaneseq
        %v2324 = vshrl.u32 %v2323, 7
        %v2325 = vsub.s32 %v2322, %v2324
        %v2326 = vrot.slane %v285, %v2325
        %v2328 = vunpack.c.l.s4 1983009808
        %v2329 = vunpack.c.0.s8 %v2328
        %v2330 = vlaneseq
        %v2331 = vshrl.u32 %v2330, 7
        %v2332 = vsub.s32 %v2329, %v2331
        %v2333 = vrot.slane %v2319, %v2332
        %v2334 = vcombine.high %v2326, %v2326
        %v2335 = vcombine.high %v2333, %v2333
        %2436 = vmatprep.subr.mxu0 0.0
        %2437 = vmatpush1.msra.mxu0 %v286
        %2438 = vmatprep.subr.mxu0 0.0
        %2439 = vmatpush1.msra.mxu0 %v287
        %2440 = vmatprep.subr.mxu0 0.0
        %2441 = vmatpush1.msra.mxu0 %v288
        %2442 = vmatprep.subr.mxu0 0.0
        %2443 = vmatpush1.msra.mxu0 %v289
        %2444 = vmatprep.subr.mxu0 0.0
        %2445 = vmatpush1.msra.mxu0 %v290
        %2446 = vmatprep.subr.mxu0 0.0
        %2447 = vmatpush1.msra.mxu0 %v291
        %2448 = vmatprep.subr.mxu0 0.0
        %2449 = vmatpush1.msra.mxu0 %v292
        %2450 = vmatprep.subr.mxu0 0.0
        %2451 = vmatpush1.msra.mxu0 %v293
        %2452 = vmatprep.subr.mxu0 0.0
        %2453 = vmatpush1.msra.mxu0 %v294
        %2454 = vmatprep.subr.mxu0 0.0
        %2455 = vmatpush1.msra.mxu0 %v295
        %2456 = vmatprep.subr.mxu0 0.0
        %2457 = vmatpush1.msra.mxu0 %v296
        %2458 = vmatprep.subr.mxu0 0.0
        %2459 = vmatpush1.msra.mxu0 %v297
        %2460 = vmatprep.subr.mxu0 0.0
        %2461 = vmatpush1.msra.mxu0 %v298
        %2462 = vmatprep.subr.mxu0 0.0
        %2463 = vmatpush1.msra.mxu0 %v299
        %2464 = vmatprep.subr.mxu0 0.0
        %2465 = vmatpush1.msra.mxu0 %v300
        %2466 = vmatprep.subr.mxu0 0.0
        %2467 = vmatpush1.msra.mxu0 %v301
        %2468 = vmatprep.subr.mxu0 0.0
        %2469 = vmatpush1.msra.mxu0 %v302
        %2470 = vmatprep.subr.mxu0 0.0
        %2471 = vmatpush1.msra.mxu0 %v303
        %2472 = vmatprep.subr.mxu0 0.0
        %2473 = vmatpush1.msra.mxu0 %v304
        %2474 = vmatprep.subr.mxu0 0.0
        %2475 = vmatpush1.msra.mxu0 %v305
        %2476 = vmatprep.subr.mxu0 0.0
        %2477 = vmatpush1.msra.mxu0 %v306
        %2478 = vmatprep.subr.mxu0 0.0
        %2479 = vmatpush1.msra.mxu0 %v307
        %2480 = vmatprep.subr.mxu0 0.0
        %2481 = vmatpush1.msra.mxu0 %v308
        %2482 = vmatprep.subr.mxu0 0.0
        %2483 = vmatpush1.msra.mxu0 %v309
        %2484 = vmatprep.subr.mxu0 0.0
        %2485 = vmatpush1.msra.mxu0 %v310
        %2486 = vmatprep.subr.mxu0 0.0
        %2487 = vmatpush1.msra.mxu0 %v311
        %2488 = vmatprep.subr.mxu0 0.0
        %2489 = vmatpush1.msra.mxu0 %v312
        %2490 = vmatprep.subr.mxu0 0.0
        %2491 = vmatpush1.msra.mxu0 %v313
        %2492 = vmatprep.subr.mxu0 0.0
        %2493 = vmatpush1.msra.mxu0 %v314
        %2494 = vmatprep.subr.mxu0 0.0
        %2495 = vmatpush1.msra.mxu0 %v315
        %2496 = vmatprep.subr.mxu0 0.0
        %2497 = vmatpush1.msra.mxu0 %v316
        %2498 = vmatprep.subr.mxu0 0.0
        %2499 = vmatpush1.msra.mxu0 %v317
        %2500 = vmatprep.mubr.f32.mxu0 %v1926
        %2501 = vmatmul.mubr.f32.gmra.mrb[0].mxu0 %v1918
        %v2502 = vpop.f32.mrb[0].mxu0
        %v2503 = vadd.f32 0.0, %v2502
        %v2504 = vpop.f32.mrb[0].mxu0
        %2505 = vdwg.mxu0
        %2506 = vmatprep.subr.mxu0 0.0
        %2507 = vmatpush1.msra.mxu0 %v318
        %2508 = vmatprep.subr.mxu0 0.0
        %2509 = vmatpush1.msra.mxu0 %v319
        %2510 = vmatprep.subr.mxu0 0.0
        %2511 = vmatpush1.msra.mxu0 %v320
        %2512 = vmatprep.subr.mxu0 0.0
        %2513 = vmatpush1.msra.mxu0 %v321
        %2514 = vmatprep.subr.mxu0 0.0
        %2515 = vmatpush1.msra.mxu0 %v322
        %2516 = vmatprep.subr.mxu0 0.0
        %2517 = vmatpush1.msra.mxu0 %v323
        %2518 = vmatprep.subr.mxu0 0.0
        %2519 = vmatpush1.msra.mxu0 %v324
        %2520 = vmatprep.subr.mxu0 0.0
        %2521 = vmatpush1.msra.mxu0 %v325
        %2522 = vmatprep.subr.mxu0 0.0
        %2523 = vmatpush1.msra.mxu0 %v326
        %2524 = vmatprep.subr.mxu0 0.0
        %2525 = vmatpush1.msra.mxu0 %v327
        %2526 = vmatprep.subr.mxu0 0.0
        %2527 = vmatpush1.msra.mxu0 %v328
        %2528 = vmatprep.subr.mxu0 0.0
        %2529 = vmatpush1.msra.mxu0 %v329
        %2530 = vmatprep.subr.mxu0 0.0
        %2531 = vmatpush1.msra.mxu0 %v330
        %2532 = vmatprep.subr.mxu0 0.0
        %2533 = vmatpush1.msra.mxu0 %v331
        %2534 = vmatprep.subr.mxu0 0.0
        %2535 = vmatpush1.msra.mxu0 %v332
        %2536 = vmatprep.subr.mxu0 0.0
        %2537 = vmatpush1.msra.mxu0 %v333
        %2538 = vmatprep.subr.mxu0 0.0
        %2539 = vmatpush1.msra.mxu0 %v334
        %2540 = vmatprep.subr.mxu0 0.0
        %2541 = vmatpush1.msra.mxu0 %v335
        %2542 = vmatprep.subr.mxu0 0.0
        %2543 = vmatpush1.msra.mxu0 %v336
        %2544 = vmatprep.subr.mxu0 0.0
        %2545 = vmatpush1.msra.mxu0 %v337
        %2546 = vmatprep.subr.mxu0 0.0
        %2547 = vmatpush1.msra.mxu0 %v338
        %2548 = vmatprep.subr.mxu0 0.0
        %2549 = vmatpush1.msra.mxu0 %v339
        %2550 = vmatprep.subr.mxu0 0.0
        %2551 = vmatpush1.msra.mxu0 %v340
        %2552 = vmatprep.subr.mxu0 0.0
        %2553 = vmatpush1.msra.mxu0 %v341
        %2554 = vmatprep.subr.mxu0 0.0
        %2555 = vmatpush1.msra.mxu0 %v342
        %2556 = vmatprep.subr.mxu0 0.0
        %2557 = vmatpush1.msra.mxu0 %v343
        %2558 = vmatprep.subr.mxu0 0.0
        %2559 = vmatpush1.msra.mxu0 %v344
        %2560 = vmatprep.subr.mxu0 0.0
        %2561 = vmatpush1.msra.mxu0 %v345
        %2562 = vmatprep.subr.mxu0 0.0
        %2563 = vmatpush1.msra.mxu0 %v346
        %2564 = vmatprep.subr.mxu0 0.0
        %2565 = vmatpush1.msra.mxu0 %v347
        %2566 = vmatprep.subr.mxu0 0.0
        %2567 = vmatpush1.msra.mxu0 %v348
        %2568 = vmatprep.subr.mxu0 0.0
        %2569 = vmatpush1.msra.mxu0 %v349
        %2570 = vmatprep.mubr.f32.mxu0 %v1927
        %2571 = vmatmul.mubr.f32.gmra.mrb[0].mxu0 %v1925
        %v2572 = vpop.f32.mrb[0].mxu0
        %v2573 = vadd.f32 %v2503, %v2572
        %v2574 = vpop.f32.mrb[0].mxu0
        %2575 = vdwg.mxu0
        %2576 = vmatprep.subr.mxu0 0.0
        %2577 = vmatpush1.msra.mxu0 %v350
        %2578 = vmatprep.subr.mxu0 0.0
        %2579 = vmatpush1.msra.mxu0 %v351
        %2580 = vmatprep.subr.mxu0 0.0
        %2581 = vmatpush1.msra.mxu0 %v352
        %2582 = vmatprep.subr.mxu0 0.0
        %2583 = vmatpush1.msra.mxu0 %v353
        %2584 = vmatprep.subr.mxu0 0.0
        %2585 = vmatpush1.msra.mxu0 %v354
        %2586 = vmatprep.subr.mxu0 0.0
        %2587 = vmatpush1.msra.mxu0 %v355
        %2588 = vmatprep.subr.mxu0 0.0
        %2589 = vmatpush1.msra.mxu0 %v356
        %2590 = vmatprep.subr.mxu0 0.0
        %2591 = vmatpush1.msra.mxu0 %v357
        %2592 = vmatprep.subr.mxu0 0.0
        %2593 = vmatpush1.msra.mxu0 %v358
        %2594 = vmatprep.subr.mxu0 0.0
        %2595 = vmatpush1.msra.mxu0 %v359
        %2596 = vmatprep.subr.mxu0 0.0
        %2597 = vmatpush1.msra.mxu0 %v360
        %2598 = vmatprep.subr.mxu0 0.0
        %2599 = vmatpush1.msra.mxu0 %v361
        %2600 = vmatprep.subr.mxu0 0.0
        %2601 = vmatpush1.msra.mxu0 %v362
        %2602 = vmatprep.subr.mxu0 0.0
        %2603 = vmatpush1.msra.mxu0 %v363
        %2604 = vmatprep.subr.mxu0 0.0
        %2605 = vmatpush1.msra.mxu0 %v364
        %2606 = vmatprep.subr.mxu0 0.0
        %2607 = vmatpush1.msra.mxu0 %v365
        %2608 = vmatprep.subr.mxu0 0.0
        %2609 = vmatpush1.msra.mxu0 %v366
        %2610 = vmatprep.subr.mxu0 0.0
        %2611 = vmatpush1.msra.mxu0 %v367
        %2612 = vmatprep.subr.mxu0 0.0
        %2613 = vmatpush1.msra.mxu0 %v368
        %2614 = vmatprep.subr.mxu0 0.0
        %2615 = vmatpush1.msra.mxu0 %v369
        %2616 = vmatprep.subr.mxu0 0.0
        %2617 = vmatpush1.msra.mxu0 %v370
        %2618 = vmatprep.subr.mxu0 0.0
        %2619 = vmatpush1.msra.mxu0 %v371
        %2620 = vmatprep.subr.mxu0 0.0
        %2621 = vmatpush1.msra.mxu0 %v372
        %2622 = vmatprep.subr.mxu0 0.0
        %2623 = vmatpush1.msra.mxu0 %v373
        %2624 = vmatprep.subr.mxu0 0.0
        %2625 = vmatpush1.msra.mxu0 %v374
        %2626 = vmatprep.subr.mxu0 0.0
        %2627 = vmatpush1.msra.mxu0 %v375
        %2628 = vmatprep.subr.mxu0 0.0
        %2629 = vmatpush1.msra.mxu0 %v376
        %2630 = vmatprep.subr.mxu0 0.0
        %2631 = vmatpush1.msra.mxu0 %v377
        %2632 = vmatprep.subr.mxu0 0.0
        %2633 = vmatpush1.msra.mxu0 %v378
        %2634 = vmatprep.subr.mxu0 0.0
        %2635 = vmatpush1.msra.mxu0 %v379
        %2636 = vmatprep.subr.mxu0 0.0
        %2637 = vmatpush1.msra.mxu0 %v380
        %2638 = vmatprep.subr.mxu0 0.0
        %2639 = vmatpush1.msra.mxu0 %v381
        %2640 = vmatprep.mubr.f32.mxu0 %v1943
        %2641 = vmatmul.mubr.f32.gmra.mrb[0].mxu0 %v1935
        %v2642 = vpop.f32.mrb[0].mxu0
        %v2643 = vadd.f32 %v2573, %v2642
        %v2644 = vpop.f32.mrb[0].mxu0
        %2645 = vdwg.mxu0
        %2646 = vmatprep.subr.mxu0 0.0
        %2647 = vmatpush1.msra.mxu0 %v382
        %2648 = vmatprep.subr.mxu0 0.0
        %2649 = vmatpush1.msra.mxu0 %v383
        %2650 = vmatprep.subr.mxu0 0.0
        %2651 = vmatpush1.msra.mxu0 %v384
        %2652 = vmatprep.subr.mxu0 0.0
        %2653 = vmatpush1.msra.mxu0 %v385
        %2654 = vmatprep.subr.mxu0 0.0
        %2655 = vmatpush1.msra.mxu0 %v386
        %2656 = vmatprep.subr.mxu0 0.0
        %2657 = vmatpush1.msra.mxu0 %v387
        %2658 = vmatprep.subr.mxu0 0.0
        %2659 = vmatpush1.msra.mxu0 %v388
        %2660 = vmatprep.subr.mxu0 0.0
        %2661 = vmatpush1.msra.mxu0 %v389
        %2662 = vmatprep.subr.mxu0 0.0
        %2663 = vmatpush1.msra.mxu0 %v390
        %2664 = vmatprep.subr.mxu0 0.0
        %2665 = vmatpush1.msra.mxu0 %v391
        %2666 = vmatprep.subr.mxu0 0.0
        %2667 = vmatpush1.msra.mxu0 %v392
        %2668 = vmatprep.subr.mxu0 0.0
        %2669 = vmatpush1.msra.mxu0 %v393
        %2670 = vmatprep.subr.mxu0 0.0
        %2671 = vmatpush1.msra.mxu0 %v394
        %2672 = vmatprep.subr.mxu0 0.0
        %2673 = vmatpush1.msra.mxu0 %v395
        %2674 = vmatprep.subr.mxu0 0.0
        %2675 = vmatpush1.msra.mxu0 %v396
        %2676 = vmatprep.subr.mxu0 0.0
        %2677 = vmatpush1.msra.mxu0 %v397
        %2678 = vmatprep.subr.mxu0 0.0
        %2679 = vmatpush1.msra.mxu0 %v398
        %2680 = vmatprep.subr.mxu0 0.0
        %2681 = vmatpush1.msra.mxu0 %v399
        %2682 = vmatprep.subr.mxu0 0.0
        %2683 = vmatpush1.msra.mxu0 %v400
        %2684 = vmatprep.subr.mxu0 0.0
        %2685 = vmatpush1.msra.mxu0 %v401
        %2686 = vmatprep.subr.mxu0 0.0
        %2687 = vmatpush1.msra.mxu0 %v402
        %2688 = vmatprep.subr.mxu0 0.0
        %2689 = vmatpush1.msra.mxu0 %v403
        %2690 = vmatprep.subr.mxu0 0.0
        %2691 = vmatpush1.msra.mxu0 %v404
        %2692 = vmatprep.subr.mxu0 0.0
        %2693 = vmatpush1.msra.mxu0 %v405
        %2694 = vmatprep.subr.mxu0 0.0
        %2695 = vmatpush1.msra.mxu0 %v406
        %2696 = vmatprep.subr.mxu0 0.0
        %2697 = vmatpush1.msra.mxu0 %v407
        %2698 = vmatprep.subr.mxu0 0.0
        %2699 = vmatpush1.msra.mxu0 %v408
        %2700 = vmatprep.subr.mxu0 0.0
        %2701 = vmatpush1.msra.mxu0 %v409
        %2702 = vmatprep.subr.mxu0 0.0
        %2703 = vmatpush1.msra.mxu0 %v410
        %2704 = vmatprep.subr.mxu0 0.0
        %2705 = vmatpush1.msra.mxu0 %v411
        %2706 = vmatprep.subr.mxu0 0.0
        %2707 = vmatpush1.msra.mxu0 %v412
        %2708 = vmatprep.subr.mxu0 0.0
        %2709 = vmatpush1.msra.mxu0 %v413
        %2710 = vmatprep.mubr.f32.mxu0 %v1944
        %2711 = vmatmul.mubr.f32.gmra.mrb[0].mxu0 %v1942
        %v2712 = vpop.f32.mrb[0].mxu0
        %v2713 = vadd.f32 %v2643, %v2712
        %v2714 = vpop.f32.mrb[0].mxu0
        %2715 = vdwg.mxu0
        %2716 = vmatprep.subr.mxu0 0.0
        %2717 = vmatpush1.msra.mxu0 %v414
        %2718 = vmatprep.subr.mxu0 0.0
        %2719 = vmatpush1.msra.mxu0 %v415
        %2720 = vmatprep.subr.mxu0 0.0
        %2721 = vmatpush1.msra.mxu0 %v416
        %2722 = vmatprep.subr.mxu0 0.0
        %2723 = vmatpush1.msra.mxu0 %v417
        %2724 = vmatprep.subr.mxu0 0.0
        %2725 = vmatpush1.msra.mxu0 %v418
        %2726 = vmatprep.subr.mxu0 0.0
        %2727 = vmatpush1.msra.mxu0 %v419
        %2728 = vmatprep.subr.mxu0 0.0
        %2729 = vmatpush1.msra.mxu0 %v420
        %2730 = vmatprep.subr.mxu0 0.0
        %2731 = vmatpush1.msra.mxu0 %v421
        %2732 = vmatprep.subr.mxu0 0.0
        %2733 = vmatpush1.msra.mxu0 %v422
        %2734 = vmatprep.subr.mxu0 0.0
        %2735 = vmatpush1.msra.mxu0 %v423
        %2736 = vmatprep.subr.mxu0 0.0
        %2737 = vmatpush1.msra.mxu0 %v424
        %2738 = vmatprep.subr.mxu0 0.0
        %2739 = vmatpush1.msra.mxu0 %v425
        %2740 = vmatprep.subr.mxu0 0.0
        %2741 = vmatpush1.msra.mxu0 %v426
        %2742 = vmatprep.subr.mxu0 0.0
        %2743 = vmatpush1.msra.mxu0 %v427
        %2744 = vmatprep.subr.mxu0 0.0
        %2745 = vmatpush1.msra.mxu0 %v428
        %2746 = vmatprep.subr.mxu0 0.0
        %2747 = vmatpush1.msra.mxu0 %v429
        %2748 = vmatprep.subr.mxu0 0.0
        %2749 = vmatpush1.msra.mxu0 %v430
        %2750 = vmatprep.subr.mxu0 0.0
        %2751 = vmatpush1.msra.mxu0 %v431
        %2752 = vmatprep.subr.mxu0 0.0
        %2753 = vmatpush1.msra.mxu0 %v432
        %2754 = vmatprep.subr.mxu0 0.0
        %2755 = vmatpush1.msra.mxu0 %v433
        %2756 = vmatprep.subr.mxu0 0.0
        %2757 = vmatpush1.msra.mxu0 %v434
        %2758 = vmatprep.subr.mxu0 0.0
        %2759 = vmatpush1.msra.mxu0 %v435
        %2760 = vmatprep.subr.mxu0 0.0
        %2761 = vmatpush1.msra.mxu0 %v436
        %2762 = vmatprep.subr.mxu0 0.0
        %2763 = vmatpush1.msra.mxu0 %v437
        %2764 = vmatprep.subr.mxu0 0.0
        %2765 = vmatpush1.msra.mxu0 %v438
        %2766 = vmatprep.subr.mxu0 0.0
        %2767 = vmatpush1.msra.mxu0 %v439
        %2768 = vmatprep.subr.mxu0 0.0
        %2769 = vmatpush1.msra.mxu0 %v440
        %2770 = vmatprep.subr.mxu0 0.0
        %2771 = vmatpush1.msra.mxu0 %v441
        %2772 = vmatprep.subr.mxu0 0.0
        %2773 = vmatpush1.msra.mxu0 %v442
        %2774 = vmatprep.subr.mxu0 0.0
        %2775 = vmatpush1.msra.mxu0 %v443
        %2776 = vmatprep.subr.mxu0 0.0
        %2777 = vmatpush1.msra.mxu0 %v444
        %2778 = vmatprep.subr.mxu0 0.0
        %2779 = vmatpush1.msra.mxu0 %v445
        %2780 = vmatprep.mubr.f32.mxu0 %v1960
        %2781 = vmatmul.mubr.f32.gmra.mrb[0].mxu0 %v1952
        %v2782 = vpop.f32.mrb[0].mxu0
        %v2783 = vadd.f32 %v2713, %v2782
        %v2784 = vpop.f32.mrb[0].mxu0
        %2785 = vdwg.mxu0
        %2786 = vmatprep.subr.mxu0 0.0
        %2787 = vmatpush1.msra.mxu0 %v446
        %2788 = vmatprep.subr.mxu0 0.0
        %2789 = vmatpush1.msra.mxu0 %v447
        %2790 = vmatprep.subr.mxu0 0.0
        %2791 = vmatpush1.msra.mxu0 %v448
        %2792 = vmatprep.subr.mxu0 0.0
        %2793 = vmatpush1.msra.mxu0 %v449
        %2794 = vmatprep.subr.mxu0 0.0
        %2795 = vmatpush1.msra.mxu0 %v450
        %2796 = vmatprep.subr.mxu0 0.0
        %2797 = vmatpush1.msra.mxu0 %v451
        %2798 = vmatprep.subr.mxu0 0.0
        %2799 = vmatpush1.msra.mxu0 %v452
        %2800 = vmatprep.subr.mxu0 0.0
        %2801 = vmatpush1.msra.mxu0 %v453
        %2802 = vmatprep.subr.mxu0 0.0
        %2803 = vmatpush1.msra.mxu0 %v454
        %2804 = vmatprep.subr.mxu0 0.0
        %2805 = vmatpush1.msra.mxu0 %v455
        %2806 = vmatprep.subr.mxu0 0.0
        %2807 = vmatpush1.msra.mxu0 %v456
        %2808 = vmatprep.subr.mxu0 0.0
        %2809 = vmatpush1.msra.mxu0 %v457
        %2810 = vmatprep.subr.mxu0 0.0
        %2811 = vmatpush1.msra.mxu0 %v458
        %2812 = vmatprep.subr.mxu0 0.0
        %2813 = vmatpush1.msra.mxu0 %v459
        %2814 = vmatprep.subr.mxu0 0.0
        %2815 = vmatpush1.msra.mxu0 %v460
        %2816 = vmatprep.subr.mxu0 0.0
        %2817 = vmatpush1.msra.mxu0 %v461
        %2818 = vmatprep.subr.mxu0 0.0
        %2819 = vmatpush1.msra.mxu0 %v462
        %2820 = vmatprep.subr.mxu0 0.0
        %2821 = vmatpush1.msra.mxu0 %v463
        %2822 = vmatprep.subr.mxu0 0.0
        %2823 = vmatpush1.msra.mxu0 %v464
        %2824 = vmatprep.subr.mxu0 0.0
        %2825 = vmatpush1.msra.mxu0 %v465
        %2826 = vmatprep.subr.mxu0 0.0
        %2827 = vmatpush1.msra.mxu0 %v466
        %2828 = vmatprep.subr.mxu0 0.0
        %2829 = vmatpush1.msra.mxu0 %v467
        %2830 = vmatprep.subr.mxu0 0.0
        %2831 = vmatpush1.msra.mxu0 %v468
        %2832 = vmatprep.subr.mxu0 0.0
        %2833 = vmatpush1.msra.mxu0 %v469
        %2834 = vmatprep.subr.mxu0 0.0
        %2835 = vmatpush1.msra.mxu0 %v470
        %2836 = vmatprep.subr.mxu0 0.0
        %2837 = vmatpush1.msra.mxu0 %v471
        %2838 = vmatprep.subr.mxu0 0.0
        %2839 = vmatpush1.msra.mxu0 %v472
        %2840 = vmatprep.subr.mxu0 0.0
        %2841 = vmatpush1.msra.mxu0 %v473
        %2842 = vmatprep.subr.mxu0 0.0
        %2843 = vmatpush1.msra.mxu0 %v474
        %2844 = vmatprep.subr.mxu0 0.0
        %2845 = vmatpush1.msra.mxu0 %v475
        %2846 = vmatprep.subr.mxu0 0.0
        %2847 = vmatpush1.msra.mxu0 %v476
        %2848 = vmatprep.subr.mxu0 0.0
        %2849 = vmatpush1.msra.mxu0 %v477
        %2850 = vmatprep.mubr.f32.mxu0 %v1961
        %2851 = vmatmul.mubr.f32.gmra.mrb[0].mxu0 %v1959
        %v2852 = vpop.f32.mrb[0].mxu0
        %v2853 = vadd.f32 %v2783, %v2852
        %v2854 = vpop.f32.mrb[0].mxu0
        %2855 = vdwg.mxu0
        %2856 = vmatprep.subr.mxu0 0.0
        %2857 = vmatpush1.msra.mxu0 %v478
        %2858 = vmatprep.subr.mxu0 0.0
        %2859 = vmatpush1.msra.mxu0 %v479
        %2860 = vmatprep.subr.mxu0 0.0
        %2861 = vmatpush1.msra.mxu0 %v480
        %2862 = vmatprep.subr.mxu0 0.0
        %2863 = vmatpush1.msra.mxu0 %v481
        %2864 = vmatprep.subr.mxu0 0.0
        %2865 = vmatpush1.msra.mxu0 %v482
        %2866 = vmatprep.subr.mxu0 0.0
        %2867 = vmatpush1.msra.mxu0 %v483
        %2868 = vmatprep.subr.mxu0 0.0
        %2869 = vmatpush1.msra.mxu0 %v484
        %2870 = vmatprep.subr.mxu0 0.0
        %2871 = vmatpush1.msra.mxu0 %v485
        %2872 = vmatprep.subr.mxu0 0.0
        %2873 = vmatpush1.msra.mxu0 %v486
        %2874 = vmatprep.subr.mxu0 0.0
        %2875 = vmatpush1.msra.mxu0 %v487
        %2876 = vmatprep.subr.mxu0 0.0
        %2877 = vmatpush1.msra.mxu0 %v488
        %2878 = vmatprep.subr.mxu0 0.0
        %2879 = vmatpush1.msra.mxu0 %v489
        %2880 = vmatprep.subr.mxu0 0.0
        %2881 = vmatpush1.msra.mxu0 %v490
        %2882 = vmatprep.subr.mxu0 0.0
        %2883 = vmatpush1.msra.mxu0 %v491
        %2884 = vmatprep.subr.mxu0 0.0
        %2885 = vmatpush1.msra.mxu0 %v492
        %2886 = vmatprep.subr.mxu0 0.0
        %2887 = vmatpush1.msra.mxu0 %v493
        %2888 = vmatprep.subr.mxu0 0.0
        %2889 = vmatpush1.msra.mxu0 %v494
        %2890 = vmatprep.subr.mxu0 0.0
        %2891 = vmatpush1.msra.mxu0 %v495
        %2892 = vmatprep.subr.mxu0 0.0
        %2893 = vmatpush1.msra.mxu0 %v496
        %2894 = vmatprep.subr.mxu0 0.0
        %2895 = vmatpush1.msra.mxu0 %v497
        %2896 = vmatprep.subr.mxu0 0.0
        %2897 = vmatpush1.msra.mxu0 %v498
        %2898 = vmatprep.subr.mxu0 0.0
        %2899 = vmatpush1.msra.mxu0 %v499
        %2900 = vmatprep.subr.mxu0 0.0
        %2901 = vmatpush1.msra.mxu0 %v500
        %2902 = vmatprep.subr.mxu0 0.0
        %2903 = vmatpush1.msra.mxu0 %v501
        %2904 = vmatprep.subr.mxu0 0.0
        %2905 = vmatpush1.msra.mxu0 %v502
        %2906 = vmatprep.subr.mxu0 0.0
        %2907 = vmatpush1.msra.mxu0 %v503
        %2908 = vmatprep.subr.mxu0 0.0
        %2909 = vmatpush1.msra.mxu0 %v504
        %2910 = vmatprep.subr.mxu0 0.0
        %2911 = vmatpush1.msra.mxu0 %v505
        %2912 = vmatprep.subr.mxu0 0.0
        %2913 = vmatpush1.msra.mxu0 %v506
        %2914 = vmatprep.subr.mxu0 0.0
        %2915 = vmatpush1.msra.mxu0 %v507
        %2916 = vmatprep.subr.mxu0 0.0
        %2917 = vmatpush1.msra.mxu0 %v508
        %2918 = vmatprep.subr.mxu0 0.0
        %2919 = vmatpush1.msra.mxu0 %v509
        %2920 = vmatprep.mubr.f32.mxu0 %v1977
        %2921 = vmatmul.mubr.f32.gmra.mrb[0].mxu0 %v1969
        %v2922 = vpop.f32.mrb[0].mxu0
        %v2923 = vadd.f32 %v2853, %v2922
        %v2924 = vpop.f32.mrb[0].mxu0
        %2925 = vdwg.mxu0
        %2926 = vmatprep.subr.mxu0 0.0
        %2927 = vmatpush1.msra.mxu0 %v510
        %2928 = vmatprep.subr.mxu0 0.0
        %2929 = vmatpush1.msra.mxu0 %v511
        %2930 = vmatprep.subr.mxu0 0.0
        %2931 = vmatpush1.msra.mxu0 %v512
        %2932 = vmatprep.subr.mxu0 0.0
        %2933 = vmatpush1.msra.mxu0 %v513
        %2934 = vmatprep.subr.mxu0 0.0
        %2935 = vmatpush1.msra.mxu0 %v514
        %2936 = vmatprep.subr.mxu0 0.0
        %2937 = vmatpush1.msra.mxu0 %v515
        %2938 = vmatprep.subr.mxu0 0.0
        %2939 = vmatpush1.msra.mxu0 %v516
        %2940 = vmatprep.subr.mxu0 0.0
        %2941 = vmatpush1.msra.mxu0 %v517
        %2942 = vmatprep.subr.mxu0 0.0
        %2943 = vmatpush1.msra.mxu0 %v518
        %2944 = vmatprep.subr.mxu0 0.0
        %2945 = vmatpush1.msra.mxu0 %v519
        %2946 = vmatprep.subr.mxu0 0.0
        %2947 = vmatpush1.msra.mxu0 %v520
        %2948 = vmatprep.subr.mxu0 0.0
        %2949 = vmatpush1.msra.mxu0 %v521
        %2950 = vmatprep.subr.mxu0 0.0
        %2951 = vmatpush1.msra.mxu0 %v522
        %2952 = vmatprep.subr.mxu0 0.0
        %2953 = vmatpush1.msra.mxu0 %v523
        %2954 = vmatprep.subr.mxu0 0.0
        %2955 = vmatpush1.msra.mxu0 %v524
        %2956 = vmatprep.subr.mxu0 0.0
        %2957 = vmatpush1.msra.mxu0 %v525
        %2958 = vmatprep.subr.mxu0 0.0
        %2959 = vmatpush1.msra.mxu0 %v526
        %2960 = vmatprep.subr.mxu0 0.0
        %2961 = vmatpush1.msra.mxu0 %v527
        %2962 = vmatprep.subr.mxu0 0.0
        %2963 = vmatpush1.msra.mxu0 %v528
        %2964 = vmatprep.subr.mxu0 0.0
        %2965 = vmatpush1.msra.mxu0 %v529
        %2966 = vmatprep.subr.mxu0 0.0
        %2967 = vmatpush1.msra.mxu0 %v530
        %2968 = vmatprep.subr.mxu0 0.0
        %2969 = vmatpush1.msra.mxu0 %v531
        %2970 = vmatprep.subr.mxu0 0.0
        %2971 = vmatpush1.msra.mxu0 %v532
        %2972 = vmatprep.subr.mxu0 0.0
        %2973 = vmatpush1.msra.mxu0 %v533
        %2974 = vmatprep.subr.mxu0 0.0
        %2975 = vmatpush1.msra.mxu0 %v534
        %2976 = vmatprep.subr.mxu0 0.0
        %2977 = vmatpush1.msra.mxu0 %v535
        %2978 = vmatprep.subr.mxu0 0.0
        %2979 = vmatpush1.msra.mxu0 %v536
        %2980 = vmatprep.subr.mxu0 0.0
        %2981 = vmatpush1.msra.mxu0 %v537
        %2982 = vmatprep.subr.mxu0 0.0
        %2983 = vmatpush1.msra.mxu0 %v538
        %2984 = vmatprep.subr.mxu0 0.0
        %2985 = vmatpush1.msra.mxu0 %v539
        %2986 = vmatprep.subr.mxu0 0.0
        %2987 = vmatpush1.msra.mxu0 %v540
        %2988 = vmatprep.subr.mxu0 0.0
        %2989 = vmatpush1.msra.mxu0 %v541
        %2990 = vmatprep.mubr.f32.mxu0 %v1978
        %2991 = vmatmul.mubr.f32.gmra.mrb[0].mxu0 %v1976
        %v2992 = vpop.f32.mrb[0].mxu0
        %v2993 = vadd.f32 %v2923, %v2992
        %v2994 = vpop.f32.mrb[0].mxu0
        %2995 = vdwg.mxu0
        %2996 = vmatprep.subr.mxu0 0.0
        %2997 = vmatpush1.msra.mxu0 %v542
        %2998 = vmatprep.subr.mxu0 0.0
        %2999 = vmatpush1.msra.mxu0 %v543
        %3000 = vmatprep.subr.mxu0 0.0
        %3001 = vmatpush1.msra.mxu0 %v544
        %3002 = vmatprep.subr.mxu0 0.0
        %3003 = vmatpush1.msra.mxu0 %v545
        %3004 = vmatprep.subr.mxu0 0.0
        %3005 = vmatpush1.msra.mxu0 %v546
        %3006 = vmatprep.subr.mxu0 0.0
        %3007 = vmatpush1.msra.mxu0 %v547
        %3008 = vmatprep.subr.mxu0 0.0
        %3009 = vmatpush1.msra.mxu0 %v548
        %3010 = vmatprep.subr.mxu0 0.0
        %3011 = vmatpush1.msra.mxu0 %v549
        %3012 = vmatprep.subr.mxu0 0.0
        %3013 = vmatpush1.msra.mxu0 %v550
        %3014 = vmatprep.subr.mxu0 0.0
        %3015 = vmatpush1.msra.mxu0 %v551
        %3016 = vmatprep.subr.mxu0 0.0
        %3017 = vmatpush1.msra.mxu0 %v552
        %3018 = vmatprep.subr.mxu0 0.0
        %3019 = vmatpush1.msra.mxu0 %v553
        %3020 = vmatprep.subr.mxu0 0.0
        %3021 = vmatpush1.msra.mxu0 %v554
        %3022 = vmatprep.subr.mxu0 0.0
        %3023 = vmatpush1.msra.mxu0 %v555
        %3024 = vmatprep.subr.mxu0 0.0
        %3025 = vmatpush1.msra.mxu0 %v556
        %3026 = vmatprep.subr.mxu0 0.0
        %3027 = vmatpush1.msra.mxu0 %v557
        %3028 = vmatprep.subr.mxu0 0.0
        %3029 = vmatpush1.msra.mxu0 %v558
        %3030 = vmatprep.subr.mxu0 0.0
        %3031 = vmatpush1.msra.mxu0 %v559
        %3032 = vmatprep.subr.mxu0 0.0
        %3033 = vmatpush1.msra.mxu0 %v560
        %3034 = vmatprep.subr.mxu0 0.0
        %3035 = vmatpush1.msra.mxu0 %v561
        %3036 = vmatprep.subr.mxu0 0.0
        %3037 = vmatpush1.msra.mxu0 %v562
        %3038 = vmatprep.subr.mxu0 0.0
        %3039 = vmatpush1.msra.mxu0 %v563
        %3040 = vmatprep.subr.mxu0 0.0
        %3041 = vmatpush1.msra.mxu0 %v564
        %3042 = vmatprep.subr.mxu0 0.0
        %3043 = vmatpush1.msra.mxu0 %v565
        %3044 = vmatprep.subr.mxu0 0.0
        %3045 = vmatpush1.msra.mxu0 %v566
        %3046 = vmatprep.subr.mxu0 0.0
        %3047 = vmatpush1.msra.mxu0 %v567
        %3048 = vmatprep.subr.mxu0 0.0
        %3049 = vmatpush1.msra.mxu0 %v568
        %3050 = vmatprep.subr.mxu0 0.0
        %3051 = vmatpush1.msra.mxu0 %v569
        %3052 = vmatprep.subr.mxu0 0.0
        %3053 = vmatpush1.msra.mxu0 %v570
        %3054 = vmatprep.subr.mxu0 0.0
        %3055 = vmatpush1.msra.mxu0 %v571
        %3056 = vmatprep.subr.mxu0 0.0
        %3057 = vmatpush1.msra.mxu0 %v572
        %3058 = vmatprep.subr.mxu0 0.0
        %3059 = vmatpush1.msra.mxu0 %v573
        %3060 = vmatprep.mubr.f32.mxu0 %v1994
        %3061 = vmatmul.mubr.f32.gmra.mrb[0].mxu0 %v1986
        %v3062 = vpop.f32.mrb[0].mxu0
        %v3063 = vadd.f32 %v2993, %v3062
        %v3064 = vpop.f32.mrb[0].mxu0
        %3065 = vdwg.mxu0
        %3066 = vmatprep.subr.mxu0 0.0
        %3067 = vmatpush1.msra.mxu0 %v574
        %3068 = vmatprep.subr.mxu0 0.0
        %3069 = vmatpush1.msra.mxu0 %v575
        %3070 = vmatprep.subr.mxu0 0.0
        %3071 = vmatpush1.msra.mxu0 %v576
        %3072 = vmatprep.subr.mxu0 0.0
        %3073 = vmatpush1.msra.mxu0 %v577
        %3074 = vmatprep.subr.mxu0 0.0
        %3075 = vmatpush1.msra.mxu0 %v578
        %3076 = vmatprep.subr.mxu0 0.0
        %3077 = vmatpush1.msra.mxu0 %v579
        %3078 = vmatprep.subr.mxu0 0.0
        %3079 = vmatpush1.msra.mxu0 %v580
        %3080 = vmatprep.subr.mxu0 0.0
        %3081 = vmatpush1.msra.mxu0 %v581
        %3082 = vmatprep.subr.mxu0 0.0
        %3083 = vmatpush1.msra.mxu0 %v582
        %3084 = vmatprep.subr.mxu0 0.0
        %3085 = vmatpush1.msra.mxu0 %v583
        %3086 = vmatprep.subr.mxu0 0.0
        %3087 = vmatpush1.msra.mxu0 %v584
        %3088 = vmatprep.subr.mxu0 0.0
        %3089 = vmatpush1.msra.mxu0 %v585
        %3090 = vmatprep.subr.mxu0 0.0
        %3091 = vmatpush1.msra.mxu0 %v586
        %3092 = vmatprep.subr.mxu0 0.0
        %3093 = vmatpush1.msra.mxu0 %v587
        %3094 = vmatprep.subr.mxu0 0.0
        %3095 = vmatpush1.msra.mxu0 %v588
        %3096 = vmatprep.subr.mxu0 0.0
        %3097 = vmatpush1.msra.mxu0 %v589
        %3098 = vmatprep.subr.mxu0 0.0
        %3099 = vmatpush1.msra.mxu0 %v590
        %3100 = vmatprep.subr.mxu0 0.0
        %3101 = vmatpush1.msra.mxu0 %v591
        %3102 = vmatprep.subr.mxu0 0.0
        %3103 = vmatpush1.msra.mxu0 %v592
        %3104 = vmatprep.subr.mxu0 0.0
        %3105 = vmatpush1.msra.mxu0 %v593
        %3106 = vmatprep.subr.mxu0 0.0
        %3107 = vmatpush1.msra.mxu0 %v594
        %3108 = vmatprep.subr.mxu0 0.0
        %3109 = vmatpush1.msra.mxu0 %v595
        %3110 = vmatprep.subr.mxu0 0.0
        %3111 = vmatpush1.msra.mxu0 %v596
        %3112 = vmatprep.subr.mxu0 0.0
        %3113 = vmatpush1.msra.mxu0 %v597
        %3114 = vmatprep.subr.mxu0 0.0
        %3115 = vmatpush1.msra.mxu0 %v598
        %3116 = vmatprep.subr.mxu0 0.0
        %3117 = vmatpush1.msra.mxu0 %v599
        %3118 = vmatprep.subr.mxu0 0.0
        %3119 = vmatpush1.msra.mxu0 %v600
        %3120 = vmatprep.subr.mxu0 0.0
        %3121 = vmatpush1.msra.mxu0 %v601
        %3122 = vmatprep.subr.mxu0 0.0
        %3123 = vmatpush1.msra.mxu0 %v602
        %3124 = vmatprep.subr.mxu0 0.0
        %3125 = vmatpush1.msra.mxu0 %v603
        %3126 = vmatprep.subr.mxu0 0.0
        %3127 = vmatpush1.msra.mxu0 %v604
        %3128 = vmatprep.subr.mxu0 0.0
        %3129 = vmatpush1.msra.mxu0 %v605
        %3130 = vmatprep.mubr.f32.mxu0 %v1995
        %3131 = vmatmul.mubr.f32.gmra.mrb[0].mxu0 %v1993
        %v3132 = vpop.f32.mrb[0].mxu0
        %v3133 = vadd.f32 %v3063, %v3132
        %v3134 = vpop.f32.mrb[0].mxu0
        %3135 = vdwg.mxu0
        %3136 = vmatprep.subr.mxu0 0.0
        %3137 = vmatpush1.msra.mxu0 %v606
        %3138 = vmatprep.subr.mxu0 0.0
        %3139 = vmatpush1.msra.mxu0 %v607
        %3140 = vmatprep.subr.mxu0 0.0
        %3141 = vmatpush1.msra.mxu0 %v608
        %3142 = vmatprep.subr.mxu0 0.0
        %3143 = vmatpush1.msra.mxu0 %v609
        %3144 = vmatprep.subr.mxu0 0.0
        %3145 = vmatpush1.msra.mxu0 %v610
        %3146 = vmatprep.subr.mxu0 0.0
        %3147 = vmatpush1.msra.mxu0 %v611
        %3148 = vmatprep.subr.mxu0 0.0
        %3149 = vmatpush1.msra.mxu0 %v612
        %3150 = vmatprep.subr.mxu0 0.0
        %3151 = vmatpush1.msra.mxu0 %v613
        %3152 = vmatprep.subr.mxu0 0.0
        %3153 = vmatpush1.msra.mxu0 %v614
        %3154 = vmatprep.subr.mxu0 0.0
        %3155 = vmatpush1.msra.mxu0 %v615
        %3156 = vmatprep.subr.mxu0 0.0
        %3157 = vmatpush1.msra.mxu0 %v616
        %3158 = vmatprep.subr.mxu0 0.0
        %3159 = vmatpush1.msra.mxu0 %v617
        %3160 = vmatprep.subr.mxu0 0.0
        %3161 = vmatpush1.msra.mxu0 %v618
        %3162 = vmatprep.subr.mxu0 0.0
        %3163 = vmatpush1.msra.mxu0 %v619
        %3164 = vmatprep.subr.mxu0 0.0
        %3165 = vmatpush1.msra.mxu0 %v620
        %3166 = vmatprep.subr.mxu0 0.0
        %3167 = vmatpush1.msra.mxu0 %v621
        %3168 = vmatprep.subr.mxu0 0.0
        %3169 = vmatpush1.msra.mxu0 %v622
        %3170 = vmatprep.subr.mxu0 0.0
        %3171 = vmatpush1.msra.mxu0 %v623
        %3172 = vmatprep.subr.mxu0 0.0
        %3173 = vmatpush1.msra.mxu0 %v624
        %3174 = vmatprep.subr.mxu0 0.0
        %3175 = vmatpush1.msra.mxu0 %v625
        %3176 = vmatprep.subr.mxu0 0.0
        %3177 = vmatpush1.msra.mxu0 %v626
        %3178 = vmatprep.subr.mxu0 0.0
        %3179 = vmatpush1.msra.mxu0 %v627
        %3180 = vmatprep.subr.mxu0 0.0
        %3181 = vmatpush1.msra.mxu0 %v628
        %3182 = vmatprep.subr.mxu0 0.0
        %3183 = vmatpush1.msra.mxu0 %v629
        %3184 = vmatprep.subr.mxu0 0.0
        %3185 = vmatpush1.msra.mxu0 %v630
        %3186 = vmatprep.subr.mxu0 0.0
        %3187 = vmatpush1.msra.mxu0 %v631
        %3188 = vmatprep.subr.mxu0 0.0
        %3189 = vmatpush1.msra.mxu0 %v632
        %3190 = vmatprep.subr.mxu0 0.0
        %3191 = vmatpush1.msra.mxu0 %v633
        %3192 = vmatprep.subr.mxu0 0.0
        %3193 = vmatpush1.msra.mxu0 %v634
        %3194 = vmatprep.subr.mxu0 0.0
        %3195 = vmatpush1.msra.mxu0 %v635
        %3196 = vmatprep.subr.mxu0 0.0
        %3197 = vmatpush1.msra.mxu0 %v636
        %3198 = vmatprep.subr.mxu0 0.0
        %3199 = vmatpush1.msra.mxu0 %v637
        %3200 = vmatprep.mubr.f32.mxu0 %v2011
        %3201 = vmatmul.mubr.f32.gmra.mrb[0].mxu0 %v2003
        %v3202 = vpop.f32.mrb[0].mxu0
        %v3203 = vadd.f32 %v3133, %v3202
        %v3204 = vpop.f32.mrb[0].mxu0
        %3205 = vdwg.mxu0
        %3206 = vmatprep.subr.mxu0 0.0
        %3207 = vmatpush1.msra.mxu0 %v638
        %3208 = vmatprep.subr.mxu0 0.0
        %3209 = vmatpush1.msra.mxu0 %v639
        %3210 = vmatprep.subr.mxu0 0.0
        %3211 = vmatpush1.msra.mxu0 %v640
        %3212 = vmatprep.subr.mxu0 0.0
        %3213 = vmatpush1.msra.mxu0 %v641
        %3214 = vmatprep.subr.mxu0 0.0
        %3215 = vmatpush1.msra.mxu0 %v642
        %3216 = vmatprep.subr.mxu0 0.0
        %3217 = vmatpush1.msra.mxu0 %v643
        %3218 = vmatprep.subr.mxu0 0.0
        %3219 = vmatpush1.msra.mxu0 %v644
        %3220 = vmatprep.subr.mxu0 0.0
        %3221 = vmatpush1.msra.mxu0 %v645
        %3222 = vmatprep.subr.mxu0 0.0
        %3223 = vmatpush1.msra.mxu0 %v646
        %3224 = vmatprep.subr.mxu0 0.0
        %3225 = vmatpush1.msra.mxu0 %v647
        %3226 = vmatprep.subr.mxu0 0.0
        %3227 = vmatpush1.msra.mxu0 %v648
        %3228 = vmatprep.subr.mxu0 0.0
        %3229 = vmatpush1.msra.mxu0 %v649
        %3230 = vmatprep.subr.mxu0 0.0
        %3231 = vmatpush1.msra.mxu0 %v650
        %3232 = vmatprep.subr.mxu0 0.0
        %3233 = vmatpush1.msra.mxu0 %v651
        %3234 = vmatprep.subr.mxu0 0.0
        %3235 = vmatpush1.msra.mxu0 %v652
        %3236 = vmatprep.subr.mxu0 0.0
        %3237 = vmatpush1.msra.mxu0 %v653
        %3238 = vmatprep.subr.mxu0 0.0
        %3239 = vmatpush1.msra.mxu0 %v654
        %3240 = vmatprep.subr.mxu0 0.0
        %3241 = vmatpush1.msra.mxu0 %v655
        %3242 = vmatprep.subr.mxu0 0.0
        %3243 = vmatpush1.msra.mxu0 %v656
        %3244 = vmatprep.subr.mxu0 0.0
        %3245 = vmatpush1.msra.mxu0 %v657
        %3246 = vmatprep.subr.mxu0 0.0
        %3247 = vmatpush1.msra.mxu0 %v658
        %3248 = vmatprep.subr.mxu0 0.0
        %3249 = vmatpush1.msra.mxu0 %v659
        %3250 = vmatprep.subr.mxu0 0.0
        %3251 = vmatpush1.msra.mxu0 %v660
        %3252 = vmatprep.subr.mxu0 0.0
        %3253 = vmatpush1.msra.mxu0 %v661
        %3254 = vmatprep.subr.mxu0 0.0
        %3255 = vmatpush1.msra.mxu0 %v662
        %3256 = vmatprep.subr.mxu0 0.0
        %3257 = vmatpush1.msra.mxu0 %v663
        %3258 = vmatprep.subr.mxu0 0.0
        %3259 = vmatpush1.msra.mxu0 %v664
        %3260 = vmatprep.subr.mxu0 0.0
        %3261 = vmatpush1.msra.mxu0 %v665
        %3262 = vmatprep.subr.mxu0 0.0
        %3263 = vmatpush1.msra.mxu0 %v666
        %3264 = vmatprep.subr.mxu0 0.0
        %3265 = vmatpush1.msra.mxu0 %v667
        %3266 = vmatprep.subr.mxu0 0.0
        %3267 = vmatpush1.msra.mxu0 %v668
        %3268 = vmatprep.subr.mxu0 0.0
        %3269 = vmatpush1.msra.mxu0 %v669
        %3270 = vmatprep.mubr.f32.mxu0 %v2012
        %3271 = vmatmul.mubr.f32.gmra.mrb[0].mxu0 %v2010
        %v3272 = vpop.f32.mrb[0].mxu0
        %v3273 = vadd.f32 %v3203, %v3272
        %v3274 = vpop.f32.mrb[0].mxu0
        %3275 = vdwg.mxu0
        %3276 = vmatprep.subr.mxu0 0.0
        %3277 = vmatpush1.msra.mxu0 %v670
        %3278 = vmatprep.subr.mxu0 0.0
        %3279 = vmatpush1.msra.mxu0 %v671
        %3280 = vmatprep.subr.mxu0 0.0
        %3281 = vmatpush1.msra.mxu0 %v672
        %3282 = vmatprep.subr.mxu0 0.0
        %3283 = vmatpush1.msra.mxu0 %v673
        %3284 = vmatprep.subr.mxu0 0.0
        %3285 = vmatpush1.msra.mxu0 %v674
        %3286 = vmatprep.subr.mxu0 0.0
        %3287 = vmatpush1.msra.mxu0 %v675
        %3288 = vmatprep.subr.mxu0 0.0
        %3289 = vmatpush1.msra.mxu0 %v676
        %3290 = vmatprep.subr.mxu0 0.0
        %3291 = vmatpush1.msra.mxu0 %v677
        %3292 = vmatprep.subr.mxu0 0.0
        %3293 = vmatpush1.msra.mxu0 %v678
        %3294 = vmatprep.subr.mxu0 0.0
        %3295 = vmatpush1.msra.mxu0 %v679
        %3296 = vmatprep.subr.mxu0 0.0
        %3297 = vmatpush1.msra.mxu0 %v680
        %3298 = vmatprep.subr.mxu0 0.0
        %3299 = vmatpush1.msra.mxu0 %v681
        %3300 = vmatprep.subr.mxu0 0.0
        %3301 = vmatpush1.msra.mxu0 %v682
        %3302 = vmatprep.subr.mxu0 0.0
        %3303 = vmatpush1.msra.mxu0 %v683
        %3304 = vmatprep.subr.mxu0 0.0
        %3305 = vmatpush1.msra.mxu0 %v684
        %3306 = vmatprep.subr.mxu0 0.0
        %3307 = vmatpush1.msra.mxu0 %v685
        %3308 = vmatprep.subr.mxu0 0.0
        %3309 = vmatpush1.msra.mxu0 %v686
        %3310 = vmatprep.subr.mxu0 0.0
        %3311 = vmatpush1.msra.mxu0 %v687
        %3312 = vmatprep.subr.mxu0 0.0
        %3313 = vmatpush1.msra.mxu0 %v688
        %3314 = vmatprep.subr.mxu0 0.0
        %3315 = vmatpush1.msra.mxu0 %v689
        %3316 = vmatprep.subr.mxu0 0.0
        %3317 = vmatpush1.msra.mxu0 %v690
        %3318 = vmatprep.subr.mxu0 0.0
        %3319 = vmatpush1.msra.mxu0 %v691
        %3320 = vmatprep.subr.mxu0 0.0
        %3321 = vmatpush1.msra.mxu0 %v692
        %3322 = vmatprep.subr.mxu0 0.0
        %3323 = vmatpush1.msra.mxu0 %v693
        %3324 = vmatprep.subr.mxu0 0.0
        %3325 = vmatpush1.msra.mxu0 %v694
        %3326 = vmatprep.subr.mxu0 0.0
        %3327 = vmatpush1.msra.mxu0 %v695
        %3328 = vmatprep.subr.mxu0 0.0
        %3329 = vmatpush1.msra.mxu0 %v696
        %3330 = vmatprep.subr.mxu0 0.0
        %3331 = vmatpush1.msra.mxu0 %v697
        %3332 = vmatprep.subr.mxu0 0.0
        %3333 = vmatpush1.msra.mxu0 %v698
        %3334 = vmatprep.subr.mxu0 0.0
        %3335 = vmatpush1.msra.mxu0 %v699
        %3336 = vmatprep.subr.mxu0 0.0
        %3337 = vmatpush1.msra.mxu0 %v700
        %3338 = vmatprep.subr.mxu0 0.0
        %3339 = vmatpush1.msra.mxu0 %v701
        %3340 = vmatprep.mubr.f32.mxu0 %v2028
        %3341 = vmatmul.mubr.f32.gmra.mrb[0].mxu0 %v2020
        %v3342 = vpop.f32.mrb[0].mxu0
        %v3343 = vadd.f32 %v3273, %v3342
        %v3344 = vpop.f32.mrb[0].mxu0
        %3345 = vdwg.mxu0
        %3346 = vmatprep.subr.mxu0 0.0
        %3347 = vmatpush1.msra.mxu0 %v702
        %3348 = vmatprep.subr.mxu0 0.0
        %3349 = vmatpush1.msra.mxu0 %v703
        %3350 = vmatprep.subr.mxu0 0.0
        %3351 = vmatpush1.msra.mxu0 %v704
        %3352 = vmatprep.subr.mxu0 0.0
        %3353 = vmatpush1.msra.mxu0 %v705
        %3354 = vmatprep.subr.mxu0 0.0
        %3355 = vmatpush1.msra.mxu0 %v706
        %3356 = vmatprep.subr.mxu0 0.0
        %3357 = vmatpush1.msra.mxu0 %v707
        %3358 = vmatprep.subr.mxu0 0.0
        %3359 = vmatpush1.msra.mxu0 %v708
        %3360 = vmatprep.subr.mxu0 0.0
        %3361 = vmatpush1.msra.mxu0 %v709
        %3362 = vmatprep.subr.mxu0 0.0
        %3363 = vmatpush1.msra.mxu0 %v710
        %3364 = vmatprep.subr.mxu0 0.0
        %3365 = vmatpush1.msra.mxu0 %v711
        %3366 = vmatprep.subr.mxu0 0.0
        %3367 = vmatpush1.msra.mxu0 %v712
        %3368 = vmatprep.subr.mxu0 0.0
        %3369 = vmatpush1.msra.mxu0 %v713
        %3370 = vmatprep.subr.mxu0 0.0
        %3371 = vmatpush1.msra.mxu0 %v714
        %3372 = vmatprep.subr.mxu0 0.0
        %3373 = vmatpush1.msra.mxu0 %v715
        %3374 = vmatprep.subr.mxu0 0.0
        %3375 = vmatpush1.msra.mxu0 %v716
        %3376 = vmatprep.subr.mxu0 0.0
        %3377 = vmatpush1.msra.mxu0 %v717
        %3378 = vmatprep.subr.mxu0 0.0
        %3379 = vmatpush1.msra.mxu0 %v718
        %3380 = vmatprep.subr.mxu0 0.0
        %3381 = vmatpush1.msra.mxu0 %v719
        %3382 = vmatprep.subr.mxu0 0.0
        %3383 = vmatpush1.msra.mxu0 %v720
        %3384 = vmatprep.subr.mxu0 0.0
        %3385 = vmatpush1.msra.mxu0 %v721
        %3386 = vmatprep.subr.mxu0 0.0
        %3387 = vmatpush1.msra.mxu0 %v722
        %3388 = vmatprep.subr.mxu0 0.0
        %3389 = vmatpush1.msra.mxu0 %v723
        %3390 = vmatprep.subr.mxu0 0.0
        %3391 = vmatpush1.msra.mxu0 %v724
        %3392 = vmatprep.subr.mxu0 0.0
        %3393 = vmatpush1.msra.mxu0 %v725
        %3394 = vmatprep.subr.mxu0 0.0
        %3395 = vmatpush1.msra.mxu0 %v726
        %3396 = vmatprep.subr.mxu0 0.0
        %3397 = vmatpush1.msra.mxu0 %v727
        %3398 = vmatprep.subr.mxu0 0.0
        %3399 = vmatpush1.msra.mxu0 %v728
        %3400 = vmatprep.subr.mxu0 0.0
        %3401 = vmatpush1.msra.mxu0 %v729
        %3402 = vmatprep.subr.mxu0 0.0
        %3403 = vmatpush1.msra.mxu0 %v730
        %3404 = vmatprep.subr.mxu0 0.0
        %3405 = vmatpush1.msra.mxu0 %v731
        %3406 = vmatprep.subr.mxu0 0.0
        %3407 = vmatpush1.msra.mxu0 %v732
        %3408 = vmatprep.subr.mxu0 0.0
        %3409 = vmatpush1.msra.mxu0 %v733
        %3410 = vmatprep.mubr.f32.mxu0 %v2029
        %3411 = vmatmul.mubr.f32.gmra.mrb[0].mxu0 %v2027
        %v3412 = vpop.f32.mrb[0].mxu0
        %v3413 = vadd.f32 %v3343, %v3412
        %v3414 = vpop.f32.mrb[0].mxu0
        %3415 = vdwg.mxu0
        %3416 = vmatprep.subr.mxu0 0.0
        %3417 = vmatpush1.msra.mxu0 %v734
        %3418 = vmatprep.subr.mxu0 0.0
        %3419 = vmatpush1.msra.mxu0 %v735
        %3420 = vmatprep.subr.mxu0 0.0
        %3421 = vmatpush1.msra.mxu0 %v736
        %3422 = vmatprep.subr.mxu0 0.0
        %3423 = vmatpush1.msra.mxu0 %v737
        %3424 = vmatprep.subr.mxu0 0.0
        %3425 = vmatpush1.msra.mxu0 %v738
        %3426 = vmatprep.subr.mxu0 0.0
        %3427 = vmatpush1.msra.mxu0 %v739
        %3428 = vmatprep.subr.mxu0 0.0
        %3429 = vmatpush1.msra.mxu0 %v740
        %3430 = vmatprep.subr.mxu0 0.0
        %3431 = vmatpush1.msra.mxu0 %v741
        %3432 = vmatprep.subr.mxu0 0.0
        %3433 = vmatpush1.msra.mxu0 %v742
        %3434 = vmatprep.subr.mxu0 0.0
        %3435 = vmatpush1.msra.mxu0 %v743
        %3436 = vmatprep.subr.mxu0 0.0
        %3437 = vmatpush1.msra.mxu0 %v744
        %3438 = vmatprep.subr.mxu0 0.0
        %3439 = vmatpush1.msra.mxu0 %v745
        %3440 = vmatprep.subr.mxu0 0.0
        %3441 = vmatpush1.msra.mxu0 %v746
        %3442 = vmatprep.subr.mxu0 0.0
        %3443 = vmatpush1.msra.mxu0 %v747
        %3444 = vmatprep.subr.mxu0 0.0
        %3445 = vmatpush1.msra.mxu0 %v748
        %3446 = vmatprep.subr.mxu0 0.0
        %3447 = vmatpush1.msra.mxu0 %v749
        %3448 = vmatprep.subr.mxu0 0.0
        %3449 = vmatpush1.msra.mxu0 %v750
        %3450 = vmatprep.subr.mxu0 0.0
        %3451 = vmatpush1.msra.mxu0 %v751
        %3452 = vmatprep.subr.mxu0 0.0
        %3453 = vmatpush1.msra.mxu0 %v752
        %3454 = vmatprep.subr.mxu0 0.0
        %3455 = vmatpush1.msra.mxu0 %v753
        %3456 = vmatprep.subr.mxu0 0.0
        %3457 = vmatpush1.msra.mxu0 %v754
        %3458 = vmatprep.subr.mxu0 0.0
        %3459 = vmatpush1.msra.mxu0 %v755
        %3460 = vmatprep.subr.mxu0 0.0
        %3461 = vmatpush1.msra.mxu0 %v756
        %3462 = vmatprep.subr.mxu0 0.0
        %3463 = vmatpush1.msra.mxu0 %v757
        %3464 = vmatprep.subr.mxu0 0.0
        %3465 = vmatpush1.msra.mxu0 %v758
        %3466 = vmatprep.subr.mxu0 0.0
        %3467 = vmatpush1.msra.mxu0 %v759
        %3468 = vmatprep.subr.mxu0 0.0
        %3469 = vmatpush1.msra.mxu0 %v760
        %3470 = vmatprep.subr.mxu0 0.0
        %3471 = vmatpush1.msra.mxu0 %v761
        %3472 = vmatprep.subr.mxu0 0.0
        %3473 = vmatpush1.msra.mxu0 %v762
        %3474 = vmatprep.subr.mxu0 0.0
        %3475 = vmatpush1.msra.mxu0 %v763
        %3476 = vmatprep.subr.mxu0 0.0
        %3477 = vmatpush1.msra.mxu0 %v764
        %3478 = vmatprep.subr.mxu0 0.0
        %3479 = vmatpush1.msra.mxu0 %v765
        %3480 = vmatprep.mubr.f32.mxu0 %v2045
        %3481 = vmatmul.mubr.f32.gmra.mrb[0].mxu0 %v2037
        %v3482 = vpop.f32.mrb[0].mxu0
        %v3483 = vadd.f32 %v3413, %v3482
        %v3484 = vpop.f32.mrb[0].mxu0
        %3485 = vdwg.mxu0
        %3486 = vmatprep.subr.mxu0 0.0
        %3487 = vmatpush1.msra.mxu0 %v766
        %3488 = vmatprep.subr.mxu0 0.0
        %3489 = vmatpush1.msra.mxu0 %v767
        %3490 = vmatprep.subr.mxu0 0.0
        %3491 = vmatpush1.msra.mxu0 %v768
        %3492 = vmatprep.subr.mxu0 0.0
        %3493 = vmatpush1.msra.mxu0 %v769
        %3494 = vmatprep.subr.mxu0 0.0
        %3495 = vmatpush1.msra.mxu0 %v770
        %3496 = vmatprep.subr.mxu0 0.0
        %3497 = vmatpush1.msra.mxu0 %v771
        %3498 = vmatprep.subr.mxu0 0.0
        %3499 = vmatpush1.msra.mxu0 %v772
        %3500 = vmatprep.subr.mxu0 0.0
        %3501 = vmatpush1.msra.mxu0 %v773
        %3502 = vmatprep.subr.mxu0 0.0
        %3503 = vmatpush1.msra.mxu0 %v774
        %3504 = vmatprep.subr.mxu0 0.0
        %3505 = vmatpush1.msra.mxu0 %v775
        %3506 = vmatprep.subr.mxu0 0.0
        %3507 = vmatpush1.msra.mxu0 %v776
        %3508 = vmatprep.subr.mxu0 0.0
        %3509 = vmatpush1.msra.mxu0 %v777
        %3510 = vmatprep.subr.mxu0 0.0
        %3511 = vmatpush1.msra.mxu0 %v778
        %3512 = vmatprep.subr.mxu0 0.0
        %3513 = vmatpush1.msra.mxu0 %v779
        %3514 = vmatprep.subr.mxu0 0.0
        %3515 = vmatpush1.msra.mxu0 %v780
        %3516 = vmatprep.subr.mxu0 0.0
        %3517 = vmatpush1.msra.mxu0 %v781
        %3518 = vmatprep.subr.mxu0 0.0
        %3519 = vmatpush1.msra.mxu0 %v782
        %3520 = vmatprep.subr.mxu0 0.0
        %3521 = vmatpush1.msra.mxu0 %v783
        %3522 = vmatprep.subr.mxu0 0.0
        %3523 = vmatpush1.msra.mxu0 %v784
        %3524 = vmatprep.subr.mxu0 0.0
        %3525 = vmatpush1.msra.mxu0 %v785
        %3526 = vmatprep.subr.mxu0 0.0
        %3527 = vmatpush1.msra.mxu0 %v786
        %3528 = vmatprep.subr.mxu0 0.0
        %3529 = vmatpush1.msra.mxu0 %v787
        %3530 = vmatprep.subr.mxu0 0.0
        %3531 = vmatpush1.msra.mxu0 %v788
        %3532 = vmatprep.subr.mxu0 0.0
        %3533 = vmatpush1.msra.mxu0 %v789
        %3534 = vmatprep.subr.mxu0 0.0
        %3535 = vmatpush1.msra.mxu0 %v790
        %3536 = vmatprep.subr.mxu0 0.0
        %3537 = vmatpush1.msra.mxu0 %v791
        %3538 = vmatprep.subr.mxu0 0.0
        %3539 = vmatpush1.msra.mxu0 %v792
        %3540 = vmatprep.subr.mxu0 0.0
        %3541 = vmatpush1.msra.mxu0 %v793
        %3542 = vmatprep.subr.mxu0 0.0
        %3543 = vmatpush1.msra.mxu0 %v794
        %3544 = vmatprep.subr.mxu0 0.0
        %3545 = vmatpush1.msra.mxu0 %v795
        %3546 = vmatprep.subr.mxu0 0.0
        %3547 = vmatpush1.msra.mxu0 %v796
        %3548 = vmatprep.subr.mxu0 0.0
        %3549 = vmatpush1.msra.mxu0 %v797
        %3550 = vmatprep.mubr.f32.mxu0 %v2046
        %3551 = vmatmul.mubr.f32.gmra.mrb[0].mxu0 %v2044
        %v3552 = vpop.f32.mrb[0].mxu0
        %v3553 = vadd.f32 %v3483, %v3552
        %v3554 = vpop.f32.mrb[0].mxu0
        %3555 = vdwg.mxu0
        %3556 = vmatprep.subr.mxu0 0.0
        %3557 = vmatpush1.msra.mxu0 %v798
        %3558 = vmatprep.subr.mxu0 0.0
        %3559 = vmatpush1.msra.mxu0 %v799
        %3560 = vmatprep.subr.mxu0 0.0
        %3561 = vmatpush1.msra.mxu0 %v800
        %3562 = vmatprep.subr.mxu0 0.0
        %3563 = vmatpush1.msra.mxu0 %v801
        %3564 = vmatprep.subr.mxu0 0.0
        %3565 = vmatpush1.msra.mxu0 %v802
        %3566 = vmatprep.subr.mxu0 0.0
        %3567 = vmatpush1.msra.mxu0 %v803
        %3568 = vmatprep.subr.mxu0 0.0
        %3569 = vmatpush1.msra.mxu0 %v804
        %3570 = vmatprep.subr.mxu0 0.0
        %3571 = vmatpush1.msra.mxu0 %v805
        %3572 = vmatprep.subr.mxu0 0.0
        %3573 = vmatpush1.msra.mxu0 %v806
        %3574 = vmatprep.subr.mxu0 0.0
        %3575 = vmatpush1.msra.mxu0 %v807
        %3576 = vmatprep.subr.mxu0 0.0
        %3577 = vmatpush1.msra.mxu0 %v808
        %3578 = vmatprep.subr.mxu0 0.0
        %3579 = vmatpush1.msra.mxu0 %v809
        %3580 = vmatprep.subr.mxu0 0.0
        %3581 = vmatpush1.msra.mxu0 %v810
        %3582 = vmatprep.subr.mxu0 0.0
        %3583 = vmatpush1.msra.mxu0 %v811
        %3584 = vmatprep.subr.mxu0 0.0
        %3585 = vmatpush1.msra.mxu0 %v812
        %3586 = vmatprep.subr.mxu0 0.0
        %3587 = vmatpush1.msra.mxu0 %v813
        %3588 = vmatprep.subr.mxu0 0.0
        %3589 = vmatpush1.msra.mxu0 %v814
        %3590 = vmatprep.subr.mxu0 0.0
        %3591 = vmatpush1.msra.mxu0 %v815
        %3592 = vmatprep.subr.mxu0 0.0
        %3593 = vmatpush1.msra.mxu0 %v816
        %3594 = vmatprep.subr.mxu0 0.0
        %3595 = vmatpush1.msra.mxu0 %v817
        %3596 = vmatprep.subr.mxu0 0.0
        %3597 = vmatpush1.msra.mxu0 %v818
        %3598 = vmatprep.subr.mxu0 0.0
        %3599 = vmatpush1.msra.mxu0 %v819
        %3600 = vmatprep.subr.mxu0 0.0
        %3601 = vmatpush1.msra.mxu0 %v820
        %3602 = vmatprep.subr.mxu0 0.0
        %3603 = vmatpush1.msra.mxu0 %v821
        %3604 = vmatprep.subr.mxu0 0.0
        %3605 = vmatpush1.msra.mxu0 %v822
        %3606 = vmatprep.subr.mxu0 0.0
        %3607 = vmatpush1.msra.mxu0 %v823
        %3608 = vmatprep.subr.mxu0 0.0
        %3609 = vmatpush1.msra.mxu0 %v824
        %3610 = vmatprep.subr.mxu0 0.0
        %3611 = vmatpush1.msra.mxu0 %v825
        %3612 = vmatprep.subr.mxu0 0.0
        %3613 = vmatpush1.msra.mxu0 %v826
        %3614 = vmatprep.subr.mxu0 0.0
        %3615 = vmatpush1.msra.mxu0 %v827
        %3616 = vmatprep.subr.mxu0 0.0
        %3617 = vmatpush1.msra.mxu0 %v828
        %3618 = vmatprep.subr.mxu0 0.0
        %3619 = vmatpush1.msra.mxu0 %v829
        %3620 = vmatprep.mubr.f32.mxu0 %v2062
        %3621 = vmatmul.mubr.f32.gmra.mrb[0].mxu0 %v2054
        %v3622 = vpop.f32.mrb[0].mxu0
        %v3623 = vadd.f32 %v3553, %v3622
        %v3624 = vpop.f32.mrb[0].mxu0
        %3625 = vdwg.mxu0
        %3626 = vmatprep.subr.mxu0 0.0
        %3627 = vmatpush1.msra.mxu0 %v830
        %3628 = vmatprep.subr.mxu0 0.0
        %3629 = vmatpush1.msra.mxu0 %v831
        %3630 = vmatprep.subr.mxu0 0.0
        %3631 = vmatpush1.msra.mxu0 %v832
        %3632 = vmatprep.subr.mxu0 0.0
        %3633 = vmatpush1.msra.mxu0 %v833
        %3634 = vmatprep.subr.mxu0 0.0
        %3635 = vmatpush1.msra.mxu0 %v834
        %3636 = vmatprep.subr.mxu0 0.0
        %3637 = vmatpush1.msra.mxu0 %v835
        %3638 = vmatprep.subr.mxu0 0.0
        %3639 = vmatpush1.msra.mxu0 %v836
        %3640 = vmatprep.subr.mxu0 0.0
        %3641 = vmatpush1.msra.mxu0 %v837
        %3642 = vmatprep.subr.mxu0 0.0
        %3643 = vmatpush1.msra.mxu0 %v838
        %3644 = vmatprep.subr.mxu0 0.0
        %3645 = vmatpush1.msra.mxu0 %v839
        %3646 = vmatprep.subr.mxu0 0.0
        %3647 = vmatpush1.msra.mxu0 %v840
        %3648 = vmatprep.subr.mxu0 0.0
        %3649 = vmatpush1.msra.mxu0 %v841
        %3650 = vmatprep.subr.mxu0 0.0
        %3651 = vmatpush1.msra.mxu0 %v842
        %3652 = vmatprep.subr.mxu0 0.0
        %3653 = vmatpush1.msra.mxu0 %v843
        %3654 = vmatprep.subr.mxu0 0.0
        %3655 = vmatpush1.msra.mxu0 %v844
        %3656 = vmatprep.subr.mxu0 0.0
        %3657 = vmatpush1.msra.mxu0 %v845
        %3658 = vmatprep.subr.mxu0 0.0
        %3659 = vmatpush1.msra.mxu0 %v846
        %3660 = vmatprep.subr.mxu0 0.0
        %3661 = vmatpush1.msra.mxu0 %v847
        %3662 = vmatprep.subr.mxu0 0.0
        %3663 = vmatpush1.msra.mxu0 %v848
        %3664 = vmatprep.subr.mxu0 0.0
        %3665 = vmatpush1.msra.mxu0 %v849
        %3666 = vmatprep.subr.mxu0 0.0
        %3667 = vmatpush1.msra.mxu0 %v850
        %3668 = vmatprep.subr.mxu0 0.0
        %3669 = vmatpush1.msra.mxu0 %v851
        %3670 = vmatprep.subr.mxu0 0.0
        %3671 = vmatpush1.msra.mxu0 %v852
        %3672 = vmatprep.subr.mxu0 0.0
        %3673 = vmatpush1.msra.mxu0 %v853
        %3674 = vmatprep.subr.mxu0 0.0
        %3675 = vmatpush1.msra.mxu0 %v854
        %3676 = vmatprep.subr.mxu0 0.0
        %3677 = vmatpush1.msra.mxu0 %v855
        %3678 = vmatprep.subr.mxu0 0.0
        %3679 = vmatpush1.msra.mxu0 %v856
        %3680 = vmatprep.subr.mxu0 0.0
        %3681 = vmatpush1.msra.mxu0 %v857
        %3682 = vmatprep.subr.mxu0 0.0
        %3683 = vmatpush1.msra.mxu0 %v858
        %3684 = vmatprep.subr.mxu0 0.0
        %3685 = vmatpush1.msra.mxu0 %v859
        %3686 = vmatprep.subr.mxu0 0.0
        %3687 = vmatpush1.msra.mxu0 %v860
        %3688 = vmatprep.subr.mxu0 0.0
        %3689 = vmatpush1.msra.mxu0 %v861
        %3690 = vmatprep.mubr.f32.mxu0 %v2063
        %3691 = vmatmul.mubr.f32.gmra.mrb[0].mxu0 %v2061
        %v3692 = vpop.f32.mrb[0].mxu0
        %v3693 = vadd.f32 %v3623, %v3692
        %v3694 = vpop.f32.mrb[0].mxu0
        %3695 = vdwg.mxu0
        %3696 = vmatprep.subr.mxu0 0.0
        %3697 = vmatpush1.msra.mxu0 %v862
        %3698 = vmatprep.subr.mxu0 0.0
        %3699 = vmatpush1.msra.mxu0 %v863
        %3700 = vmatprep.subr.mxu0 0.0
        %3701 = vmatpush1.msra.mxu0 %v864
        %3702 = vmatprep.subr.mxu0 0.0
        %3703 = vmatpush1.msra.mxu0 %v865
        %3704 = vmatprep.subr.mxu0 0.0
        %3705 = vmatpush1.msra.mxu0 %v866
        %3706 = vmatprep.subr.mxu0 0.0
        %3707 = vmatpush1.msra.mxu0 %v867
        %3708 = vmatprep.subr.mxu0 0.0
        %3709 = vmatpush1.msra.mxu0 %v868
        %3710 = vmatprep.subr.mxu0 0.0
        %3711 = vmatpush1.msra.mxu0 %v869
        %3712 = vmatprep.subr.mxu0 0.0
        %3713 = vmatpush1.msra.mxu0 %v870
        %3714 = vmatprep.subr.mxu0 0.0
        %3715 = vmatpush1.msra.mxu0 %v871
        %3716 = vmatprep.subr.mxu0 0.0
        %3717 = vmatpush1.msra.mxu0 %v872
        %3718 = vmatprep.subr.mxu0 0.0
        %3719 = vmatpush1.msra.mxu0 %v873
        %3720 = vmatprep.subr.mxu0 0.0
        %3721 = vmatpush1.msra.mxu0 %v874
        %3722 = vmatprep.subr.mxu0 0.0
        %3723 = vmatpush1.msra.mxu0 %v875
        %3724 = vmatprep.subr.mxu0 0.0
        %3725 = vmatpush1.msra.mxu0 %v876
        %3726 = vmatprep.subr.mxu0 0.0
        %3727 = vmatpush1.msra.mxu0 %v877
        %3728 = vmatprep.subr.mxu0 0.0
        %3729 = vmatpush1.msra.mxu0 %v878
        %3730 = vmatprep.subr.mxu0 0.0
        %3731 = vmatpush1.msra.mxu0 %v879
        %3732 = vmatprep.subr.mxu0 0.0
        %3733 = vmatpush1.msra.mxu0 %v880
        %3734 = vmatprep.subr.mxu0 0.0
        %3735 = vmatpush1.msra.mxu0 %v881
        %3736 = vmatprep.subr.mxu0 0.0
        %3737 = vmatpush1.msra.mxu0 %v882
        %3738 = vmatprep.subr.mxu0 0.0
        %3739 = vmatpush1.msra.mxu0 %v883
        %3740 = vmatprep.subr.mxu0 0.0
        %3741 = vmatpush1.msra.mxu0 %v884
        %3742 = vmatprep.subr.mxu0 0.0
        %3743 = vmatpush1.msra.mxu0 %v885
        %3744 = vmatprep.subr.mxu0 0.0
        %3745 = vmatpush1.msra.mxu0 %v886
        %3746 = vmatprep.subr.mxu0 0.0
        %3747 = vmatpush1.msra.mxu0 %v887
        %3748 = vmatprep.subr.mxu0 0.0
        %3749 = vmatpush1.msra.mxu0 %v888
        %3750 = vmatprep.subr.mxu0 0.0
        %3751 = vmatpush1.msra.mxu0 %v889
        %3752 = vmatprep.subr.mxu0 0.0
        %3753 = vmatpush1.msra.mxu0 %v890
        %3754 = vmatprep.subr.mxu0 0.0
        %3755 = vmatpush1.msra.mxu0 %v891
        %3756 = vmatprep.subr.mxu0 0.0
        %3757 = vmatpush1.msra.mxu0 %v892
        %3758 = vmatprep.subr.mxu0 0.0
        %3759 = vmatpush1.msra.mxu0 %v893
        %3760 = vmatprep.mubr.f32.mxu0 %v2079
        %3761 = vmatmul.mubr.f32.gmra.mrb[0].mxu0 %v2071
        %v3762 = vpop.f32.mrb[0].mxu0
        %v3763 = vadd.f32 %v3693, %v3762
        %v3764 = vpop.f32.mrb[0].mxu0
        %3765 = vdwg.mxu0
        %3766 = vmatprep.subr.mxu0 0.0
        %3767 = vmatpush1.msra.mxu0 %v894
        %3768 = vmatprep.subr.mxu0 0.0
        %3769 = vmatpush1.msra.mxu0 %v895
        %3770 = vmatprep.subr.mxu0 0.0
        %3771 = vmatpush1.msra.mxu0 %v896
        %3772 = vmatprep.subr.mxu0 0.0
        %3773 = vmatpush1.msra.mxu0 %v897
        %3774 = vmatprep.subr.mxu0 0.0
        %3775 = vmatpush1.msra.mxu0 %v898
        %3776 = vmatprep.subr.mxu0 0.0
        %3777 = vmatpush1.msra.mxu0 %v899
        %3778 = vmatprep.subr.mxu0 0.0
        %3779 = vmatpush1.msra.mxu0 %v900
        %3780 = vmatprep.subr.mxu0 0.0
        %3781 = vmatpush1.msra.mxu0 %v901
        %3782 = vmatprep.subr.mxu0 0.0
        %3783 = vmatpush1.msra.mxu0 %v902
        %3784 = vmatprep.subr.mxu0 0.0
        %3785 = vmatpush1.msra.mxu0 %v903
        %3786 = vmatprep.subr.mxu0 0.0
        %3787 = vmatpush1.msra.mxu0 %v904
        %3788 = vmatprep.subr.mxu0 0.0
        %3789 = vmatpush1.msra.mxu0 %v905
        %3790 = vmatprep.subr.mxu0 0.0
        %3791 = vmatpush1.msra.mxu0 %v906
        %3792 = vmatprep.subr.mxu0 0.0
        %3793 = vmatpush1.msra.mxu0 %v907
        %3794 = vmatprep.subr.mxu0 0.0
        %3795 = vmatpush1.msra.mxu0 %v908
        %3796 = vmatprep.subr.mxu0 0.0
        %3797 = vmatpush1.msra.mxu0 %v909
        %3798 = vmatprep.subr.mxu0 0.0
        %3799 = vmatpush1.msra.mxu0 %v910
        %3800 = vmatprep.subr.mxu0 0.0
        %3801 = vmatpush1.msra.mxu0 %v911
        %3802 = vmatprep.subr.mxu0 0.0
        %3803 = vmatpush1.msra.mxu0 %v912
        %3804 = vmatprep.subr.mxu0 0.0
        %3805 = vmatpush1.msra.mxu0 %v913
        %3806 = vmatprep.subr.mxu0 0.0
        %3807 = vmatpush1.msra.mxu0 %v914
        %3808 = vmatprep.subr.mxu0 0.0
        %3809 = vmatpush1.msra.mxu0 %v915
        %3810 = vmatprep.subr.mxu0 0.0
        %3811 = vmatpush1.msra.mxu0 %v916
        %3812 = vmatprep.subr.mxu0 0.0
        %3813 = vmatpush1.msra.mxu0 %v917
        %3814 = vmatprep.subr.mxu0 0.0
        %3815 = vmatpush1.msra.mxu0 %v918
        %3816 = vmatprep.subr.mxu0 0.0
        %3817 = vmatpush1.msra.mxu0 %v919
        %3818 = vmatprep.subr.mxu0 0.0
        %3819 = vmatpush1.msra.mxu0 %v920
        %3820 = vmatprep.subr.mxu0 0.0
        %3821 = vmatpush1.msra.mxu0 %v921
        %3822 = vmatprep.subr.mxu0 0.0
        %3823 = vmatpush1.msra.mxu0 %v922
        %3824 = vmatprep.subr.mxu0 0.0
        %3825 = vmatpush1.msra.mxu0 %v923
        %3826 = vmatprep.subr.mxu0 0.0
        %3827 = vmatpush1.msra.mxu0 %v924
        %3828 = vmatprep.subr.mxu0 0.0
        %3829 = vmatpush1.msra.mxu0 %v925
        %3830 = vmatprep.mubr.f32.mxu0 %v2080
        %3831 = vmatmul.mubr.f32.gmra.mrb[0].mxu0 %v2078
        %v3832 = vpop.f32.mrb[0].mxu0
        %v3833 = vadd.f32 %v3763, %v3832
        %v3834 = vpop.f32.mrb[0].mxu0
        %3835 = vdwg.mxu0
        %3836 = vmatprep.subr.mxu0 0.0
        %3837 = vmatpush1.msra.mxu0 %v926
        %3838 = vmatprep.subr.mxu0 0.0
        %3839 = vmatpush1.msra.mxu0 %v927
        %3840 = vmatprep.subr.mxu0 0.0
        %3841 = vmatpush1.msra.mxu0 %v928
        %3842 = vmatprep.subr.mxu0 0.0
        %3843 = vmatpush1.msra.mxu0 %v929
        %3844 = vmatprep.subr.mxu0 0.0
        %3845 = vmatpush1.msra.mxu0 %v930
        %3846 = vmatprep.subr.mxu0 0.0
        %3847 = vmatpush1.msra.mxu0 %v931
        %3848 = vmatprep.subr.mxu0 0.0
        %3849 = vmatpush1.msra.mxu0 %v932
        %3850 = vmatprep.subr.mxu0 0.0
        %3851 = vmatpush1.msra.mxu0 %v933
        %3852 = vmatprep.subr.mxu0 0.0
        %3853 = vmatpush1.msra.mxu0 %v934
        %3854 = vmatprep.subr.mxu0 0.0
        %3855 = vmatpush1.msra.mxu0 %v935
        %3856 = vmatprep.subr.mxu0 0.0
        %3857 = vmatpush1.msra.mxu0 %v936
        %3858 = vmatprep.subr.mxu0 0.0
        %3859 = vmatpush1.msra.mxu0 %v937
        %3860 = vmatprep.subr.mxu0 0.0
        %3861 = vmatpush1.msra.mxu0 %v938
        %3862 = vmatprep.subr.mxu0 0.0
        %3863 = vmatpush1.msra.mxu0 %v939
        %3864 = vmatprep.subr.mxu0 0.0
        %3865 = vmatpush1.msra.mxu0 %v940
        %3866 = vmatprep.subr.mxu0 0.0
        %3867 = vmatpush1.msra.mxu0 %v941
        %3868 = vmatprep.subr.mxu0 0.0
        %3869 = vmatpush1.msra.mxu0 %v942
        %3870 = vmatprep.subr.mxu0 0.0
        %3871 = vmatpush1.msra.mxu0 %v943
        %3872 = vmatprep.subr.mxu0 0.0
        %3873 = vmatpush1.msra.mxu0 %v944
        %3874 = vmatprep.subr.mxu0 0.0
        %3875 = vmatpush1.msra.mxu0 %v945
        %3876 = vmatprep.subr.mxu0 0.0
        %3877 = vmatpush1.msra.mxu0 %v946
        %3878 = vmatprep.subr.mxu0 0.0
        %3879 = vmatpush1.msra.mxu0 %v947
        %3880 = vmatprep.subr.mxu0 0.0
        %3881 = vmatpush1.msra.mxu0 %v948
        %3882 = vmatprep.subr.mxu0 0.0
        %3883 = vmatpush1.msra.mxu0 %v949
        %3884 = vmatprep.subr.mxu0 0.0
        %3885 = vmatpush1.msra.mxu0 %v950
        %3886 = vmatprep.subr.mxu0 0.0
        %3887 = vmatpush1.msra.mxu0 %v951
        %3888 = vmatprep.subr.mxu0 0.0
        %3889 = vmatpush1.msra.mxu0 %v952
        %3890 = vmatprep.subr.mxu0 0.0
        %3891 = vmatpush1.msra.mxu0 %v953
        %3892 = vmatprep.subr.mxu0 0.0
        %3893 = vmatpush1.msra.mxu0 %v954
        %3894 = vmatprep.subr.mxu0 0.0
        %3895 = vmatpush1.msra.mxu0 %v955
        %3896 = vmatprep.subr.mxu0 0.0
        %3897 = vmatpush1.msra.mxu0 %v956
        %3898 = vmatprep.subr.mxu0 0.0
        %3899 = vmatpush1.msra.mxu0 %v957
        %3900 = vmatprep.mubr.f32.mxu0 %v2096
        %3901 = vmatmul.mubr.f32.gmra.mrb[0].mxu0 %v2088
        %v3902 = vpop.f32.mrb[0].mxu0
        %v3903 = vadd.f32 %v3833, %v3902
        %v3904 = vpop.f32.mrb[0].mxu0
        %3905 = vdwg.mxu0
        %3906 = vmatprep.subr.mxu0 0.0
        %3907 = vmatpush1.msra.mxu0 %v958
        %3908 = vmatprep.subr.mxu0 0.0
        %3909 = vmatpush1.msra.mxu0 %v959
        %3910 = vmatprep.subr.mxu0 0.0
        %3911 = vmatpush1.msra.mxu0 %v960
        %3912 = vmatprep.subr.mxu0 0.0
        %3913 = vmatpush1.msra.mxu0 %v961
        %3914 = vmatprep.subr.mxu0 0.0
        %3915 = vmatpush1.msra.mxu0 %v962
        %3916 = vmatprep.subr.mxu0 0.0
        %3917 = vmatpush1.msra.mxu0 %v963
        %3918 = vmatprep.subr.mxu0 0.0
        %3919 = vmatpush1.msra.mxu0 %v964
        %3920 = vmatprep.subr.mxu0 0.0
        %3921 = vmatpush1.msra.mxu0 %v965
        %3922 = vmatprep.subr.mxu0 0.0
        %3923 = vmatpush1.msra.mxu0 %v966
        %3924 = vmatprep.subr.mxu0 0.0
        %3925 = vmatpush1.msra.mxu0 %v967
        %3926 = vmatprep.subr.mxu0 0.0
        %3927 = vmatpush1.msra.mxu0 %v968
        %3928 = vmatprep.subr.mxu0 0.0
        %3929 = vmatpush1.msra.mxu0 %v969
        %3930 = vmatprep.subr.mxu0 0.0
        %3931 = vmatpush1.msra.mxu0 %v970
        %3932 = vmatprep.subr.mxu0 0.0
        %3933 = vmatpush1.msra.mxu0 %v971
        %3934 = vmatprep.subr.mxu0 0.0
        %3935 = vmatpush1.msra.mxu0 %v972
        %3936 = vmatprep.subr.mxu0 0.0
        %3937 = vmatpush1.msra.mxu0 %v973
        %3938 = vmatprep.subr.mxu0 0.0
        %3939 = vmatpush1.msra.mxu0 %v974
        %3940 = vmatprep.subr.mxu0 0.0
        %3941 = vmatpush1.msra.mxu0 %v975
        %3942 = vmatprep.subr.mxu0 0.0
        %3943 = vmatpush1.msra.mxu0 %v976
        %3944 = vmatprep.subr.mxu0 0.0
        %3945 = vmatpush1.msra.mxu0 %v977
        %3946 = vmatprep.subr.mxu0 0.0
        %3947 = vmatpush1.msra.mxu0 %v978
        %3948 = vmatprep.subr.mxu0 0.0
        %3949 = vmatpush1.msra.mxu0 %v979
        %3950 = vmatprep.subr.mxu0 0.0
        %3951 = vmatpush1.msra.mxu0 %v980
        %3952 = vmatprep.subr.mxu0 0.0
        %3953 = vmatpush1.msra.mxu0 %v981
        %3954 = vmatprep.subr.mxu0 0.0
        %3955 = vmatpush1.msra.mxu0 %v982
        %3956 = vmatprep.subr.mxu0 0.0
        %3957 = vmatpush1.msra.mxu0 %v983
        %3958 = vmatprep.subr.mxu0 0.0
        %3959 = vmatpush1.msra.mxu0 %v984
        %3960 = vmatprep.subr.mxu0 0.0
        %3961 = vmatpush1.msra.mxu0 %v985
        %3962 = vmatprep.subr.mxu0 0.0
        %3963 = vmatpush1.msra.mxu0 %v986
        %3964 = vmatprep.subr.mxu0 0.0
        %3965 = vmatpush1.msra.mxu0 %v987
        %3966 = vmatprep.subr.mxu0 0.0
        %3967 = vmatpush1.msra.mxu0 %v988
        %3968 = vmatprep.subr.mxu0 0.0
        %3969 = vmatpush1.msra.mxu0 %v989
        %3970 = vmatprep.mubr.f32.mxu0 %v2097
        %3971 = vmatmul.mubr.f32.gmra.mrb[0].mxu0 %v2095
        %v3972 = vpop.f32.mrb[0].mxu0
        %v3973 = vadd.f32 %v3903, %v3972
        %v3974 = vpop.f32.mrb[0].mxu0
        %3975 = vdwg.mxu0
        %3976 = vmatprep.subr.mxu0 0.0
        %3977 = vmatpush1.msra.mxu0 %v990
        %3978 = vmatprep.subr.mxu0 0.0
        %3979 = vmatpush1.msra.mxu0 %v991
        %3980 = vmatprep.subr.mxu0 0.0
        %3981 = vmatpush1.msra.mxu0 %v992
        %3982 = vmatprep.subr.mxu0 0.0
        %3983 = vmatpush1.msra.mxu0 %v993
        %3984 = vmatprep.subr.mxu0 0.0
        %3985 = vmatpush1.msra.mxu0 %v994
        %3986 = vmatprep.subr.mxu0 0.0
        %3987 = vmatpush1.msra.mxu0 %v995
        %3988 = vmatprep.subr.mxu0 0.0
        %3989 = vmatpush1.msra.mxu0 %v996
        %3990 = vmatprep.subr.mxu0 0.0
        %3991 = vmatpush1.msra.mxu0 %v997
        %3992 = vmatprep.subr.mxu0 0.0
        %3993 = vmatpush1.msra.mxu0 %v998
        %3994 = vmatprep.subr.mxu0 0.0
        %3995 = vmatpush1.msra.mxu0 %v999
        %3996 = vmatprep.subr.mxu0 0.0
        %3997 = vmatpush1.msra.mxu0 %v1000
        %3998 = vmatprep.subr.mxu0 0.0
        %3999 = vmatpush1.msra.mxu0 %v1001
        %4000 = vmatprep.subr.mxu0 0.0
        %4001 = vmatpush1.msra.mxu0 %v1002
        %4002 = vmatprep.subr.mxu0 0.0
        %4003 = vmatpush1.msra.mxu0 %v1003
        %4004 = vmatprep.subr.mxu0 0.0
        %4005 = vmatpush1.msra.mxu0 %v1004
        %4006 = vmatprep.subr.mxu0 0.0
        %4007 = vmatpush1.msra.mxu0 %v1005
        %4008 = vmatprep.subr.mxu0 0.0
        %4009 = vmatpush1.msra.mxu0 %v1006
        %4010 = vmatprep.subr.mxu0 0.0
        %4011 = vmatpush1.msra.mxu0 %v1007
        %4012 = vmatprep.subr.mxu0 0.0
        %4013 = vmatpush1.msra.mxu0 %v1008
        %4014 = vmatprep.subr.mxu0 0.0
        %4015 = vmatpush1.msra.mxu0 %v1009
        %4016 = vmatprep.subr.mxu0 0.0
        %4017 = vmatpush1.msra.mxu0 %v1010
        %4018 = vmatprep.subr.mxu0 0.0
        %4019 = vmatpush1.msra.mxu0 %v1011
        %4020 = vmatprep.subr.mxu0 0.0
        %4021 = vmatpush1.msra.mxu0 %v1012
        %4022 = vmatprep.subr.mxu0 0.0
        %4023 = vmatpush1.msra.mxu0 %v1013
        %4024 = vmatprep.subr.mxu0 0.0
        %4025 = vmatpush1.msra.mxu0 %v1014
        %4026 = vmatprep.subr.mxu0 0.0
        %4027 = vmatpush1.msra.mxu0 %v1015
        %4028 = vmatprep.subr.mxu0 0.0
        %4029 = vmatpush1.msra.mxu0 %v1016
        %4030 = vmatprep.subr.mxu0 0.0
        %4031 = vmatpush1.msra.mxu0 %v1017
        %4032 = vmatprep.subr.mxu0 0.0
        %4033 = vmatpush1.msra.mxu0 %v1018
        %4034 = vmatprep.subr.mxu0 0.0
        %4035 = vmatpush1.msra.mxu0 %v1019
        %4036 = vmatprep.subr.mxu0 0.0
        %4037 = vmatpush1.msra.mxu0 %v1020
        %4038 = vmatprep.subr.mxu0 0.0
        %4039 = vmatpush1.msra.mxu0 %v1021
        %4040 = vmatprep.mubr.f32.mxu0 %v2113
        %4041 = vmatmul.mubr.f32.gmra.mrb[0].mxu0 %v2105
        %v4042 = vpop.f32.mrb[0].mxu0
        %v4043 = vadd.f32 %v3973, %v4042
        %v4044 = vpop.f32.mrb[0].mxu0
        %4045 = vdwg.mxu0
        %4046 = vmatprep.subr.mxu0 0.0
        %4047 = vmatpush1.msra.mxu0 %v1022
        %4048 = vmatprep.subr.mxu0 0.0
        %4049 = vmatpush1.msra.mxu0 %v1023
        %4050 = vmatprep.subr.mxu0 0.0
        %4051 = vmatpush1.msra.mxu0 %v1024
        %4052 = vmatprep.subr.mxu0 0.0
        %4053 = vmatpush1.msra.mxu0 %v1025
        %4054 = vmatprep.subr.mxu0 0.0
        %4055 = vmatpush1.msra.mxu0 %v1026
        %4056 = vmatprep.subr.mxu0 0.0
        %4057 = vmatpush1.msra.mxu0 %v1027
        %4058 = vmatprep.subr.mxu0 0.0
        %4059 = vmatpush1.msra.mxu0 %v1028
        %4060 = vmatprep.subr.mxu0 0.0
        %4061 = vmatpush1.msra.mxu0 %v1029
        %4062 = vmatprep.subr.mxu0 0.0
        %4063 = vmatpush1.msra.mxu0 %v1030
        %4064 = vmatprep.subr.mxu0 0.0
        %4065 = vmatpush1.msra.mxu0 %v1031
        %4066 = vmatprep.subr.mxu0 0.0
        %4067 = vmatpush1.msra.mxu0 %v1032
        %4068 = vmatprep.subr.mxu0 0.0
        %4069 = vmatpush1.msra.mxu0 %v1033
        %4070 = vmatprep.subr.mxu0 0.0
        %4071 = vmatpush1.msra.mxu0 %v1034
        %4072 = vmatprep.subr.mxu0 0.0
        %4073 = vmatpush1.msra.mxu0 %v1035
        %4074 = vmatprep.subr.mxu0 0.0
        %4075 = vmatpush1.msra.mxu0 %v1036
        %4076 = vmatprep.subr.mxu0 0.0
        %4077 = vmatpush1.msra.mxu0 %v1037
        %4078 = vmatprep.subr.mxu0 0.0
        %4079 = vmatpush1.msra.mxu0 %v1038
        %4080 = vmatprep.subr.mxu0 0.0
        %4081 = vmatpush1.msra.mxu0 %v1039
        %4082 = vmatprep.subr.mxu0 0.0
        %4083 = vmatpush1.msra.mxu0 %v1040
        %4084 = vmatprep.subr.mxu0 0.0
        %4085 = vmatpush1.msra.mxu0 %v1041
        %4086 = vmatprep.subr.mxu0 0.0
        %4087 = vmatpush1.msra.mxu0 %v1042
        %4088 = vmatprep.subr.mxu0 0.0
        %4089 = vmatpush1.msra.mxu0 %v1043
        %4090 = vmatprep.subr.mxu0 0.0
        %4091 = vmatpush1.msra.mxu0 %v1044
        %4092 = vmatprep.subr.mxu0 0.0
        %4093 = vmatpush1.msra.mxu0 %v1045
        %4094 = vmatprep.subr.mxu0 0.0
        %4095 = vmatpush1.msra.mxu0 %v1046
        %4096 = vmatprep.subr.mxu0 0.0
        %4097 = vmatpush1.msra.mxu0 %v1047
        %4098 = vmatprep.subr.mxu0 0.0
        %4099 = vmatpush1.msra.mxu0 %v1048
        %4100 = vmatprep.subr.mxu0 0.0
        %4101 = vmatpush1.msra.mxu0 %v1049
        %4102 = vmatprep.subr.mxu0 0.0
        %4103 = vmatpush1.msra.mxu0 %v1050
        %4104 = vmatprep.subr.mxu0 0.0
        %4105 = vmatpush1.msra.mxu0 %v1051
        %4106 = vmatprep.subr.mxu0 0.0
        %4107 = vmatpush1.msra.mxu0 %v1052
        %4108 = vmatprep.subr.mxu0 0.0
        %4109 = vmatpush1.msra.mxu0 %v1053
        %4110 = vmatprep.mubr.f32.mxu0 %v2114
        %4111 = vmatmul.mubr.f32.gmra.mrb[0].mxu0 %v2112
        %v4112 = vpop.f32.mrb[0].mxu0
        %v4113 = vadd.f32 %v4043, %v4112
        %v4114 = vpop.f32.mrb[0].mxu0
        %4115 = vdwg.mxu0
        %4116 = vmatprep.subr.mxu0 0.0
        %4117 = vmatpush1.msra.mxu0 %v1054
        %4118 = vmatprep.subr.mxu0 0.0
        %4119 = vmatpush1.msra.mxu0 %v1055
        %4120 = vmatprep.subr.mxu0 0.0
        %4121 = vmatpush1.msra.mxu0 %v1056
        %4122 = vmatprep.subr.mxu0 0.0
        %4123 = vmatpush1.msra.mxu0 %v1057
        %4124 = vmatprep.subr.mxu0 0.0
        %4125 = vmatpush1.msra.mxu0 %v1058
        %4126 = vmatprep.subr.mxu0 0.0
        %4127 = vmatpush1.msra.mxu0 %v1059
        %4128 = vmatprep.subr.mxu0 0.0
        %4129 = vmatpush1.msra.mxu0 %v1060
        %4130 = vmatprep.subr.mxu0 0.0
        %4131 = vmatpush1.msra.mxu0 %v1061
        %4132 = vmatprep.subr.mxu0 0.0
        %4133 = vmatpush1.msra.mxu0 %v1062
        %4134 = vmatprep.subr.mxu0 0.0
        %4135 = vmatpush1.msra.mxu0 %v1063
        %4136 = vmatprep.subr.mxu0 0.0
        %4137 = vmatpush1.msra.mxu0 %v1064
        %4138 = vmatprep.subr.mxu0 0.0
        %4139 = vmatpush1.msra.mxu0 %v1065
        %4140 = vmatprep.subr.mxu0 0.0
        %4141 = vmatpush1.msra.mxu0 %v1066
        %4142 = vmatprep.subr.mxu0 0.0
        %4143 = vmatpush1.msra.mxu0 %v1067
        %4144 = vmatprep.subr.mxu0 0.0
        %4145 = vmatpush1.msra.mxu0 %v1068
        %4146 = vmatprep.subr.mxu0 0.0
        %4147 = vmatpush1.msra.mxu0 %v1069
        %4148 = vmatprep.subr.mxu0 0.0
        %4149 = vmatpush1.msra.mxu0 %v1070
        %4150 = vmatprep.subr.mxu0 0.0
        %4151 = vmatpush1.msra.mxu0 %v1071
        %4152 = vmatprep.subr.mxu0 0.0
        %4153 = vmatpush1.msra.mxu0 %v1072
        %4154 = vmatprep.subr.mxu0 0.0
        %4155 = vmatpush1.msra.mxu0 %v1073
        %4156 = vmatprep.subr.mxu0 0.0
        %4157 = vmatpush1.msra.mxu0 %v1074
        %4158 = vmatprep.subr.mxu0 0.0
        %4159 = vmatpush1.msra.mxu0 %v1075
        %4160 = vmatprep.subr.mxu0 0.0
        %4161 = vmatpush1.msra.mxu0 %v1076
        %4162 = vmatprep.subr.mxu0 0.0
        %4163 = vmatpush1.msra.mxu0 %v1077
        %4164 = vmatprep.subr.mxu0 0.0
        %4165 = vmatpush1.msra.mxu0 %v1078
        %4166 = vmatprep.subr.mxu0 0.0
        %4167 = vmatpush1.msra.mxu0 %v1079
        %4168 = vmatprep.subr.mxu0 0.0
        %4169 = vmatpush1.msra.mxu0 %v1080
        %4170 = vmatprep.subr.mxu0 0.0
        %4171 = vmatpush1.msra.mxu0 %v1081
        %4172 = vmatprep.subr.mxu0 0.0
        %4173 = vmatpush1.msra.mxu0 %v1082
        %4174 = vmatprep.subr.mxu0 0.0
        %4175 = vmatpush1.msra.mxu0 %v1083
        %4176 = vmatprep.subr.mxu0 0.0
        %4177 = vmatpush1.msra.mxu0 %v1084
        %4178 = vmatprep.subr.mxu0 0.0
        %4179 = vmatpush1.msra.mxu0 %v1085
        %4180 = vmatprep.mubr.f32.mxu0 %v2130
        %4181 = vmatmul.mubr.f32.gmra.mrb[0].mxu0 %v2122
        %v4182 = vpop.f32.mrb[0].mxu0
        %v4183 = vadd.f32 %v4113, %v4182
        %v4184 = vpop.f32.mrb[0].mxu0
        %4185 = vdwg.mxu0
        %4186 = vmatprep.subr.mxu0 0.0
        %4187 = vmatpush1.msra.mxu0 %v1086
        %4188 = vmatprep.subr.mxu0 0.0
        %4189 = vmatpush1.msra.mxu0 %v1087
        %4190 = vmatprep.subr.mxu0 0.0
        %4191 = vmatpush1.msra.mxu0 %v1088
        %4192 = vmatprep.subr.mxu0 0.0
        %4193 = vmatpush1.msra.mxu0 %v1089
        %4194 = vmatprep.subr.mxu0 0.0
        %4195 = vmatpush1.msra.mxu0 %v1090
        %4196 = vmatprep.subr.mxu0 0.0
        %4197 = vmatpush1.msra.mxu0 %v1091
        %4198 = vmatprep.subr.mxu0 0.0
        %4199 = vmatpush1.msra.mxu0 %v1092
        %4200 = vmatprep.subr.mxu0 0.0
        %4201 = vmatpush1.msra.mxu0 %v1093
        %4202 = vmatprep.subr.mxu0 0.0
        %4203 = vmatpush1.msra.mxu0 %v1094
        %4204 = vmatprep.subr.mxu0 0.0
        %4205 = vmatpush1.msra.mxu0 %v1095
        %4206 = vmatprep.subr.mxu0 0.0
        %4207 = vmatpush1.msra.mxu0 %v1096
        %4208 = vmatprep.subr.mxu0 0.0
        %4209 = vmatpush1.msra.mxu0 %v1097
        %4210 = vmatprep.subr.mxu0 0.0
        %4211 = vmatpush1.msra.mxu0 %v1098
        %4212 = vmatprep.subr.mxu0 0.0
        %4213 = vmatpush1.msra.mxu0 %v1099
        %4214 = vmatprep.subr.mxu0 0.0
        %4215 = vmatpush1.msra.mxu0 %v1100
        %4216 = vmatprep.subr.mxu0 0.0
        %4217 = vmatpush1.msra.mxu0 %v1101
        %4218 = vmatprep.subr.mxu0 0.0
        %4219 = vmatpush1.msra.mxu0 %v1102
        %4220 = vmatprep.subr.mxu0 0.0
        %4221 = vmatpush1.msra.mxu0 %v1103
        %4222 = vmatprep.subr.mxu0 0.0
        %4223 = vmatpush1.msra.mxu0 %v1104
        %4224 = vmatprep.subr.mxu0 0.0
        %4225 = vmatpush1.msra.mxu0 %v1105
        %4226 = vmatprep.subr.mxu0 0.0
        %4227 = vmatpush1.msra.mxu0 %v1106
        %4228 = vmatprep.subr.mxu0 0.0
        %4229 = vmatpush1.msra.mxu0 %v1107
        %4230 = vmatprep.subr.mxu0 0.0
        %4231 = vmatpush1.msra.mxu0 %v1108
        %4232 = vmatprep.subr.mxu0 0.0
        %4233 = vmatpush1.msra.mxu0 %v1109
        %4234 = vmatprep.subr.mxu0 0.0
        %4235 = vmatpush1.msra.mxu0 %v1110
        %4236 = vmatprep.subr.mxu0 0.0
        %4237 = vmatpush1.msra.mxu0 %v1111
        %4238 = vmatprep.subr.mxu0 0.0
        %4239 = vmatpush1.msra.mxu0 %v1112
        %4240 = vmatprep.subr.mxu0 0.0
        %4241 = vmatpush1.msra.mxu0 %v1113
        %4242 = vmatprep.subr.mxu0 0.0
        %4243 = vmatpush1.msra.mxu0 %v1114
        %4244 = vmatprep.subr.mxu0 0.0
        %4245 = vmatpush1.msra.mxu0 %v1115
        %4246 = vmatprep.subr.mxu0 0.0
        %4247 = vmatpush1.msra.mxu0 %v1116
        %4248 = vmatprep.subr.mxu0 0.0
        %4249 = vmatpush1.msra.mxu0 %v1117
        %4250 = vmatprep.mubr.f32.mxu0 %v2131
        %4251 = vmatmul.mubr.f32.gmra.mrb[0].mxu0 %v2129
        %v4252 = vpop.f32.mrb[0].mxu0
        %v4253 = vadd.f32 %v4183, %v4252
        %v4254 = vpop.f32.mrb[0].mxu0
        %4255 = vdwg.mxu0
        %4256 = vmatprep.subr.mxu0 0.0
        %4257 = vmatpush1.msra.mxu0 %v1118
        %4258 = vmatprep.subr.mxu0 0.0
        %4259 = vmatpush1.msra.mxu0 %v1119
        %4260 = vmatprep.subr.mxu0 0.0
        %4261 = vmatpush1.msra.mxu0 %v1120
        %4262 = vmatprep.subr.mxu0 0.0
        %4263 = vmatpush1.msra.mxu0 %v1121
        %4264 = vmatprep.subr.mxu0 0.0
        %4265 = vmatpush1.msra.mxu0 %v1122
        %4266 = vmatprep.subr.mxu0 0.0
        %4267 = vmatpush1.msra.mxu0 %v1123
        %4268 = vmatprep.subr.mxu0 0.0
        %4269 = vmatpush1.msra.mxu0 %v1124
        %4270 = vmatprep.subr.mxu0 0.0
        %4271 = vmatpush1.msra.mxu0 %v1125
        %4272 = vmatprep.subr.mxu0 0.0
        %4273 = vmatpush1.msra.mxu0 %v1126
        %4274 = vmatprep.subr.mxu0 0.0
        %4275 = vmatpush1.msra.mxu0 %v1127
        %4276 = vmatprep.subr.mxu0 0.0
        %4277 = vmatpush1.msra.mxu0 %v1128
        %4278 = vmatprep.subr.mxu0 0.0
        %4279 = vmatpush1.msra.mxu0 %v1129
        %4280 = vmatprep.subr.mxu0 0.0
        %4281 = vmatpush1.msra.mxu0 %v1130
        %4282 = vmatprep.subr.mxu0 0.0
        %4283 = vmatpush1.msra.mxu0 %v1131
        %4284 = vmatprep.subr.mxu0 0.0
        %4285 = vmatpush1.msra.mxu0 %v1132
        %4286 = vmatprep.subr.mxu0 0.0
        %4287 = vmatpush1.msra.mxu0 %v1133
        %4288 = vmatprep.subr.mxu0 0.0
        %4289 = vmatpush1.msra.mxu0 %v1134
        %4290 = vmatprep.subr.mxu0 0.0
        %4291 = vmatpush1.msra.mxu0 %v1135
        %4292 = vmatprep.subr.mxu0 0.0
        %4293 = vmatpush1.msra.mxu0 %v1136
        %4294 = vmatprep.subr.mxu0 0.0
        %4295 = vmatpush1.msra.mxu0 %v1137
        %4296 = vmatprep.subr.mxu0 0.0
        %4297 = vmatpush1.msra.mxu0 %v1138
        %4298 = vmatprep.subr.mxu0 0.0
        %4299 = vmatpush1.msra.mxu0 %v1139
        %4300 = vmatprep.subr.mxu0 0.0
        %4301 = vmatpush1.msra.mxu0 %v1140
        %4302 = vmatprep.subr.mxu0 0.0
        %4303 = vmatpush1.msra.mxu0 %v1141
        %4304 = vmatprep.subr.mxu0 0.0
        %4305 = vmatpush1.msra.mxu0 %v1142
        %4306 = vmatprep.subr.mxu0 0.0
        %4307 = vmatpush1.msra.mxu0 %v1143
        %4308 = vmatprep.subr.mxu0 0.0
        %4309 = vmatpush1.msra.mxu0 %v1144
        %4310 = vmatprep.subr.mxu0 0.0
        %4311 = vmatpush1.msra.mxu0 %v1145
        %4312 = vmatprep.subr.mxu0 0.0
        %4313 = vmatpush1.msra.mxu0 %v1146
        %4314 = vmatprep.subr.mxu0 0.0
        %4315 = vmatpush1.msra.mxu0 %v1147
        %4316 = vmatprep.subr.mxu0 0.0
        %4317 = vmatpush1.msra.mxu0 %v1148
        %4318 = vmatprep.subr.mxu0 0.0
        %4319 = vmatpush1.msra.mxu0 %v1149
        %4320 = vmatprep.mubr.f32.mxu0 %v2147
        %4321 = vmatmul.mubr.f32.gmra.mrb[0].mxu0 %v2139
        %v4322 = vpop.f32.mrb[0].mxu0
        %v4323 = vadd.f32 %v4253, %v4322
        %v4324 = vpop.f32.mrb[0].mxu0
        %4325 = vdwg.mxu0
        %4326 = vmatprep.subr.mxu0 0.0
        %4327 = vmatpush1.msra.mxu0 %v1150
        %4328 = vmatprep.subr.mxu0 0.0
        %4329 = vmatpush1.msra.mxu0 %v1151
        %4330 = vmatprep.subr.mxu0 0.0
        %4331 = vmatpush1.msra.mxu0 %v1152
        %4332 = vmatprep.subr.mxu0 0.0
        %4333 = vmatpush1.msra.mxu0 %v1153
        %4334 = vmatprep.subr.mxu0 0.0
        %4335 = vmatpush1.msra.mxu0 %v1154
        %4336 = vmatprep.subr.mxu0 0.0
        %4337 = vmatpush1.msra.mxu0 %v1155
        %4338 = vmatprep.subr.mxu0 0.0
        %4339 = vmatpush1.msra.mxu0 %v1156
        %4340 = vmatprep.subr.mxu0 0.0
        %4341 = vmatpush1.msra.mxu0 %v1157
        %4342 = vmatprep.subr.mxu0 0.0
        %4343 = vmatpush1.msra.mxu0 %v1158
        %4344 = vmatprep.subr.mxu0 0.0
        %4345 = vmatpush1.msra.mxu0 %v1159
        %4346 = vmatprep.subr.mxu0 0.0
        %4347 = vmatpush1.msra.mxu0 %v1160
        %4348 = vmatprep.subr.mxu0 0.0
        %4349 = vmatpush1.msra.mxu0 %v1161
        %4350 = vmatprep.subr.mxu0 0.0
        %4351 = vmatpush1.msra.mxu0 %v1162
        %4352 = vmatprep.subr.mxu0 0.0
        %4353 = vmatpush1.msra.mxu0 %v1163
        %4354 = vmatprep.subr.mxu0 0.0
        %4355 = vmatpush1.msra.mxu0 %v1164
        %4356 = vmatprep.subr.mxu0 0.0
        %4357 = vmatpush1.msra.mxu0 %v1165
        %4358 = vmatprep.subr.mxu0 0.0
        %4359 = vmatpush1.msra.mxu0 %v1166
        %4360 = vmatprep.subr.mxu0 0.0
        %4361 = vmatpush1.msra.mxu0 %v1167
        %4362 = vmatprep.subr.mxu0 0.0
        %4363 = vmatpush1.msra.mxu0 %v1168
        %4364 = vmatprep.subr.mxu0 0.0
        %4365 = vmatpush1.msra.mxu0 %v1169
        %4366 = vmatprep.subr.mxu0 0.0
        %4367 = vmatpush1.msra.mxu0 %v1170
        %4368 = vmatprep.subr.mxu0 0.0
        %4369 = vmatpush1.msra.mxu0 %v1171
        %4370 = vmatprep.subr.mxu0 0.0
        %4371 = vmatpush1.msra.mxu0 %v1172
        %4372 = vmatprep.subr.mxu0 0.0
        %4373 = vmatpush1.msra.mxu0 %v1173
        %4374 = vmatprep.subr.mxu0 0.0
        %4375 = vmatpush1.msra.mxu0 %v1174
        %4376 = vmatprep.subr.mxu0 0.0
        %4377 = vmatpush1.msra.mxu0 %v1175
        %4378 = vmatprep.subr.mxu0 0.0
        %4379 = vmatpush1.msra.mxu0 %v1176
        %4380 = vmatprep.subr.mxu0 0.0
        %4381 = vmatpush1.msra.mxu0 %v1177
        %4382 = vmatprep.subr.mxu0 0.0
        %4383 = vmatpush1.msra.mxu0 %v1178
        %4384 = vmatprep.subr.mxu0 0.0
        %4385 = vmatpush1.msra.mxu0 %v1179
        %4386 = vmatprep.subr.mxu0 0.0
        %4387 = vmatpush1.msra.mxu0 %v1180
        %4388 = vmatprep.subr.mxu0 0.0
        %4389 = vmatpush1.msra.mxu0 %v1181
        %4390 = vmatprep.mubr.f32.mxu0 %v2148
        %4391 = vmatmul.mubr.f32.gmra.mrb[0].mxu0 %v2146
        %v4392 = vpop.f32.mrb[0].mxu0
        %v4393 = vadd.f32 %v4323, %v4392
        %v4394 = vpop.f32.mrb[0].mxu0
        %4395 = vdwg.mxu0
        %4396 = vmatprep.subr.mxu0 0.0
        %4397 = vmatpush1.msra.mxu0 %v1182
        %4398 = vmatprep.subr.mxu0 0.0
        %4399 = vmatpush1.msra.mxu0 %v1183
        %4400 = vmatprep.subr.mxu0 0.0
        %4401 = vmatpush1.msra.mxu0 %v1184
        %4402 = vmatprep.subr.mxu0 0.0
        %4403 = vmatpush1.msra.mxu0 %v1185
        %4404 = vmatprep.subr.mxu0 0.0
        %4405 = vmatpush1.msra.mxu0 %v1186
        %4406 = vmatprep.subr.mxu0 0.0
        %4407 = vmatpush1.msra.mxu0 %v1187
        %4408 = vmatprep.subr.mxu0 0.0
        %4409 = vmatpush1.msra.mxu0 %v1188
        %4410 = vmatprep.subr.mxu0 0.0
        %4411 = vmatpush1.msra.mxu0 %v1189
        %4412 = vmatprep.subr.mxu0 0.0
        %4413 = vmatpush1.msra.mxu0 %v1190
        %4414 = vmatprep.subr.mxu0 0.0
        %4415 = vmatpush1.msra.mxu0 %v1191
        %4416 = vmatprep.subr.mxu0 0.0
        %4417 = vmatpush1.msra.mxu0 %v1192
        %4418 = vmatprep.subr.mxu0 0.0
        %4419 = vmatpush1.msra.mxu0 %v1193
        %4420 = vmatprep.subr.mxu0 0.0
        %4421 = vmatpush1.msra.mxu0 %v1194
        %4422 = vmatprep.subr.mxu0 0.0
        %4423 = vmatpush1.msra.mxu0 %v1195
        %4424 = vmatprep.subr.mxu0 0.0
        %4425 = vmatpush1.msra.mxu0 %v1196
        %4426 = vmatprep.subr.mxu0 0.0
        %4427 = vmatpush1.msra.mxu0 %v1197
        %4428 = vmatprep.subr.mxu0 0.0
        %4429 = vmatpush1.msra.mxu0 %v1198
        %4430 = vmatprep.subr.mxu0 0.0
        %4431 = vmatpush1.msra.mxu0 %v1199
        %4432 = vmatprep.subr.mxu0 0.0
        %4433 = vmatpush1.msra.mxu0 %v1200
        %4434 = vmatprep.subr.mxu0 0.0
        %4435 = vmatpush1.msra.mxu0 %v1201
        %4436 = vmatprep.subr.mxu0 0.0
        %4437 = vmatpush1.msra.mxu0 %v1202
        %4438 = vmatprep.subr.mxu0 0.0
        %4439 = vmatpush1.msra.mxu0 %v1203
        %4440 = vmatprep.subr.mxu0 0.0
        %4441 = vmatpush1.msra.mxu0 %v1204
        %4442 = vmatprep.subr.mxu0 0.0
        %4443 = vmatpush1.msra.mxu0 %v1205
        %4444 = vmatprep.subr.mxu0 0.0
        %4445 = vmatpush1.msra.mxu0 %v1206
        %4446 = vmatprep.subr.mxu0 0.0
        %4447 = vmatpush1.msra.mxu0 %v1207
        %4448 = vmatprep.subr.mxu0 0.0
        %4449 = vmatpush1.msra.mxu0 %v1208
        %4450 = vmatprep.subr.mxu0 0.0
        %4451 = vmatpush1.msra.mxu0 %v1209
        %4452 = vmatprep.subr.mxu0 0.0
        %4453 = vmatpush1.msra.mxu0 %v1210
        %4454 = vmatprep.subr.mxu0 0.0
        %4455 = vmatpush1.msra.mxu0 %v1211
        %4456 = vmatprep.subr.mxu0 0.0
        %4457 = vmatpush1.msra.mxu0 %v1212
        %4458 = vmatprep.subr.mxu0 0.0
        %4459 = vmatpush1.msra.mxu0 %v1213
        %4460 = vmatprep.mubr.f32.mxu0 %v2164
        %4461 = vmatmul.mubr.f32.gmra.mrb[0].mxu0 %v2156
        %v4462 = vpop.f32.mrb[0].mxu0
        %v4463 = vadd.f32 %v4393, %v4462
        %v4464 = vpop.f32.mrb[0].mxu0
        %4465 = vdwg.mxu0
        %4466 = vmatprep.subr.mxu0 0.0
        %4467 = vmatpush1.msra.mxu0 %v1214
        %4468 = vmatprep.subr.mxu0 0.0
        %4469 = vmatpush1.msra.mxu0 %v1215
        %4470 = vmatprep.subr.mxu0 0.0
        %4471 = vmatpush1.msra.mxu0 %v1216
        %4472 = vmatprep.subr.mxu0 0.0
        %4473 = vmatpush1.msra.mxu0 %v1217
        %4474 = vmatprep.subr.mxu0 0.0
        %4475 = vmatpush1.msra.mxu0 %v1218
        %4476 = vmatprep.subr.mxu0 0.0
        %4477 = vmatpush1.msra.mxu0 %v1219
        %4478 = vmatprep.subr.mxu0 0.0
        %4479 = vmatpush1.msra.mxu0 %v1220
        %4480 = vmatprep.subr.mxu0 0.0
        %4481 = vmatpush1.msra.mxu0 %v1221
        %4482 = vmatprep.subr.mxu0 0.0
        %4483 = vmatpush1.msra.mxu0 %v1222
        %4484 = vmatprep.subr.mxu0 0.0
        %4485 = vmatpush1.msra.mxu0 %v1223
        %4486 = vmatprep.subr.mxu0 0.0
        %4487 = vmatpush1.msra.mxu0 %v1224
        %4488 = vmatprep.subr.mxu0 0.0
        %4489 = vmatpush1.msra.mxu0 %v1225
        %4490 = vmatprep.subr.mxu0 0.0
        %4491 = vmatpush1.msra.mxu0 %v1226
        %4492 = vmatprep.subr.mxu0 0.0
        %4493 = vmatpush1.msra.mxu0 %v1227
        %4494 = vmatprep.subr.mxu0 0.0
        %4495 = vmatpush1.msra.mxu0 %v1228
        %4496 = vmatprep.subr.mxu0 0.0
        %4497 = vmatpush1.msra.mxu0 %v1229
        %4498 = vmatprep.subr.mxu0 0.0
        %4499 = vmatpush1.msra.mxu0 %v1230
        %4500 = vmatprep.subr.mxu0 0.0
        %4501 = vmatpush1.msra.mxu0 %v1231
        %4502 = vmatprep.subr.mxu0 0.0
        %4503 = vmatpush1.msra.mxu0 %v1232
        %4504 = vmatprep.subr.mxu0 0.0
        %4505 = vmatpush1.msra.mxu0 %v1233
        %4506 = vmatprep.subr.mxu0 0.0
        %4507 = vmatpush1.msra.mxu0 %v1234
        %4508 = vmatprep.subr.mxu0 0.0
        %4509 = vmatpush1.msra.mxu0 %v1235
        %4510 = vmatprep.subr.mxu0 0.0
        %4511 = vmatpush1.msra.mxu0 %v1236
        %4512 = vmatprep.subr.mxu0 0.0
        %4513 = vmatpush1.msra.mxu0 %v1237
        %4514 = vmatprep.subr.mxu0 0.0
        %4515 = vmatpush1.msra.mxu0 %v1238
        %4516 = vmatprep.subr.mxu0 0.0
        %4517 = vmatpush1.msra.mxu0 %v1239
        %4518 = vmatprep.subr.mxu0 0.0
        %4519 = vmatpush1.msra.mxu0 %v1240
        %4520 = vmatprep.subr.mxu0 0.0
        %4521 = vmatpush1.msra.mxu0 %v1241
        %4522 = vmatprep.subr.mxu0 0.0
        %4523 = vmatpush1.msra.mxu0 %v1242
        %4524 = vmatprep.subr.mxu0 0.0
        %4525 = vmatpush1.msra.mxu0 %v1243
        %4526 = vmatprep.subr.mxu0 0.0
        %4527 = vmatpush1.msra.mxu0 %v1244
        %4528 = vmatprep.subr.mxu0 0.0
        %4529 = vmatpush1.msra.mxu0 %v1245
        %4530 = vmatprep.mubr.f32.mxu0 %v2165
        %4531 = vmatmul.mubr.f32.gmra.mrb[0].mxu0 %v2163
        %v4532 = vpop.f32.mrb[0].mxu0
        %v4533 = vadd.f32 %v4463, %v4532
        %v4534 = vpop.f32.mrb[0].mxu0
        %4535 = vdwg.mxu0
        %4536 = vmatprep.subr.mxu0 0.0
        %4537 = vmatpush1.msra.mxu0 %v1246
        %4538 = vmatprep.subr.mxu0 0.0
        %4539 = vmatpush1.msra.mxu0 %v1247
        %4540 = vmatprep.subr.mxu0 0.0
        %4541 = vmatpush1.msra.mxu0 %v1248
        %4542 = vmatprep.subr.mxu0 0.0
        %4543 = vmatpush1.msra.mxu0 %v1249
        %4544 = vmatprep.subr.mxu0 0.0
        %4545 = vmatpush1.msra.mxu0 %v1250
        %4546 = vmatprep.subr.mxu0 0.0
        %4547 = vmatpush1.msra.mxu0 %v1251
        %4548 = vmatprep.subr.mxu0 0.0
        %4549 = vmatpush1.msra.mxu0 %v1252
        %4550 = vmatprep.subr.mxu0 0.0
        %4551 = vmatpush1.msra.mxu0 %v1253
        %4552 = vmatprep.subr.mxu0 0.0
        %4553 = vmatpush1.msra.mxu0 %v1254
        %4554 = vmatprep.subr.mxu0 0.0
        %4555 = vmatpush1.msra.mxu0 %v1255
        %4556 = vmatprep.subr.mxu0 0.0
        %4557 = vmatpush1.msra.mxu0 %v1256
        %4558 = vmatprep.subr.mxu0 0.0
        %4559 = vmatpush1.msra.mxu0 %v1257
        %4560 = vmatprep.subr.mxu0 0.0
        %4561 = vmatpush1.msra.mxu0 %v1258
        %4562 = vmatprep.subr.mxu0 0.0
        %4563 = vmatpush1.msra.mxu0 %v1259
        %4564 = vmatprep.subr.mxu0 0.0
        %4565 = vmatpush1.msra.mxu0 %v1260
        %4566 = vmatprep.subr.mxu0 0.0
        %4567 = vmatpush1.msra.mxu0 %v1261
        %4568 = vmatprep.subr.mxu0 0.0
        %4569 = vmatpush1.msra.mxu0 %v1262
        %4570 = vmatprep.subr.mxu0 0.0
        %4571 = vmatpush1.msra.mxu0 %v1263
        %4572 = vmatprep.subr.mxu0 0.0
        %4573 = vmatpush1.msra.mxu0 %v1264
        %4574 = vmatprep.subr.mxu0 0.0
        %4575 = vmatpush1.msra.mxu0 %v1265
        %4576 = vmatprep.subr.mxu0 0.0
        %4577 = vmatpush1.msra.mxu0 %v1266
        %4578 = vmatprep.subr.mxu0 0.0
        %4579 = vmatpush1.msra.mxu0 %v1267
        %4580 = vmatprep.subr.mxu0 0.0
        %4581 = vmatpush1.msra.mxu0 %v1268
        %4582 = vmatprep.subr.mxu0 0.0
        %4583 = vmatpush1.msra.mxu0 %v1269
        %4584 = vmatprep.subr.mxu0 0.0
        %4585 = vmatpush1.msra.mxu0 %v1270
        %4586 = vmatprep.subr.mxu0 0.0
        %4587 = vmatpush1.msra.mxu0 %v1271
        %4588 = vmatprep.subr.mxu0 0.0
        %4589 = vmatpush1.msra.mxu0 %v1272
        %4590 = vmatprep.subr.mxu0 0.0
        %4591 = vmatpush1.msra.mxu0 %v1273
        %4592 = vmatprep.subr.mxu0 0.0
        %4593 = vmatpush1.msra.mxu0 %v1274
        %4594 = vmatprep.subr.mxu0 0.0
        %4595 = vmatpush1.msra.mxu0 %v1275
        %4596 = vmatprep.subr.mxu0 0.0
        %4597 = vmatpush1.msra.mxu0 %v1276
        %4598 = vmatprep.subr.mxu0 0.0
        %4599 = vmatpush1.msra.mxu0 %v1277
        %4600 = vmatprep.mubr.f32.mxu0 %v2181
        %4601 = vmatmul.mubr.f32.gmra.mrb[0].mxu0 %v2173
        %v4602 = vpop.f32.mrb[0].mxu0
        %v4603 = vadd.f32 %v4533, %v4602
        %v4604 = vpop.f32.mrb[0].mxu0
        %4605 = vdwg.mxu0
        %4606 = vmatprep.subr.mxu0 0.0
        %4607 = vmatpush1.msra.mxu0 %v1278
        %4608 = vmatprep.subr.mxu0 0.0
        %4609 = vmatpush1.msra.mxu0 %v1279
        %4610 = vmatprep.subr.mxu0 0.0
        %4611 = vmatpush1.msra.mxu0 %v1280
        %4612 = vmatprep.subr.mxu0 0.0
        %4613 = vmatpush1.msra.mxu0 %v1281
        %4614 = vmatprep.subr.mxu0 0.0
        %4615 = vmatpush1.msra.mxu0 %v1282
        %4616 = vmatprep.subr.mxu0 0.0
        %4617 = vmatpush1.msra.mxu0 %v1283
        %4618 = vmatprep.subr.mxu0 0.0
        %4619 = vmatpush1.msra.mxu0 %v1284
        %4620 = vmatprep.subr.mxu0 0.0
        %4621 = vmatpush1.msra.mxu0 %v1285
        %4622 = vmatprep.subr.mxu0 0.0
        %4623 = vmatpush1.msra.mxu0 %v1286
        %4624 = vmatprep.subr.mxu0 0.0
        %4625 = vmatpush1.msra.mxu0 %v1287
        %4626 = vmatprep.subr.mxu0 0.0
        %4627 = vmatpush1.msra.mxu0 %v1288
        %4628 = vmatprep.subr.mxu0 0.0
        %4629 = vmatpush1.msra.mxu0 %v1289
        %4630 = vmatprep.subr.mxu0 0.0
        %4631 = vmatpush1.msra.mxu0 %v1290
        %4632 = vmatprep.subr.mxu0 0.0
        %4633 = vmatpush1.msra.mxu0 %v1291
        %4634 = vmatprep.subr.mxu0 0.0
        %4635 = vmatpush1.msra.mxu0 %v1292
        %4636 = vmatprep.subr.mxu0 0.0
        %4637 = vmatpush1.msra.mxu0 %v1293
        %4638 = vmatprep.subr.mxu0 0.0
        %4639 = vmatpush1.msra.mxu0 %v1294
        %4640 = vmatprep.subr.mxu0 0.0
        %4641 = vmatpush1.msra.mxu0 %v1295
        %4642 = vmatprep.subr.mxu0 0.0
        %4643 = vmatpush1.msra.mxu0 %v1296
        %4644 = vmatprep.subr.mxu0 0.0
        %4645 = vmatpush1.msra.mxu0 %v1297
        %4646 = vmatprep.subr.mxu0 0.0
        %4647 = vmatpush1.msra.mxu0 %v1298
        %4648 = vmatprep.subr.mxu0 0.0
        %4649 = vmatpush1.msra.mxu0 %v1299
        %4650 = vmatprep.subr.mxu0 0.0
        %4651 = vmatpush1.msra.mxu0 %v1300
        %4652 = vmatprep.subr.mxu0 0.0
        %4653 = vmatpush1.msra.mxu0 %v1301
        %4654 = vmatprep.subr.mxu0 0.0
        %4655 = vmatpush1.msra.mxu0 %v1302
        %4656 = vmatprep.subr.mxu0 0.0
        %4657 = vmatpush1.msra.mxu0 %v1303
        %4658 = vmatprep.subr.mxu0 0.0
        %4659 = vmatpush1.msra.mxu0 %v1304
        %4660 = vmatprep.subr.mxu0 0.0
        %4661 = vmatpush1.msra.mxu0 %v1305
        %4662 = vmatprep.subr.mxu0 0.0
        %4663 = vmatpush1.msra.mxu0 %v1306
        %4664 = vmatprep.subr.mxu0 0.0
        %4665 = vmatpush1.msra.mxu0 %v1307
        %4666 = vmatprep.subr.mxu0 0.0
        %4667 = vmatpush1.msra.mxu0 %v1308
        %4668 = vmatprep.subr.mxu0 0.0
        %4669 = vmatpush1.msra.mxu0 %v1309
        %4670 = vmatprep.mubr.f32.mxu0 %v2182
        %4671 = vmatmul.mubr.f32.gmra.mrb[0].mxu0 %v2180
        %v4672 = vpop.f32.mrb[0].mxu0
        %v4673 = vadd.f32 %v4603, %v4672
        %v4674 = vpop.f32.mrb[0].mxu0
        %4675 = vdwg.mxu0
        %4676 = vmatprep.subr.mxu0 0.0
        %4677 = vmatpush1.msra.mxu0 %v1310
        %4678 = vmatprep.subr.mxu0 0.0
        %4679 = vmatpush1.msra.mxu0 %v1311
        %4680 = vmatprep.subr.mxu0 0.0
        %4681 = vmatpush1.msra.mxu0 %v1312
        %4682 = vmatprep.subr.mxu0 0.0
        %4683 = vmatpush1.msra.mxu0 %v1313
        %4684 = vmatprep.subr.mxu0 0.0
        %4685 = vmatpush1.msra.mxu0 %v1314
        %4686 = vmatprep.subr.mxu0 0.0
        %4687 = vmatpush1.msra.mxu0 %v1315
        %4688 = vmatprep.subr.mxu0 0.0
        %4689 = vmatpush1.msra.mxu0 %v1316
        %4690 = vmatprep.subr.mxu0 0.0
        %4691 = vmatpush1.msra.mxu0 %v1317
        %4692 = vmatprep.subr.mxu0 0.0
        %4693 = vmatpush1.msra.mxu0 %v1318
        %4694 = vmatprep.subr.mxu0 0.0
        %4695 = vmatpush1.msra.mxu0 %v1319
        %4696 = vmatprep.subr.mxu0 0.0
        %4697 = vmatpush1.msra.mxu0 %v1320
        %4698 = vmatprep.subr.mxu0 0.0
        %4699 = vmatpush1.msra.mxu0 %v1321
        %4700 = vmatprep.subr.mxu0 0.0
        %4701 = vmatpush1.msra.mxu0 %v1322
        %4702 = vmatprep.subr.mxu0 0.0
        %4703 = vmatpush1.msra.mxu0 %v1323
        %4704 = vmatprep.subr.mxu0 0.0
        %4705 = vmatpush1.msra.mxu0 %v1324
        %4706 = vmatprep.subr.mxu0 0.0
        %4707 = vmatpush1.msra.mxu0 %v1325
        %4708 = vmatprep.subr.mxu0 0.0
        %4709 = vmatpush1.msra.mxu0 %v1326
        %4710 = vmatprep.subr.mxu0 0.0
        %4711 = vmatpush1.msra.mxu0 %v1327
        %4712 = vmatprep.subr.mxu0 0.0
        %4713 = vmatpush1.msra.mxu0 %v1328
        %4714 = vmatprep.subr.mxu0 0.0
        %4715 = vmatpush1.msra.mxu0 %v1329
        %4716 = vmatprep.subr.mxu0 0.0
        %4717 = vmatpush1.msra.mxu0 %v1330
        %4718 = vmatprep.subr.mxu0 0.0
        %4719 = vmatpush1.msra.mxu0 %v1331
        %4720 = vmatprep.subr.mxu0 0.0
        %4721 = vmatpush1.msra.mxu0 %v1332
        %4722 = vmatprep.subr.mxu0 0.0
        %4723 = vmatpush1.msra.mxu0 %v1333
        %4724 = vmatprep.subr.mxu0 0.0
        %4725 = vmatpush1.msra.mxu0 %v1334
        %4726 = vmatprep.subr.mxu0 0.0
        %4727 = vmatpush1.msra.mxu0 %v1335
        %4728 = vmatprep.subr.mxu0 0.0
        %4729 = vmatpush1.msra.mxu0 %v1336
        %4730 = vmatprep.subr.mxu0 0.0
        %4731 = vmatpush1.msra.mxu0 %v1337
        %4732 = vmatprep.subr.mxu0 0.0
        %4733 = vmatpush1.msra.mxu0 %v1338
        %4734 = vmatprep.subr.mxu0 0.0
        %4735 = vmatpush1.msra.mxu0 %v1339
        %4736 = vmatprep.subr.mxu0 0.0
        %4737 = vmatpush1.msra.mxu0 %v1340
        %4738 = vmatprep.subr.mxu0 0.0
        %4739 = vmatpush1.msra.mxu0 %v1341
        %4740 = vmatprep.mubr.f32.mxu0 %v2198
        %4741 = vmatmul.mubr.f32.gmra.mrb[0].mxu0 %v2190
        %v4742 = vpop.f32.mrb[0].mxu0
        %v4743 = vadd.f32 %v4673, %v4742
        %v4744 = vpop.f32.mrb[0].mxu0
        %4745 = vdwg.mxu0
        %4746 = vmatprep.subr.mxu0 0.0
        %4747 = vmatpush1.msra.mxu0 %v1342
        %4748 = vmatprep.subr.mxu0 0.0
        %4749 = vmatpush1.msra.mxu0 %v1343
        %4750 = vmatprep.subr.mxu0 0.0
        %4751 = vmatpush1.msra.mxu0 %v1344
        %4752 = vmatprep.subr.mxu0 0.0
        %4753 = vmatpush1.msra.mxu0 %v1345
        %4754 = vmatprep.subr.mxu0 0.0
        %4755 = vmatpush1.msra.mxu0 %v1346
        %4756 = vmatprep.subr.mxu0 0.0
        %4757 = vmatpush1.msra.mxu0 %v1347
        %4758 = vmatprep.subr.mxu0 0.0
        %4759 = vmatpush1.msra.mxu0 %v1348
        %4760 = vmatprep.subr.mxu0 0.0
        %4761 = vmatpush1.msra.mxu0 %v1349
        %4762 = vmatprep.subr.mxu0 0.0
        %4763 = vmatpush1.msra.mxu0 %v1350
        %4764 = vmatprep.subr.mxu0 0.0
        %4765 = vmatpush1.msra.mxu0 %v1351
        %4766 = vmatprep.subr.mxu0 0.0
        %4767 = vmatpush1.msra.mxu0 %v1352
        %4768 = vmatprep.subr.mxu0 0.0
        %4769 = vmatpush1.msra.mxu0 %v1353
        %4770 = vmatprep.subr.mxu0 0.0
        %4771 = vmatpush1.msra.mxu0 %v1354
        %4772 = vmatprep.subr.mxu0 0.0
        %4773 = vmatpush1.msra.mxu0 %v1355
        %4774 = vmatprep.subr.mxu0 0.0
        %4775 = vmatpush1.msra.mxu0 %v1356
        %4776 = vmatprep.subr.mxu0 0.0
        %4777 = vmatpush1.msra.mxu0 %v1357
        %4778 = vmatprep.subr.mxu0 0.0
        %4779 = vmatpush1.msra.mxu0 %v1358
        %4780 = vmatprep.subr.mxu0 0.0
        %4781 = vmatpush1.msra.mxu0 %v1359
        %4782 = vmatprep.subr.mxu0 0.0
        %4783 = vmatpush1.msra.mxu0 %v1360
        %4784 = vmatprep.subr.mxu0 0.0
        %4785 = vmatpush1.msra.mxu0 %v1361
        %4786 = vmatprep.subr.mxu0 0.0
        %4787 = vmatpush1.msra.mxu0 %v1362
        %4788 = vmatprep.subr.mxu0 0.0
        %4789 = vmatpush1.msra.mxu0 %v1363
        %4790 = vmatprep.subr.mxu0 0.0
        %4791 = vmatpush1.msra.mxu0 %v1364
        %4792 = vmatprep.subr.mxu0 0.0
        %4793 = vmatpush1.msra.mxu0 %v1365
        %4794 = vmatprep.subr.mxu0 0.0
        %4795 = vmatpush1.msra.mxu0 %v1366
        %4796 = vmatprep.subr.mxu0 0.0
        %4797 = vmatpush1.msra.mxu0 %v1367
        %4798 = vmatprep.subr.mxu0 0.0
        %4799 = vmatpush1.msra.mxu0 %v1368
        %4800 = vmatprep.subr.mxu0 0.0
        %4801 = vmatpush1.msra.mxu0 %v1369
        %4802 = vmatprep.subr.mxu0 0.0
        %4803 = vmatpush1.msra.mxu0 %v1370
        %4804 = vmatprep.subr.mxu0 0.0
        %4805 = vmatpush1.msra.mxu0 %v1371
        %4806 = vmatprep.subr.mxu0 0.0
        %4807 = vmatpush1.msra.mxu0 %v1372
        %4808 = vmatprep.subr.mxu0 0.0
        %4809 = vmatpush1.msra.mxu0 %v1373
        %4810 = vmatprep.mubr.f32.mxu0 %v2199
        %4811 = vmatmul.mubr.f32.gmra.mrb[0].mxu0 %v2197
        %v4812 = vpop.f32.mrb[0].mxu0
        %v4813 = vadd.f32 %v4743, %v4812
        %v4814 = vpop.f32.mrb[0].mxu0
        %4815 = vdwg.mxu0
        %4816 = vmatprep.subr.mxu0 0.0
        %4817 = vmatpush1.msra.mxu0 %v1374
        %4818 = vmatprep.subr.mxu0 0.0
        %4819 = vmatpush1.msra.mxu0 %v1375
        %4820 = vmatprep.subr.mxu0 0.0
        %4821 = vmatpush1.msra.mxu0 %v1376
        %4822 = vmatprep.subr.mxu0 0.0
        %4823 = vmatpush1.msra.mxu0 %v1377
        %4824 = vmatprep.subr.mxu0 0.0
        %4825 = vmatpush1.msra.mxu0 %v1378
        %4826 = vmatprep.subr.mxu0 0.0
        %4827 = vmatpush1.msra.mxu0 %v1379
        %4828 = vmatprep.subr.mxu0 0.0
        %4829 = vmatpush1.msra.mxu0 %v1380
        %4830 = vmatprep.subr.mxu0 0.0
        %4831 = vmatpush1.msra.mxu0 %v1381
        %4832 = vmatprep.subr.mxu0 0.0
        %4833 = vmatpush1.msra.mxu0 %v1382
        %4834 = vmatprep.subr.mxu0 0.0
        %4835 = vmatpush1.msra.mxu0 %v1383
        %4836 = vmatprep.subr.mxu0 0.0
        %4837 = vmatpush1.msra.mxu0 %v1384
        %4838 = vmatprep.subr.mxu0 0.0
        %4839 = vmatpush1.msra.mxu0 %v1385
        %4840 = vmatprep.subr.mxu0 0.0
        %4841 = vmatpush1.msra.mxu0 %v1386
        %4842 = vmatprep.subr.mxu0 0.0
        %4843 = vmatpush1.msra.mxu0 %v1387
        %4844 = vmatprep.subr.mxu0 0.0
        %4845 = vmatpush1.msra.mxu0 %v1388
        %4846 = vmatprep.subr.mxu0 0.0
        %4847 = vmatpush1.msra.mxu0 %v1389
        %4848 = vmatprep.subr.mxu0 0.0
        %4849 = vmatpush1.msra.mxu0 %v1390
        %4850 = vmatprep.subr.mxu0 0.0
        %4851 = vmatpush1.msra.mxu0 %v1391
        %4852 = vmatprep.subr.mxu0 0.0
        %4853 = vmatpush1.msra.mxu0 %v1392
        %4854 = vmatprep.subr.mxu0 0.0
        %4855 = vmatpush1.msra.mxu0 %v1393
        %4856 = vmatprep.subr.mxu0 0.0
        %4857 = vmatpush1.msra.mxu0 %v1394
        %4858 = vmatprep.subr.mxu0 0.0
        %4859 = vmatpush1.msra.mxu0 %v1395
        %4860 = vmatprep.subr.mxu0 0.0
        %4861 = vmatpush1.msra.mxu0 %v1396
        %4862 = vmatprep.subr.mxu0 0.0
        %4863 = vmatpush1.msra.mxu0 %v1397
        %4864 = vmatprep.subr.mxu0 0.0
        %4865 = vmatpush1.msra.mxu0 %v1398
        %4866 = vmatprep.subr.mxu0 0.0
        %4867 = vmatpush1.msra.mxu0 %v1399
        %4868 = vmatprep.subr.mxu0 0.0
        %4869 = vmatpush1.msra.mxu0 %v1400
        %4870 = vmatprep.subr.mxu0 0.0
        %4871 = vmatpush1.msra.mxu0 %v1401
        %4872 = vmatprep.subr.mxu0 0.0
        %4873 = vmatpush1.msra.mxu0 %v1402
        %4874 = vmatprep.subr.mxu0 0.0
        %4875 = vmatpush1.msra.mxu0 %v1403
        %4876 = vmatprep.subr.mxu0 0.0
        %4877 = vmatpush1.msra.mxu0 %v1404
        %4878 = vmatprep.subr.mxu0 0.0
        %4879 = vmatpush1.msra.mxu0 %v1405
        %4880 = vmatprep.mubr.f32.mxu0 %v2215
        %4881 = vmatmul.mubr.f32.gmra.mrb[0].mxu0 %v2207
        %v4882 = vpop.f32.mrb[0].mxu0
        %v4883 = vadd.f32 %v4813, %v4882
        %v4884 = vpop.f32.mrb[0].mxu0
        %4885 = vdwg.mxu0
        %4886 = vmatprep.subr.mxu0 0.0
        %4887 = vmatpush1.msra.mxu0 %v1406
        %4888 = vmatprep.subr.mxu0 0.0
        %4889 = vmatpush1.msra.mxu0 %v1407
        %4890 = vmatprep.subr.mxu0 0.0
        %4891 = vmatpush1.msra.mxu0 %v1408
        %4892 = vmatprep.subr.mxu0 0.0
        %4893 = vmatpush1.msra.mxu0 %v1409
        %4894 = vmatprep.subr.mxu0 0.0
        %4895 = vmatpush1.msra.mxu0 %v1410
        %4896 = vmatprep.subr.mxu0 0.0
        %4897 = vmatpush1.msra.mxu0 %v1411
        %4898 = vmatprep.subr.mxu0 0.0
        %4899 = vmatpush1.msra.mxu0 %v1412
        %4900 = vmatprep.subr.mxu0 0.0
        %4901 = vmatpush1.msra.mxu0 %v1413
        %4902 = vmatprep.subr.mxu0 0.0
        %4903 = vmatpush1.msra.mxu0 %v1414
        %4904 = vmatprep.subr.mxu0 0.0
        %4905 = vmatpush1.msra.mxu0 %v1415
        %4906 = vmatprep.subr.mxu0 0.0
        %4907 = vmatpush1.msra.mxu0 %v1416
        %4908 = vmatprep.subr.mxu0 0.0
        %4909 = vmatpush1.msra.mxu0 %v1417
        %4910 = vmatprep.subr.mxu0 0.0
        %4911 = vmatpush1.msra.mxu0 %v1418
        %4912 = vmatprep.subr.mxu0 0.0
        %4913 = vmatpush1.msra.mxu0 %v1419
        %4914 = vmatprep.subr.mxu0 0.0
        %4915 = vmatpush1.msra.mxu0 %v1420
        %4916 = vmatprep.subr.mxu0 0.0
        %4917 = vmatpush1.msra.mxu0 %v1421
        %4918 = vmatprep.subr.mxu0 0.0
        %4919 = vmatpush1.msra.mxu0 %v1422
        %4920 = vmatprep.subr.mxu0 0.0
        %4921 = vmatpush1.msra.mxu0 %v1423
        %4922 = vmatprep.subr.mxu0 0.0
        %4923 = vmatpush1.msra.mxu0 %v1424
        %4924 = vmatprep.subr.mxu0 0.0
        %4925 = vmatpush1.msra.mxu0 %v1425
        %4926 = vmatprep.subr.mxu0 0.0
        %4927 = vmatpush1.msra.mxu0 %v1426
        %4928 = vmatprep.subr.mxu0 0.0
        %4929 = vmatpush1.msra.mxu0 %v1427
        %4930 = vmatprep.subr.mxu0 0.0
        %4931 = vmatpush1.msra.mxu0 %v1428
        %4932 = vmatprep.subr.mxu0 0.0
        %4933 = vmatpush1.msra.mxu0 %v1429
        %4934 = vmatprep.subr.mxu0 0.0
        %4935 = vmatpush1.msra.mxu0 %v1430
        %4936 = vmatprep.subr.mxu0 0.0
        %4937 = vmatpush1.msra.mxu0 %v1431
        %4938 = vmatprep.subr.mxu0 0.0
        %4939 = vmatpush1.msra.mxu0 %v1432
        %4940 = vmatprep.subr.mxu0 0.0
        %4941 = vmatpush1.msra.mxu0 %v1433
        %4942 = vmatprep.subr.mxu0 0.0
        %4943 = vmatpush1.msra.mxu0 %v1434
        %4944 = vmatprep.subr.mxu0 0.0
        %4945 = vmatpush1.msra.mxu0 %v1435
        %4946 = vmatprep.subr.mxu0 0.0
        %4947 = vmatpush1.msra.mxu0 %v1436
        %4948 = vmatprep.subr.mxu0 0.0
        %4949 = vmatpush1.msra.mxu0 %v1437
        %4950 = vmatprep.mubr.f32.mxu0 %v2216
        %4951 = vmatmul.mubr.f32.gmra.mrb[0].mxu0 %v2214
        %v4952 = vpop.f32.mrb[0].mxu0
        %v4953 = vadd.f32 %v4883, %v4952
        %v4954 = vpop.f32.mrb[0].mxu0
        %4955 = vdwg.mxu0
        %4956 = vmatprep.subr.mxu0 0.0
        %4957 = vmatpush1.msra.mxu0 %v1438
        %4958 = vmatprep.subr.mxu0 0.0
        %4959 = vmatpush1.msra.mxu0 %v1439
        %4960 = vmatprep.subr.mxu0 0.0
        %4961 = vmatpush1.msra.mxu0 %v1440
        %4962 = vmatprep.subr.mxu0 0.0
        %4963 = vmatpush1.msra.mxu0 %v1441
        %4964 = vmatprep.subr.mxu0 0.0
        %4965 = vmatpush1.msra.mxu0 %v1442
        %4966 = vmatprep.subr.mxu0 0.0
        %4967 = vmatpush1.msra.mxu0 %v1443
        %4968 = vmatprep.subr.mxu0 0.0
        %4969 = vmatpush1.msra.mxu0 %v1444
        %4970 = vmatprep.subr.mxu0 0.0
        %4971 = vmatpush1.msra.mxu0 %v1445
        %4972 = vmatprep.subr.mxu0 0.0
        %4973 = vmatpush1.msra.mxu0 %v1446
        %4974 = vmatprep.subr.mxu0 0.0
        %4975 = vmatpush1.msra.mxu0 %v1447
        %4976 = vmatprep.subr.mxu0 0.0
        %4977 = vmatpush1.msra.mxu0 %v1448
        %4978 = vmatprep.subr.mxu0 0.0
        %4979 = vmatpush1.msra.mxu0 %v1449
        %4980 = vmatprep.subr.mxu0 0.0
        %4981 = vmatpush1.msra.mxu0 %v1450
        %4982 = vmatprep.subr.mxu0 0.0
        %4983 = vmatpush1.msra.mxu0 %v1451
        %4984 = vmatprep.subr.mxu0 0.0
        %4985 = vmatpush1.msra.mxu0 %v1452
        %4986 = vmatprep.subr.mxu0 0.0
        %4987 = vmatpush1.msra.mxu0 %v1453
        %4988 = vmatprep.subr.mxu0 0.0
        %4989 = vmatpush1.msra.mxu0 %v1454
        %4990 = vmatprep.subr.mxu0 0.0
        %4991 = vmatpush1.msra.mxu0 %v1455
        %4992 = vmatprep.subr.mxu0 0.0
        %4993 = vmatpush1.msra.mxu0 %v1456
        %4994 = vmatprep.subr.mxu0 0.0
        %4995 = vmatpush1.msra.mxu0 %v1457
        %4996 = vmatprep.subr.mxu0 0.0
        %4997 = vmatpush1.msra.mxu0 %v1458
        %4998 = vmatprep.subr.mxu0 0.0
        %4999 = vmatpush1.msra.mxu0 %v1459
        %5000 = vmatprep.subr.mxu0 0.0
        %5001 = vmatpush1.msra.mxu0 %v1460
        %5002 = vmatprep.subr.mxu0 0.0
        %5003 = vmatpush1.msra.mxu0 %v1461
        %5004 = vmatprep.subr.mxu0 0.0
        %5005 = vmatpush1.msra.mxu0 %v1462
        %5006 = vmatprep.subr.mxu0 0.0
        %5007 = vmatpush1.msra.mxu0 %v1463
        %5008 = vmatprep.subr.mxu0 0.0
        %5009 = vmatpush1.msra.mxu0 %v1464
        %5010 = vmatprep.subr.mxu0 0.0
        %5011 = vmatpush1.msra.mxu0 %v1465
        %5012 = vmatprep.subr.mxu0 0.0
        %5013 = vmatpush1.msra.mxu0 %v1466
        %5014 = vmatprep.subr.mxu0 0.0
        %5015 = vmatpush1.msra.mxu0 %v1467
        %5016 = vmatprep.subr.mxu0 0.0
        %5017 = vmatpush1.msra.mxu0 %v1468
        %5018 = vmatprep.subr.mxu0 0.0
        %5019 = vmatpush1.msra.mxu0 %v1469
        %5020 = vmatprep.mubr.f32.mxu0 %v2232
        %5021 = vmatmul.mubr.f32.gmra.mrb[0].mxu0 %v2224
        %v5022 = vpop.f32.mrb[0].mxu0
        %v5023 = vadd.f32 %v4953, %v5022
        %v5024 = vpop.f32.mrb[0].mxu0
        %5025 = vdwg.mxu0
        %5026 = vmatprep.subr.mxu0 0.0
        %5027 = vmatpush1.msra.mxu0 %v1470
        %5028 = vmatprep.subr.mxu0 0.0
        %5029 = vmatpush1.msra.mxu0 %v1471
        %5030 = vmatprep.subr.mxu0 0.0
        %5031 = vmatpush1.msra.mxu0 %v1472
        %5032 = vmatprep.subr.mxu0 0.0
        %5033 = vmatpush1.msra.mxu0 %v1473
        %5034 = vmatprep.subr.mxu0 0.0
        %5035 = vmatpush1.msra.mxu0 %v1474
        %5036 = vmatprep.subr.mxu0 0.0
        %5037 = vmatpush1.msra.mxu0 %v1475
        %5038 = vmatprep.subr.mxu0 0.0
        %5039 = vmatpush1.msra.mxu0 %v1476
        %5040 = vmatprep.subr.mxu0 0.0
        %5041 = vmatpush1.msra.mxu0 %v1477
        %5042 = vmatprep.subr.mxu0 0.0
        %5043 = vmatpush1.msra.mxu0 %v1478
        %5044 = vmatprep.subr.mxu0 0.0
        %5045 = vmatpush1.msra.mxu0 %v1479
        %5046 = vmatprep.subr.mxu0 0.0
        %5047 = vmatpush1.msra.mxu0 %v1480
        %5048 = vmatprep.subr.mxu0 0.0
        %5049 = vmatpush1.msra.mxu0 %v1481
        %5050 = vmatprep.subr.mxu0 0.0
        %5051 = vmatpush1.msra.mxu0 %v1482
        %5052 = vmatprep.subr.mxu0 0.0
        %5053 = vmatpush1.msra.mxu0 %v1483
        %5054 = vmatprep.subr.mxu0 0.0
        %5055 = vmatpush1.msra.mxu0 %v1484
        %5056 = vmatprep.subr.mxu0 0.0
        %5057 = vmatpush1.msra.mxu0 %v1485
        %5058 = vmatprep.subr.mxu0 0.0
        %5059 = vmatpush1.msra.mxu0 %v1486
        %5060 = vmatprep.subr.mxu0 0.0
        %5061 = vmatpush1.msra.mxu0 %v1487
        %5062 = vmatprep.subr.mxu0 0.0
        %5063 = vmatpush1.msra.mxu0 %v1488
        %5064 = vmatprep.subr.mxu0 0.0
        %5065 = vmatpush1.msra.mxu0 %v1489
        %5066 = vmatprep.subr.mxu0 0.0
        %5067 = vmatpush1.msra.mxu0 %v1490
        %5068 = vmatprep.subr.mxu0 0.0
        %5069 = vmatpush1.msra.mxu0 %v1491
        %5070 = vmatprep.subr.mxu0 0.0
        %5071 = vmatpush1.msra.mxu0 %v1492
        %5072 = vmatprep.subr.mxu0 0.0
        %5073 = vmatpush1.msra.mxu0 %v1493
        %5074 = vmatprep.subr.mxu0 0.0
        %5075 = vmatpush1.msra.mxu0 %v1494
        %5076 = vmatprep.subr.mxu0 0.0
        %5077 = vmatpush1.msra.mxu0 %v1495
        %5078 = vmatprep.subr.mxu0 0.0
        %5079 = vmatpush1.msra.mxu0 %v1496
        %5080 = vmatprep.subr.mxu0 0.0
        %5081 = vmatpush1.msra.mxu0 %v1497
        %5082 = vmatprep.subr.mxu0 0.0
        %5083 = vmatpush1.msra.mxu0 %v1498
        %5084 = vmatprep.subr.mxu0 0.0
        %5085 = vmatpush1.msra.mxu0 %v1499
        %5086 = vmatprep.subr.mxu0 0.0
        %5087 = vmatpush1.msra.mxu0 %v1500
        %5088 = vmatprep.subr.mxu0 0.0
        %5089 = vmatpush1.msra.mxu0 %v1501
        %5090 = vmatprep.mubr.f32.mxu0 %v2233
        %5091 = vmatmul.mubr.f32.gmra.mrb[0].mxu0 %v2231
        %v5092 = vpop.f32.mrb[0].mxu0
        %v5093 = vadd.f32 %v5023, %v5092
        %v5094 = vpop.f32.mrb[0].mxu0
        %5095 = vdwg.mxu0
        %5096 = vmatprep.subr.mxu0 0.0
        %5097 = vmatpush1.msra.mxu0 %v1502
        %5098 = vmatprep.subr.mxu0 0.0
        %5099 = vmatpush1.msra.mxu0 %v1503
        %5100 = vmatprep.subr.mxu0 0.0
        %5101 = vmatpush1.msra.mxu0 %v1504
        %5102 = vmatprep.subr.mxu0 0.0
        %5103 = vmatpush1.msra.mxu0 %v1505
        %5104 = vmatprep.subr.mxu0 0.0
        %5105 = vmatpush1.msra.mxu0 %v1506
        %5106 = vmatprep.subr.mxu0 0.0
        %5107 = vmatpush1.msra.mxu0 %v1507
        %5108 = vmatprep.subr.mxu0 0.0
        %5109 = vmatpush1.msra.mxu0 %v1508
        %5110 = vmatprep.subr.mxu0 0.0
        %5111 = vmatpush1.msra.mxu0 %v1509
        %5112 = vmatprep.subr.mxu0 0.0
        %5113 = vmatpush1.msra.mxu0 %v1510
        %5114 = vmatprep.subr.mxu0 0.0
        %5115 = vmatpush1.msra.mxu0 %v1511
        %5116 = vmatprep.subr.mxu0 0.0
        %5117 = vmatpush1.msra.mxu0 %v1512
        %5118 = vmatprep.subr.mxu0 0.0
        %5119 = vmatpush1.msra.mxu0 %v1513
        %5120 = vmatprep.subr.mxu0 0.0
        %5121 = vmatpush1.msra.mxu0 %v1514
        %5122 = vmatprep.subr.mxu0 0.0
        %5123 = vmatpush1.msra.mxu0 %v1515
        %5124 = vmatprep.subr.mxu0 0.0
        %5125 = vmatpush1.msra.mxu0 %v1516
        %5126 = vmatprep.subr.mxu0 0.0
        %5127 = vmatpush1.msra.mxu0 %v1517
        %5128 = vmatprep.subr.mxu0 0.0
        %5129 = vmatpush1.msra.mxu0 %v1518
        %5130 = vmatprep.subr.mxu0 0.0
        %5131 = vmatpush1.msra.mxu0 %v1519
        %5132 = vmatprep.subr.mxu0 0.0
        %5133 = vmatpush1.msra.mxu0 %v1520
        %5134 = vmatprep.subr.mxu0 0.0
        %5135 = vmatpush1.msra.mxu0 %v1521
        %5136 = vmatprep.subr.mxu0 0.0
        %5137 = vmatpush1.msra.mxu0 %v1522
        %5138 = vmatprep.subr.mxu0 0.0
        %5139 = vmatpush1.msra.mxu0 %v1523
        %5140 = vmatprep.subr.mxu0 0.0
        %5141 = vmatpush1.msra.mxu0 %v1524
        %5142 = vmatprep.subr.mxu0 0.0
        %5143 = vmatpush1.msra.mxu0 %v1525
        %5144 = vmatprep.subr.mxu0 0.0
        %5145 = vmatpush1.msra.mxu0 %v1526
        %5146 = vmatprep.subr.mxu0 0.0
        %5147 = vmatpush1.msra.mxu0 %v1527
        %5148 = vmatprep.subr.mxu0 0.0
        %5149 = vmatpush1.msra.mxu0 %v1528
        %5150 = vmatprep.subr.mxu0 0.0
        %5151 = vmatpush1.msra.mxu0 %v1529
        %5152 = vmatprep.subr.mxu0 0.0
        %5153 = vmatpush1.msra.mxu0 %v1530
        %5154 = vmatprep.subr.mxu0 0.0
        %5155 = vmatpush1.msra.mxu0 %v1531
        %5156 = vmatprep.subr.mxu0 0.0
        %5157 = vmatpush1.msra.mxu0 %v1532
        %5158 = vmatprep.subr.mxu0 0.0
        %5159 = vmatpush1.msra.mxu0 %v1533
        %5160 = vmatprep.mubr.f32.mxu0 %v2249
        %5161 = vmatmul.mubr.f32.gmra.mrb[0].mxu0 %v2241
        %v5162 = vpop.f32.mrb[0].mxu0
        %v5163 = vadd.f32 %v5093, %v5162
        %v5164 = vpop.f32.mrb[0].mxu0
        %5165 = vdwg.mxu0
        %5166 = vmatprep.subr.mxu0 0.0
        %5167 = vmatpush1.msra.mxu0 %v1534
        %5168 = vmatprep.subr.mxu0 0.0
        %5169 = vmatpush1.msra.mxu0 %v1535
        %5170 = vmatprep.subr.mxu0 0.0
        %5171 = vmatpush1.msra.mxu0 %v1536
        %5172 = vmatprep.subr.mxu0 0.0
        %5173 = vmatpush1.msra.mxu0 %v1537
        %5174 = vmatprep.subr.mxu0 0.0
        %5175 = vmatpush1.msra.mxu0 %v1538
        %5176 = vmatprep.subr.mxu0 0.0
        %5177 = vmatpush1.msra.mxu0 %v1539
        %5178 = vmatprep.subr.mxu0 0.0
        %5179 = vmatpush1.msra.mxu0 %v1540
        %5180 = vmatprep.subr.mxu0 0.0
        %5181 = vmatpush1.msra.mxu0 %v1541
        %5182 = vmatprep.subr.mxu0 0.0
        %5183 = vmatpush1.msra.mxu0 %v1542
        %5184 = vmatprep.subr.mxu0 0.0
        %5185 = vmatpush1.msra.mxu0 %v1543
        %5186 = vmatprep.subr.mxu0 0.0
        %5187 = vmatpush1.msra.mxu0 %v1544
        %5188 = vmatprep.subr.mxu0 0.0
        %5189 = vmatpush1.msra.mxu0 %v1545
        %5190 = vmatprep.subr.mxu0 0.0
        %5191 = vmatpush1.msra.mxu0 %v1546
        %5192 = vmatprep.subr.mxu0 0.0
        %5193 = vmatpush1.msra.mxu0 %v1547
        %5194 = vmatprep.subr.mxu0 0.0
        %5195 = vmatpush1.msra.mxu0 %v1548
        %5196 = vmatprep.subr.mxu0 0.0
        %5197 = vmatpush1.msra.mxu0 %v1549
        %5198 = vmatprep.subr.mxu0 0.0
        %5199 = vmatpush1.msra.mxu0 %v1550
        %5200 = vmatprep.subr.mxu0 0.0
        %5201 = vmatpush1.msra.mxu0 %v1551
        %5202 = vmatprep.subr.mxu0 0.0
        %5203 = vmatpush1.msra.mxu0 %v1552
        %5204 = vmatprep.subr.mxu0 0.0
        %5205 = vmatpush1.msra.mxu0 %v1553
        %5206 = vmatprep.subr.mxu0 0.0
        %5207 = vmatpush1.msra.mxu0 %v1554
        %5208 = vmatprep.subr.mxu0 0.0
        %5209 = vmatpush1.msra.mxu0 %v1555
        %5210 = vmatprep.subr.mxu0 0.0
        %5211 = vmatpush1.msra.mxu0 %v1556
        %5212 = vmatprep.subr.mxu0 0.0
        %5213 = vmatpush1.msra.mxu0 %v1557
        %5214 = vmatprep.subr.mxu0 0.0
        %5215 = vmatpush1.msra.mxu0 %v1558
        %5216 = vmatprep.subr.mxu0 0.0
        %5217 = vmatpush1.msra.mxu0 %v1559
        %5218 = vmatprep.subr.mxu0 0.0
        %5219 = vmatpush1.msra.mxu0 %v1560
        %5220 = vmatprep.subr.mxu0 0.0
        %5221 = vmatpush1.msra.mxu0 %v1561
        %5222 = vmatprep.subr.mxu0 0.0
        %5223 = vmatpush1.msra.mxu0 %v1562
        %5224 = vmatprep.subr.mxu0 0.0
        %5225 = vmatpush1.msra.mxu0 %v1563
        %5226 = vmatprep.subr.mxu0 0.0
        %5227 = vmatpush1.msra.mxu0 %v1564
        %5228 = vmatprep.subr.mxu0 0.0
        %5229 = vmatpush1.msra.mxu0 %v1565
        %5230 = vmatprep.mubr.f32.mxu0 %v2250
        %5231 = vmatmul.mubr.f32.gmra.mrb[0].mxu0 %v2248
        %v5232 = vpop.f32.mrb[0].mxu0
        %v5233 = vadd.f32 %v5163, %v5232
        %v5234 = vpop.f32.mrb[0].mxu0
        %5235 = vdwg.mxu0
        %5236 = vmatprep.subr.mxu0 0.0
        %5237 = vmatpush1.msra.mxu0 %v1566
        %5238 = vmatprep.subr.mxu0 0.0
        %5239 = vmatpush1.msra.mxu0 %v1567
        %5240 = vmatprep.subr.mxu0 0.0
        %5241 = vmatpush1.msra.mxu0 %v1568
        %5242 = vmatprep.subr.mxu0 0.0
        %5243 = vmatpush1.msra.mxu0 %v1569
        %5244 = vmatprep.subr.mxu0 0.0
        %5245 = vmatpush1.msra.mxu0 %v1570
        %5246 = vmatprep.subr.mxu0 0.0
        %5247 = vmatpush1.msra.mxu0 %v1571
        %5248 = vmatprep.subr.mxu0 0.0
        %5249 = vmatpush1.msra.mxu0 %v1572
        %5250 = vmatprep.subr.mxu0 0.0
        %5251 = vmatpush1.msra.mxu0 %v1573
        %5252 = vmatprep.subr.mxu0 0.0
        %5253 = vmatpush1.msra.mxu0 %v1574
        %5254 = vmatprep.subr.mxu0 0.0
        %5255 = vmatpush1.msra.mxu0 %v1575
        %5256 = vmatprep.subr.mxu0 0.0
        %5257 = vmatpush1.msra.mxu0 %v1576
        %5258 = vmatprep.subr.mxu0 0.0
        %5259 = vmatpush1.msra.mxu0 %v1577
        %5260 = vmatprep.subr.mxu0 0.0
        %5261 = vmatpush1.msra.mxu0 %v1578
        %5262 = vmatprep.subr.mxu0 0.0
        %5263 = vmatpush1.msra.mxu0 %v1579
        %5264 = vmatprep.subr.mxu0 0.0
        %5265 = vmatpush1.msra.mxu0 %v1580
        %5266 = vmatprep.subr.mxu0 0.0
        %5267 = vmatpush1.msra.mxu0 %v1581
        %5268 = vmatprep.subr.mxu0 0.0
        %5269 = vmatpush1.msra.mxu0 %v1582
        %5270 = vmatprep.subr.mxu0 0.0
        %5271 = vmatpush1.msra.mxu0 %v1583
        %5272 = vmatprep.subr.mxu0 0.0
        %5273 = vmatpush1.msra.mxu0 %v1584
        %5274 = vmatprep.subr.mxu0 0.0
        %5275 = vmatpush1.msra.mxu0 %v1585
        %5276 = vmatprep.subr.mxu0 0.0
        %5277 = vmatpush1.msra.mxu0 %v1586
        %5278 = vmatprep.subr.mxu0 0.0
        %5279 = vmatpush1.msra.mxu0 %v1587
        %5280 = vmatprep.subr.mxu0 0.0
        %5281 = vmatpush1.msra.mxu0 %v1588
        %5282 = vmatprep.subr.mxu0 0.0
        %5283 = vmatpush1.msra.mxu0 %v1589
        %5284 = vmatprep.subr.mxu0 0.0
        %5285 = vmatpush1.msra.mxu0 %v1590
        %5286 = vmatprep.subr.mxu0 0.0
        %5287 = vmatpush1.msra.mxu0 %v1591
        %5288 = vmatprep.subr.mxu0 0.0
        %5289 = vmatpush1.msra.mxu0 %v1592
        %5290 = vmatprep.subr.mxu0 0.0
        %5291 = vmatpush1.msra.mxu0 %v1593
        %5292 = vmatprep.subr.mxu0 0.0
        %5293 = vmatpush1.msra.mxu0 %v1594
        %5294 = vmatprep.subr.mxu0 0.0
        %5295 = vmatpush1.msra.mxu0 %v1595
        %5296 = vmatprep.subr.mxu0 0.0
        %5297 = vmatpush1.msra.mxu0 %v1596
        %5298 = vmatprep.subr.mxu0 0.0
        %5299 = vmatpush1.msra.mxu0 %v1597
        %5300 = vmatprep.mubr.f32.mxu0 %v2266
        %5301 = vmatmul.mubr.f32.gmra.mrb[0].mxu0 %v2258
        %v5302 = vpop.f32.mrb[0].mxu0
        %v5303 = vadd.f32 %v5233, %v5302
        %v5304 = vpop.f32.mrb[0].mxu0
        %5305 = vdwg.mxu0
        %5306 = vmatprep.subr.mxu0 0.0
        %5307 = vmatpush1.msra.mxu0 %v1598
        %5308 = vmatprep.subr.mxu0 0.0
        %5309 = vmatpush1.msra.mxu0 %v1599
        %5310 = vmatprep.subr.mxu0 0.0
        %5311 = vmatpush1.msra.mxu0 %v1600
        %5312 = vmatprep.subr.mxu0 0.0
        %5313 = vmatpush1.msra.mxu0 %v1601
        %5314 = vmatprep.subr.mxu0 0.0
        %5315 = vmatpush1.msra.mxu0 %v1602
        %5316 = vmatprep.subr.mxu0 0.0
        %5317 = vmatpush1.msra.mxu0 %v1603
        %5318 = vmatprep.subr.mxu0 0.0
        %5319 = vmatpush1.msra.mxu0 %v1604
        %5320 = vmatprep.subr.mxu0 0.0
        %5321 = vmatpush1.msra.mxu0 %v1605
        %5322 = vmatprep.subr.mxu0 0.0
        %5323 = vmatpush1.msra.mxu0 %v1606
        %5324 = vmatprep.subr.mxu0 0.0
        %5325 = vmatpush1.msra.mxu0 %v1607
        %5326 = vmatprep.subr.mxu0 0.0
        %5327 = vmatpush1.msra.mxu0 %v1608
        %5328 = vmatprep.subr.mxu0 0.0
        %5329 = vmatpush1.msra.mxu0 %v1609
        %5330 = vmatprep.subr.mxu0 0.0
        %5331 = vmatpush1.msra.mxu0 %v1610
        %5332 = vmatprep.subr.mxu0 0.0
        %5333 = vmatpush1.msra.mxu0 %v1611
        %5334 = vmatprep.subr.mxu0 0.0
        %5335 = vmatpush1.msra.mxu0 %v1612
        %5336 = vmatprep.subr.mxu0 0.0
        %5337 = vmatpush1.msra.mxu0 %v1613
        %5338 = vmatprep.subr.mxu0 0.0
        %5339 = vmatpush1.msra.mxu0 %v1614
        %5340 = vmatprep.subr.mxu0 0.0
        %5341 = vmatpush1.msra.mxu0 %v1615
        %5342 = vmatprep.subr.mxu0 0.0
        %5343 = vmatpush1.msra.mxu0 %v1616
        %5344 = vmatprep.subr.mxu0 0.0
        %5345 = vmatpush1.msra.mxu0 %v1617
        %5346 = vmatprep.subr.mxu0 0.0
        %5347 = vmatpush1.msra.mxu0 %v1618
        %5348 = vmatprep.subr.mxu0 0.0
        %5349 = vmatpush1.msra.mxu0 %v1619
        %5350 = vmatprep.subr.mxu0 0.0
        %5351 = vmatpush1.msra.mxu0 %v1620
        %5352 = vmatprep.subr.mxu0 0.0
        %5353 = vmatpush1.msra.mxu0 %v1621
        %5354 = vmatprep.subr.mxu0 0.0
        %5355 = vmatpush1.msra.mxu0 %v1622
        %5356 = vmatprep.subr.mxu0 0.0
        %5357 = vmatpush1.msra.mxu0 %v1623
        %5358 = vmatprep.subr.mxu0 0.0
        %5359 = vmatpush1.msra.mxu0 %v1624
        %5360 = vmatprep.subr.mxu0 0.0
        %5361 = vmatpush1.msra.mxu0 %v1625
        %5362 = vmatprep.subr.mxu0 0.0
        %5363 = vmatpush1.msra.mxu0 %v1626
        %5364 = vmatprep.subr.mxu0 0.0
        %5365 = vmatpush1.msra.mxu0 %v1627
        %5366 = vmatprep.subr.mxu0 0.0
        %5367 = vmatpush1.msra.mxu0 %v1628
        %5368 = vmatprep.subr.mxu0 0.0
        %5369 = vmatpush1.msra.mxu0 %v1629
        %5370 = vmatprep.mubr.f32.mxu0 %v2267
        %5371 = vmatmul.mubr.f32.gmra.mrb[0].mxu0 %v2265
        %v5372 = vpop.f32.mrb[0].mxu0
        %v5373 = vadd.f32 %v5303, %v5372
        %v5374 = vpop.f32.mrb[0].mxu0
        %5375 = vdwg.mxu0
        %5376 = vmatprep.subr.mxu0 0.0
        %5377 = vmatpush1.msra.mxu0 %v1630
        %5378 = vmatprep.subr.mxu0 0.0
        %5379 = vmatpush1.msra.mxu0 %v1631
        %5380 = vmatprep.subr.mxu0 0.0
        %5381 = vmatpush1.msra.mxu0 %v1632
        %5382 = vmatprep.subr.mxu0 0.0
        %5383 = vmatpush1.msra.mxu0 %v1633
        %5384 = vmatprep.subr.mxu0 0.0
        %5385 = vmatpush1.msra.mxu0 %v1634
        %5386 = vmatprep.subr.mxu0 0.0
        %5387 = vmatpush1.msra.mxu0 %v1635
        %5388 = vmatprep.subr.mxu0 0.0
        %5389 = vmatpush1.msra.mxu0 %v1636
        %5390 = vmatprep.subr.mxu0 0.0
        %5391 = vmatpush1.msra.mxu0 %v1637
        %5392 = vmatprep.subr.mxu0 0.0
        %5393 = vmatpush1.msra.mxu0 %v1638
        %5394 = vmatprep.subr.mxu0 0.0
        %5395 = vmatpush1.msra.mxu0 %v1639
        %5396 = vmatprep.subr.mxu0 0.0
        %5397 = vmatpush1.msra.mxu0 %v1640
        %5398 = vmatprep.subr.mxu0 0.0
        %5399 = vmatpush1.msra.mxu0 %v1641
        %5400 = vmatprep.subr.mxu0 0.0
        %5401 = vmatpush1.msra.mxu0 %v1642
        %5402 = vmatprep.subr.mxu0 0.0
        %5403 = vmatpush1.msra.mxu0 %v1643
        %5404 = vmatprep.subr.mxu0 0.0
        %5405 = vmatpush1.msra.mxu0 %v1644
        %5406 = vmatprep.subr.mxu0 0.0
        %5407 = vmatpush1.msra.mxu0 %v1645
        %5408 = vmatprep.subr.mxu0 0.0
        %5409 = vmatpush1.msra.mxu0 %v1646
        %5410 = vmatprep.subr.mxu0 0.0
        %5411 = vmatpush1.msra.mxu0 %v1647
        %5412 = vmatprep.subr.mxu0 0.0
        %5413 = vmatpush1.msra.mxu0 %v1648
        %5414 = vmatprep.subr.mxu0 0.0
        %5415 = vmatpush1.msra.mxu0 %v1649
        %5416 = vmatprep.subr.mxu0 0.0
        %5417 = vmatpush1.msra.mxu0 %v1650
        %5418 = vmatprep.subr.mxu0 0.0
        %5419 = vmatpush1.msra.mxu0 %v1651
        %5420 = vmatprep.subr.mxu0 0.0
        %5421 = vmatpush1.msra.mxu0 %v1652
        %5422 = vmatprep.subr.mxu0 0.0
        %5423 = vmatpush1.msra.mxu0 %v1653
        %5424 = vmatprep.subr.mxu0 0.0
        %5425 = vmatpush1.msra.mxu0 %v1654
        %5426 = vmatprep.subr.mxu0 0.0
        %5427 = vmatpush1.msra.mxu0 %v1655
        %5428 = vmatprep.subr.mxu0 0.0
        %5429 = vmatpush1.msra.mxu0 %v1656
        %5430 = vmatprep.subr.mxu0 0.0
        %5431 = vmatpush1.msra.mxu0 %v1657
        %5432 = vmatprep.subr.mxu0 0.0
        %5433 = vmatpush1.msra.mxu0 %v1658
        %5434 = vmatprep.subr.mxu0 0.0
        %5435 = vmatpush1.msra.mxu0 %v1659
        %5436 = vmatprep.subr.mxu0 0.0
        %5437 = vmatpush1.msra.mxu0 %v1660
        %5438 = vmatprep.subr.mxu0 0.0
        %5439 = vmatpush1.msra.mxu0 %v1661
        %5440 = vmatprep.mubr.f32.mxu0 %v2283
        %5441 = vmatmul.mubr.f32.gmra.mrb[0].mxu0 %v2275
        %v5442 = vpop.f32.mrb[0].mxu0
        %v5443 = vadd.f32 %v5373, %v5442
        %v5444 = vpop.f32.mrb[0].mxu0
        %5445 = vdwg.mxu0
        %5446 = vmatprep.subr.mxu0 0.0
        %5447 = vmatpush1.msra.mxu0 %v1662
        %5448 = vmatprep.subr.mxu0 0.0
        %5449 = vmatpush1.msra.mxu0 %v1663
        %5450 = vmatprep.subr.mxu0 0.0
        %5451 = vmatpush1.msra.mxu0 %v1664
        %5452 = vmatprep.subr.mxu0 0.0
        %5453 = vmatpush1.msra.mxu0 %v1665
        %5454 = vmatprep.subr.mxu0 0.0
        %5455 = vmatpush1.msra.mxu0 %v1666
        %5456 = vmatprep.subr.mxu0 0.0
        %5457 = vmatpush1.msra.mxu0 %v1667
        %5458 = vmatprep.subr.mxu0 0.0
        %5459 = vmatpush1.msra.mxu0 %v1668
        %5460 = vmatprep.subr.mxu0 0.0
        %5461 = vmatpush1.msra.mxu0 %v1669
        %5462 = vmatprep.subr.mxu0 0.0
        %5463 = vmatpush1.msra.mxu0 %v1670
        %5464 = vmatprep.subr.mxu0 0.0
        %5465 = vmatpush1.msra.mxu0 %v1671
        %5466 = vmatprep.subr.mxu0 0.0
        %5467 = vmatpush1.msra.mxu0 %v1672
        %5468 = vmatprep.subr.mxu0 0.0
        %5469 = vmatpush1.msra.mxu0 %v1673
        %5470 = vmatprep.subr.mxu0 0.0
        %5471 = vmatpush1.msra.mxu0 %v1674
        %5472 = vmatprep.subr.mxu0 0.0
        %5473 = vmatpush1.msra.mxu0 %v1675
        %5474 = vmatprep.subr.mxu0 0.0
        %5475 = vmatpush1.msra.mxu0 %v1676
        %5476 = vmatprep.subr.mxu0 0.0
        %5477 = vmatpush1.msra.mxu0 %v1677
        %5478 = vmatprep.subr.mxu0 0.0
        %5479 = vmatpush1.msra.mxu0 %v1678
        %5480 = vmatprep.subr.mxu0 0.0
        %5481 = vmatpush1.msra.mxu0 %v1679
        %5482 = vmatprep.subr.mxu0 0.0
        %5483 = vmatpush1.msra.mxu0 %v1680
        %5484 = vmatprep.subr.mxu0 0.0
        %5485 = vmatpush1.msra.mxu0 %v1681
        %5486 = vmatprep.subr.mxu0 0.0
        %5487 = vmatpush1.msra.mxu0 %v1682
        %5488 = vmatprep.subr.mxu0 0.0
        %5489 = vmatpush1.msra.mxu0 %v1683
        %5490 = vmatprep.subr.mxu0 0.0
        %5491 = vmatpush1.msra.mxu0 %v1684
        %5492 = vmatprep.subr.mxu0 0.0
        %5493 = vmatpush1.msra.mxu0 %v1685
        %5494 = vmatprep.subr.mxu0 0.0
        %5495 = vmatpush1.msra.mxu0 %v1686
        %5496 = vmatprep.subr.mxu0 0.0
        %5497 = vmatpush1.msra.mxu0 %v1687
        %5498 = vmatprep.subr.mxu0 0.0
        %5499 = vmatpush1.msra.mxu0 %v1688
        %5500 = vmatprep.subr.mxu0 0.0
        %5501 = vmatpush1.msra.mxu0 %v1689
        %5502 = vmatprep.subr.mxu0 0.0
        %5503 = vmatpush1.msra.mxu0 %v1690
        %5504 = vmatprep.subr.mxu0 0.0
        %5505 = vmatpush1.msra.mxu0 %v1691
        %5506 = vmatprep.subr.mxu0 0.0
        %5507 = vmatpush1.msra.mxu0 %v1692
        %5508 = vmatprep.subr.mxu0 0.0
        %5509 = vmatpush1.msra.mxu0 %v1693
        %5510 = vmatprep.mubr.f32.mxu0 %v2284
        %5511 = vmatmul.mubr.f32.gmra.mrb[0].mxu0 %v2282
        %v5512 = vpop.f32.mrb[0].mxu0
        %v5513 = vadd.f32 %v5443, %v5512
        %v5514 = vpop.f32.mrb[0].mxu0
        %5515 = vdwg.mxu0
        %5516 = vmatprep.subr.mxu0 0.0
        %5517 = vmatpush1.msra.mxu0 %v1694
        %5518 = vmatprep.subr.mxu0 0.0
        %5519 = vmatpush1.msra.mxu0 %v1695
        %5520 = vmatprep.subr.mxu0 0.0
        %5521 = vmatpush1.msra.mxu0 %v1696
        %5522 = vmatprep.subr.mxu0 0.0
        %5523 = vmatpush1.msra.mxu0 %v1697
        %5524 = vmatprep.subr.mxu0 0.0
        %5525 = vmatpush1.msra.mxu0 %v1698
        %5526 = vmatprep.subr.mxu0 0.0
        %5527 = vmatpush1.msra.mxu0 %v1699
        %5528 = vmatprep.subr.mxu0 0.0
        %5529 = vmatpush1.msra.mxu0 %v1700
        %5530 = vmatprep.subr.mxu0 0.0
        %5531 = vmatpush1.msra.mxu0 %v1701
        %5532 = vmatprep.subr.mxu0 0.0
        %5533 = vmatpush1.msra.mxu0 %v1702
        %5534 = vmatprep.subr.mxu0 0.0
        %5535 = vmatpush1.msra.mxu0 %v1703
        %5536 = vmatprep.subr.mxu0 0.0
        %5537 = vmatpush1.msra.mxu0 %v1704
        %5538 = vmatprep.subr.mxu0 0.0
        %5539 = vmatpush1.msra.mxu0 %v1705
        %5540 = vmatprep.subr.mxu0 0.0
        %5541 = vmatpush1.msra.mxu0 %v1706
        %5542 = vmatprep.subr.mxu0 0.0
        %5543 = vmatpush1.msra.mxu0 %v1707
        %5544 = vmatprep.subr.mxu0 0.0
        %5545 = vmatpush1.msra.mxu0 %v1708
        %5546 = vmatprep.subr.mxu0 0.0
        %5547 = vmatpush1.msra.mxu0 %v1709
        %5548 = vmatprep.subr.mxu0 0.0
        %5549 = vmatpush1.msra.mxu0 %v1710
        %5550 = vmatprep.subr.mxu0 0.0
        %5551 = vmatpush1.msra.mxu0 %v1711
        %5552 = vmatprep.subr.mxu0 0.0
        %5553 = vmatpush1.msra.mxu0 %v1712
        %5554 = vmatprep.subr.mxu0 0.0
        %5555 = vmatpush1.msra.mxu0 %v1713
        %5556 = vmatprep.subr.mxu0 0.0
        %5557 = vmatpush1.msra.mxu0 %v1714
        %5558 = vmatprep.subr.mxu0 0.0
        %5559 = vmatpush1.msra.mxu0 %v1715
        %5560 = vmatprep.subr.mxu0 0.0
        %5561 = vmatpush1.msra.mxu0 %v1716
        %5562 = vmatprep.subr.mxu0 0.0
        %5563 = vmatpush1.msra.mxu0 %v1717
        %5564 = vmatprep.subr.mxu0 0.0
        %5565 = vmatpush1.msra.mxu0 %v1718
        %5566 = vmatprep.subr.mxu0 0.0
        %5567 = vmatpush1.msra.mxu0 %v1719
        %5568 = vmatprep.subr.mxu0 0.0
        %5569 = vmatpush1.msra.mxu0 %v1720
        %5570 = vmatprep.subr.mxu0 0.0
        %5571 = vmatpush1.msra.mxu0 %v1721
        %5572 = vmatprep.subr.mxu0 0.0
        %5573 = vmatpush1.msra.mxu0 %v1722
        %5574 = vmatprep.subr.mxu0 0.0
        %5575 = vmatpush1.msra.mxu0 %v1723
        %5576 = vmatprep.subr.mxu0 0.0
        %5577 = vmatpush1.msra.mxu0 %v1724
        %5578 = vmatprep.subr.mxu0 0.0
        %5579 = vmatpush1.msra.mxu0 %v1725
        %5580 = vmatprep.mubr.f32.mxu0 %v2300
        %5581 = vmatmul.mubr.f32.gmra.mrb[0].mxu0 %v2292
        %v5582 = vpop.f32.mrb[0].mxu0
        %v5583 = vadd.f32 %v5513, %v5582
        %v5584 = vpop.f32.mrb[0].mxu0
        %5585 = vdwg.mxu0
        %5586 = vmatprep.subr.mxu0 0.0
        %5587 = vmatpush1.msra.mxu0 %v1726
        %5588 = vmatprep.subr.mxu0 0.0
        %5589 = vmatpush1.msra.mxu0 %v1727
        %5590 = vmatprep.subr.mxu0 0.0
        %5591 = vmatpush1.msra.mxu0 %v1728
        %5592 = vmatprep.subr.mxu0 0.0
        %5593 = vmatpush1.msra.mxu0 %v1729
        %5594 = vmatprep.subr.mxu0 0.0
        %5595 = vmatpush1.msra.mxu0 %v1730
        %5596 = vmatprep.subr.mxu0 0.0
        %5597 = vmatpush1.msra.mxu0 %v1731
        %5598 = vmatprep.subr.mxu0 0.0
        %5599 = vmatpush1.msra.mxu0 %v1732
        %5600 = vmatprep.subr.mxu0 0.0
        %5601 = vmatpush1.msra.mxu0 %v1733
        %5602 = vmatprep.subr.mxu0 0.0
        %5603 = vmatpush1.msra.mxu0 %v1734
        %5604 = vmatprep.subr.mxu0 0.0
        %5605 = vmatpush1.msra.mxu0 %v1735
        %5606 = vmatprep.subr.mxu0 0.0
        %5607 = vmatpush1.msra.mxu0 %v1736
        %5608 = vmatprep.subr.mxu0 0.0
        %5609 = vmatpush1.msra.mxu0 %v1737
        %5610 = vmatprep.subr.mxu0 0.0
        %5611 = vmatpush1.msra.mxu0 %v1738
        %5612 = vmatprep.subr.mxu0 0.0
        %5613 = vmatpush1.msra.mxu0 %v1739
        %5614 = vmatprep.subr.mxu0 0.0
        %5615 = vmatpush1.msra.mxu0 %v1740
        %5616 = vmatprep.subr.mxu0 0.0
        %5617 = vmatpush1.msra.mxu0 %v1741
        %5618 = vmatprep.subr.mxu0 0.0
        %5619 = vmatpush1.msra.mxu0 %v1742
        %5620 = vmatprep.subr.mxu0 0.0
        %5621 = vmatpush1.msra.mxu0 %v1743
        %5622 = vmatprep.subr.mxu0 0.0
        %5623 = vmatpush1.msra.mxu0 %v1744
        %5624 = vmatprep.subr.mxu0 0.0
        %5625 = vmatpush1.msra.mxu0 %v1745
        %5626 = vmatprep.subr.mxu0 0.0
        %5627 = vmatpush1.msra.mxu0 %v1746
        %5628 = vmatprep.subr.mxu0 0.0
        %5629 = vmatpush1.msra.mxu0 %v1747
        %5630 = vmatprep.subr.mxu0 0.0
        %5631 = vmatpush1.msra.mxu0 %v1748
        %5632 = vmatprep.subr.mxu0 0.0
        %5633 = vmatpush1.msra.mxu0 %v1749
        %5634 = vmatprep.subr.mxu0 0.0
        %5635 = vmatpush1.msra.mxu0 %v1750
        %5636 = vmatprep.subr.mxu0 0.0
        %5637 = vmatpush1.msra.mxu0 %v1751
        %5638 = vmatprep.subr.mxu0 0.0
        %5639 = vmatpush1.msra.mxu0 %v1752
        %5640 = vmatprep.subr.mxu0 0.0
        %5641 = vmatpush1.msra.mxu0 %v1753
        %5642 = vmatprep.subr.mxu0 0.0
        %5643 = vmatpush1.msra.mxu0 %v1754
        %5644 = vmatprep.subr.mxu0 0.0
        %5645 = vmatpush1.msra.mxu0 %v1755
        %5646 = vmatprep.subr.mxu0 0.0
        %5647 = vmatpush1.msra.mxu0 %v1756
        %5648 = vmatprep.subr.mxu0 0.0
        %5649 = vmatpush1.msra.mxu0 %v1757
        %5650 = vmatprep.mubr.f32.mxu0 %v2301
        %5651 = vmatmul.mubr.f32.gmra.mrb[0].mxu0 %v2299
        %v5652 = vpop.f32.mrb[0].mxu0
        %v5653 = vadd.f32 %v5583, %v5652
        %v5654 = vpop.f32.mrb[0].mxu0
        %5655 = vdwg.mxu0
        %5656 = vmatprep.subr.mxu0 0.0
        %5657 = vmatpush1.msra.mxu0 %v1758
        %5658 = vmatprep.subr.mxu0 0.0
        %5659 = vmatpush1.msra.mxu0 %v1759
        %5660 = vmatprep.subr.mxu0 0.0
        %5661 = vmatpush1.msra.mxu0 %v1760
        %5662 = vmatprep.subr.mxu0 0.0
        %5663 = vmatpush1.msra.mxu0 %v1761
        %5664 = vmatprep.subr.mxu0 0.0
        %5665 = vmatpush1.msra.mxu0 %v1762
        %5666 = vmatprep.subr.mxu0 0.0
        %5667 = vmatpush1.msra.mxu0 %v1763
        %5668 = vmatprep.subr.mxu0 0.0
        %5669 = vmatpush1.msra.mxu0 %v1764
        %5670 = vmatprep.subr.mxu0 0.0
        %5671 = vmatpush1.msra.mxu0 %v1765
        %5672 = vmatprep.subr.mxu0 0.0
        %5673 = vmatpush1.msra.mxu0 %v1766
        %5674 = vmatprep.subr.mxu0 0.0
        %5675 = vmatpush1.msra.mxu0 %v1767
        %5676 = vmatprep.subr.mxu0 0.0
        %5677 = vmatpush1.msra.mxu0 %v1768
        %5678 = vmatprep.subr.mxu0 0.0
        %5679 = vmatpush1.msra.mxu0 %v1769
        %5680 = vmatprep.subr.mxu0 0.0
        %5681 = vmatpush1.msra.mxu0 %v1770
        %5682 = vmatprep.subr.mxu0 0.0
        %5683 = vmatpush1.msra.mxu0 %v1771
        %5684 = vmatprep.subr.mxu0 0.0
        %5685 = vmatpush1.msra.mxu0 %v1772
        %5686 = vmatprep.subr.mxu0 0.0
        %5687 = vmatpush1.msra.mxu0 %v1773
        %5688 = vmatprep.subr.mxu0 0.0
        %5689 = vmatpush1.msra.mxu0 %v1774
        %5690 = vmatprep.subr.mxu0 0.0
        %5691 = vmatpush1.msra.mxu0 %v1775
        %5692 = vmatprep.subr.mxu0 0.0
        %5693 = vmatpush1.msra.mxu0 %v1776
        %5694 = vmatprep.subr.mxu0 0.0
        %5695 = vmatpush1.msra.mxu0 %v1777
        %5696 = vmatprep.subr.mxu0 0.0
        %5697 = vmatpush1.msra.mxu0 %v1778
        %5698 = vmatprep.subr.mxu0 0.0
        %5699 = vmatpush1.msra.mxu0 %v1779
        %5700 = vmatprep.subr.mxu0 0.0
        %5701 = vmatpush1.msra.mxu0 %v1780
        %5702 = vmatprep.subr.mxu0 0.0
        %5703 = vmatpush1.msra.mxu0 %v1781
        %5704 = vmatprep.subr.mxu0 0.0
        %5705 = vmatpush1.msra.mxu0 %v1782
        %5706 = vmatprep.subr.mxu0 0.0
        %5707 = vmatpush1.msra.mxu0 %v1783
        %5708 = vmatprep.subr.mxu0 0.0
        %5709 = vmatpush1.msra.mxu0 %v1784
        %5710 = vmatprep.subr.mxu0 0.0
        %5711 = vmatpush1.msra.mxu0 %v1785
        %5712 = vmatprep.subr.mxu0 0.0
        %5713 = vmatpush1.msra.mxu0 %v1786
        %5714 = vmatprep.subr.mxu0 0.0
        %5715 = vmatpush1.msra.mxu0 %v1787
        %5716 = vmatprep.subr.mxu0 0.0
        %5717 = vmatpush1.msra.mxu0 %v1788
        %5718 = vmatprep.subr.mxu0 0.0
        %5719 = vmatpush1.msra.mxu0 %v1789
        %5720 = vmatprep.mubr.f32.mxu0 %v2317
        %5721 = vmatmul.mubr.f32.gmra.mrb[0].mxu0 %v2309
        %v5722 = vpop.f32.mrb[0].mxu0
        %v5723 = vadd.f32 %v5653, %v5722
        %v5724 = vpop.f32.mrb[0].mxu0
        %5725 = vdwg.mxu0
        %5726 = vmatprep.subr.mxu0 0.0
        %5727 = vmatpush1.msra.mxu0 %v1790
        %5728 = vmatprep.subr.mxu0 0.0
        %5729 = vmatpush1.msra.mxu0 %v1791
        %5730 = vmatprep.subr.mxu0 0.0
        %5731 = vmatpush1.msra.mxu0 %v1792
        %5732 = vmatprep.subr.mxu0 0.0
        %5733 = vmatpush1.msra.mxu0 %v1793
        %5734 = vmatprep.subr.mxu0 0.0
        %5735 = vmatpush1.msra.mxu0 %v1794
        %5736 = vmatprep.subr.mxu0 0.0
        %5737 = vmatpush1.msra.mxu0 %v1795
        %5738 = vmatprep.subr.mxu0 0.0
        %5739 = vmatpush1.msra.mxu0 %v1796
        %5740 = vmatprep.subr.mxu0 0.0
        %5741 = vmatpush1.msra.mxu0 %v1797
        %5742 = vmatprep.subr.mxu0 0.0
        %5743 = vmatpush1.msra.mxu0 %v1798
        %5744 = vmatprep.subr.mxu0 0.0
        %5745 = vmatpush1.msra.mxu0 %v1799
        %5746 = vmatprep.subr.mxu0 0.0
        %5747 = vmatpush1.msra.mxu0 %v1800
        %5748 = vmatprep.subr.mxu0 0.0
        %5749 = vmatpush1.msra.mxu0 %v1801
        %5750 = vmatprep.subr.mxu0 0.0
        %5751 = vmatpush1.msra.mxu0 %v1802
        %5752 = vmatprep.subr.mxu0 0.0
        %5753 = vmatpush1.msra.mxu0 %v1803
        %5754 = vmatprep.subr.mxu0 0.0
        %5755 = vmatpush1.msra.mxu0 %v1804
        %5756 = vmatprep.subr.mxu0 0.0
        %5757 = vmatpush1.msra.mxu0 %v1805
        %5758 = vmatprep.subr.mxu0 0.0
        %5759 = vmatpush1.msra.mxu0 %v1806
        %5760 = vmatprep.subr.mxu0 0.0
        %5761 = vmatpush1.msra.mxu0 %v1807
        %5762 = vmatprep.subr.mxu0 0.0
        %5763 = vmatpush1.msra.mxu0 %v1808
        %5764 = vmatprep.subr.mxu0 0.0
        %5765 = vmatpush1.msra.mxu0 %v1809
        %5766 = vmatprep.subr.mxu0 0.0
        %5767 = vmatpush1.msra.mxu0 %v1810
        %5768 = vmatprep.subr.mxu0 0.0
        %5769 = vmatpush1.msra.mxu0 %v1811
        %5770 = vmatprep.subr.mxu0 0.0
        %5771 = vmatpush1.msra.mxu0 %v1812
        %5772 = vmatprep.subr.mxu0 0.0
        %5773 = vmatpush1.msra.mxu0 %v1813
        %5774 = vmatprep.subr.mxu0 0.0
        %5775 = vmatpush1.msra.mxu0 %v1814
        %5776 = vmatprep.subr.mxu0 0.0
        %5777 = vmatpush1.msra.mxu0 %v1815
        %5778 = vmatprep.subr.mxu0 0.0
        %5779 = vmatpush1.msra.mxu0 %v1816
        %5780 = vmatprep.subr.mxu0 0.0
        %5781 = vmatpush1.msra.mxu0 %v1817
        %5782 = vmatprep.subr.mxu0 0.0
        %5783 = vmatpush1.msra.mxu0 %v1818
        %5784 = vmatprep.subr.mxu0 0.0
        %5785 = vmatpush1.msra.mxu0 %v1819
        %5786 = vmatprep.subr.mxu0 0.0
        %5787 = vmatpush1.msra.mxu0 %v1820
        %5788 = vmatprep.subr.mxu0 0.0
        %5789 = vmatpush1.msra.mxu0 %v1821
        %5790 = vmatprep.mubr.f32.mxu0 %v2318
        %5791 = vmatmul.mubr.f32.gmra.mrb[0].mxu0 %v2316
        %v5792 = vpop.f32.mrb[0].mxu0
        %v5793 = vadd.f32 %v5723, %v5792
        %v5794 = vpop.f32.mrb[0].mxu0
        %5795 = vdwg.mxu0
        %5796 = vmatprep.subr.mxu0 0.0
        %5797 = vmatpush1.msra.mxu0 %v1822
        %5798 = vmatprep.subr.mxu0 0.0
        %5799 = vmatpush1.msra.mxu0 %v1823
        %5800 = vmatprep.subr.mxu0 0.0
        %5801 = vmatpush1.msra.mxu0 %v1824
        %5802 = vmatprep.subr.mxu0 0.0
        %5803 = vmatpush1.msra.mxu0 %v1825
        %5804 = vmatprep.subr.mxu0 0.0
        %5805 = vmatpush1.msra.mxu0 %v1826
        %5806 = vmatprep.subr.mxu0 0.0
        %5807 = vmatpush1.msra.mxu0 %v1827
        %5808 = vmatprep.subr.mxu0 0.0
        %5809 = vmatpush1.msra.mxu0 %v1828
        %5810 = vmatprep.subr.mxu0 0.0
        %5811 = vmatpush1.msra.mxu0 %v1829
        %5812 = vmatprep.subr.mxu0 0.0
        %5813 = vmatpush1.msra.mxu0 %v1830
        %5814 = vmatprep.subr.mxu0 0.0
        %5815 = vmatpush1.msra.mxu0 %v1831
        %5816 = vmatprep.subr.mxu0 0.0
        %5817 = vmatpush1.msra.mxu0 %v1832
        %5818 = vmatprep.subr.mxu0 0.0
        %5819 = vmatpush1.msra.mxu0 %v1833
        %5820 = vmatprep.subr.mxu0 0.0
        %5821 = vmatpush1.msra.mxu0 %v1834
        %5822 = vmatprep.subr.mxu0 0.0
        %5823 = vmatpush1.msra.mxu0 %v1835
        %5824 = vmatprep.subr.mxu0 0.0
        %5825 = vmatpush1.msra.mxu0 %v1836
        %5826 = vmatprep.subr.mxu0 0.0
        %5827 = vmatpush1.msra.mxu0 %v1837
        %5828 = vmatprep.subr.mxu0 0.0
        %5829 = vmatpush1.msra.mxu0 %v1838
        %5830 = vmatprep.subr.mxu0 0.0
        %5831 = vmatpush1.msra.mxu0 %v1839
        %5832 = vmatprep.subr.mxu0 0.0
        %5833 = vmatpush1.msra.mxu0 %v1840
        %5834 = vmatprep.subr.mxu0 0.0
        %5835 = vmatpush1.msra.mxu0 %v1841
        %5836 = vmatprep.subr.mxu0 0.0
        %5837 = vmatpush1.msra.mxu0 %v1842
        %5838 = vmatprep.subr.mxu0 0.0
        %5839 = vmatpush1.msra.mxu0 %v1843
        %5840 = vmatprep.subr.mxu0 0.0
        %5841 = vmatpush1.msra.mxu0 %v1844
        %5842 = vmatprep.subr.mxu0 0.0
        %5843 = vmatpush1.msra.mxu0 %v1845
        %5844 = vmatprep.subr.mxu0 0.0
        %5845 = vmatpush1.msra.mxu0 %v1846
        %5846 = vmatprep.subr.mxu0 0.0
        %5847 = vmatpush1.msra.mxu0 %v1847
        %5848 = vmatprep.subr.mxu0 0.0
        %5849 = vmatpush1.msra.mxu0 %v1848
        %5850 = vmatprep.subr.mxu0 0.0
        %5851 = vmatpush1.msra.mxu0 %v1849
        %5852 = vmatprep.subr.mxu0 0.0
        %5853 = vmatpush1.msra.mxu0 %v1850
        %5854 = vmatprep.subr.mxu0 0.0
        %5855 = vmatpush1.msra.mxu0 %v1851
        %5856 = vmatprep.subr.mxu0 0.0
        %5857 = vmatpush1.msra.mxu0 %v1852
        %5858 = vmatprep.subr.mxu0 0.0
        %5859 = vmatpush1.msra.mxu0 %v1853
        %5860 = vmatprep.mubr.f32.mxu0 %v2334
        %5861 = vmatmul.mubr.f32.gmra.mrb[0].mxu0 %v2326
        %v5862 = vpop.f32.mrb[0].mxu0
        %v5863 = vadd.f32 %v5793, %v5862
        %v5864 = vpop.f32.mrb[0].mxu0
        %5865 = vdwg.mxu0
        %5866 = vmatprep.subr.mxu0 0.0
        %5867 = vmatpush1.msra.mxu0 %v1854
        %5868 = vmatprep.subr.mxu0 0.0
        %5869 = vmatpush1.msra.mxu0 %v1855
        %5870 = vmatprep.subr.mxu0 0.0
        %5871 = vmatpush1.msra.mxu0 %v1856
        %5872 = vmatprep.subr.mxu0 0.0
        %5873 = vmatpush1.msra.mxu0 %v1857
        %5874 = vmatprep.subr.mxu0 0.0
        %5875 = vmatpush1.msra.mxu0 %v1858
        %5876 = vmatprep.subr.mxu0 0.0
        %5877 = vmatpush1.msra.mxu0 %v1859
        %5878 = vmatprep.subr.mxu0 0.0
        %5879 = vmatpush1.msra.mxu0 %v1860
        %5880 = vmatprep.subr.mxu0 0.0
        %5881 = vmatpush1.msra.mxu0 %v1861
        %5882 = vmatprep.subr.mxu0 0.0
        %5883 = vmatpush1.msra.mxu0 %v1862
        %5884 = vmatprep.subr.mxu0 0.0
        %5885 = vmatpush1.msra.mxu0 %v1863
        %5886 = vmatprep.subr.mxu0 0.0
        %5887 = vmatpush1.msra.mxu0 %v1864
        %5888 = vmatprep.subr.mxu0 0.0
        %5889 = vmatpush1.msra.mxu0 %v1865
        %5890 = vmatprep.subr.mxu0 0.0
        %5891 = vmatpush1.msra.mxu0 %v1866
        %5892 = vmatprep.subr.mxu0 0.0
        %5893 = vmatpush1.msra.mxu0 %v1867
        %5894 = vmatprep.subr.mxu0 0.0
        %5895 = vmatpush1.msra.mxu0 %v1868
        %5896 = vmatprep.subr.mxu0 0.0
        %5897 = vmatpush1.msra.mxu0 %v1869
        %5898 = vmatprep.subr.mxu0 0.0
        %5899 = vmatpush1.msra.mxu0 %v1870
        %5900 = vmatprep.subr.mxu0 0.0
        %5901 = vmatpush1.msra.mxu0 %v1871
        %5902 = vmatprep.subr.mxu0 0.0
        %5903 = vmatpush1.msra.mxu0 %v1872
        %5904 = vmatprep.subr.mxu0 0.0
        %5905 = vmatpush1.msra.mxu0 %v1873
        %5906 = vmatprep.subr.mxu0 0.0
        %5907 = vmatpush1.msra.mxu0 %v1874
        %5908 = vmatprep.subr.mxu0 0.0
        %5909 = vmatpush1.msra.mxu0 %v1875
        %5910 = vmatprep.subr.mxu0 0.0
        %5911 = vmatpush1.msra.mxu0 %v1876
        %5912 = vmatprep.subr.mxu0 0.0
        %5913 = vmatpush1.msra.mxu0 %v1877
        %5914 = vmatprep.subr.mxu0 0.0
        %5915 = vmatpush1.msra.mxu0 %v1878
        %5916 = vmatprep.subr.mxu0 0.0
        %5917 = vmatpush1.msra.mxu0 %v1879
        %5918 = vmatprep.subr.mxu0 0.0
        %5919 = vmatpush1.msra.mxu0 %v1880
        %5920 = vmatprep.subr.mxu0 0.0
        %5921 = vmatpush1.msra.mxu0 %v1881
        %5922 = vmatprep.subr.mxu0 0.0
        %5923 = vmatpush1.msra.mxu0 %v1882
        %5924 = vmatprep.subr.mxu0 0.0
        %5925 = vmatpush1.msra.mxu0 %v1883
        %5926 = vmatprep.subr.mxu0 0.0
        %5927 = vmatpush1.msra.mxu0 %v1884
        %5928 = vmatprep.subr.mxu0 0.0
        %5929 = vmatpush1.msra.mxu0 %v1885
        %5930 = vmatprep.mubr.f32.mxu0 %v2335
        %5931 = vmatmul.mubr.f32.gmra.mrb[0].mxu0 %v2333
        %v5932 = vpop.f32.mrb[0].mxu0
        %v5933 = vadd.f32 %v5863, %v5932
        %v5934 = vpop.f32.mrb[0].mxu0
        %5935 = vdwg.mxu0
        %v5936 = vadd.f32 %v260, %v5933
        %5937 = vst [vmem:[#allocation9] sm:$0x3] %v5936
        %p5938 = scmp.eq.s32.totalorder %s24, 7
        // Predicated region
        $region49: #{embedding_forward.1} parent=31 // pred_check
          %p5939 = pneg %p5938
        $region50: #{embedding_forward.1} parent=31 // pred_check_branch
          %5941 = sbr.rel (%p5939) target = $region52
        $region51: #{embedding_forward.1} parent=31 // pred_region
          %v5942 = vld [vmem:[#allocation9] sm:$0x3]
          %v5943 = vld [vmem:[#allocation7] sm:$0x1]
          %v5945 = vlaneseq
          %v5946 = vshrl.u32 %v5945, 7
          %v5947 = vsub.s32 0, %v5946
          %v5948 = vrot.slane %v5943, %v5947
          %v5950 = vadd.f32 %v5942, %v5948
          %5951 = vst [vmem:[#allocation9] sm:$0x3] %v5950
          %v5952 = vmax.f32 %v5950, 0.0
          %5953 = vst [vmem:[#allocation8] sm:$0x3] %v5952
        $region52: #{embedding_forward.1} parent=31 // pred_fallthru
          _
        // Predicated region
        $region53: #{embedding_forward.1} parent=31 // pred_check
          %p5954 = pneg %p110
        $region54: #{embedding_forward.1} parent=31 // pred_check_branch
          %5956 = sbr.rel (%p5954) target = $region56
        $region55: #{embedding_forward.1} parent=31 // pred_region
          %s5958 = ssub.s32 32, 32
          %5959 = vsyncadd [#allocation4], %s5958
          %s5961 = sshll.u32 [#allocation8], 4
          %s5962 = int_to_ptr.vmem [resolvable:$true] %s5961
          %5964 = dma.vmem_to_hbm [thread:$0]  %s5962, 32, %s3, [#allocation4]
        $region56: #{embedding_forward.1} parent=31 // pred_fallthru
          _
        // Predicated region
        $region57: #{embedding_forward.1} parent=31 // pred_check
          %p5965 = pneg %p131
        $region58: #{embedding_forward.1} parent=31 // pred_check_branch
          %5967 = sbr.rel (%p5965) target = $region60
        $region59: #{embedding_forward.1} parent=31 // pred_region
          %s5969 = ssub.s32 32, 32
          %5970 = vsyncadd [#allocation10], %s5969
          %s5972 = sshll.u32 [#allocation9], 4
          %s5973 = int_to_ptr.vmem [resolvable:$true] %s5972
          %5975 = dma.vmem_to_hbm [thread:$0]  %s5973, 32, %s4, [#allocation10]
        $region60: #{embedding_forward.1} parent=31 // pred_fallthru
          _
        // Predicated region
        $region61: #{embedding_forward.1} parent=31 // pred_check
          %p5976 = pneg %p110
        $region62: #{embedding_forward.1} parent=31 // pred_check_branch
          %5978 = sbr.rel (%p5976) target = $region64
        $region63: #{embedding_forward.1} parent=31 // pred_region
          %5979 = dma.done [#allocation4], 32
        $region64: #{embedding_forward.1} parent=31 // pred_fallthru
          _
        // Predicated region
        $region65: #{embedding_forward.1} parent=31 // pred_check
          %p5980 = pneg %p131
        $region66: #{embedding_forward.1} parent=31 // pred_check_branch
          %5982 = sbr.rel (%p5980) target = $region68
        $region67: #{embedding_forward.1} parent=31 // pred_region
          %5983 = dma.done [#allocation10], 32
        $region68: #{embedding_forward.1} parent=31 // pred_fallthru
          _
      $region32: #{embedding_forward.1} parent=5 // pred_fallthru
        _
      %p5984 = scmp.le.s32.totalorder 2, %s19
      // Predicated region
      $region69: #{embedding_forward.1} parent=5 // pred_check
        %p5985 = pneg %p5984
      $region70: #{embedding_forward.1} parent=5 // pred_check_branch
        %5987 = sbr.rel (%p5985) target = $region72
      $region71: #{embedding_forward.1} parent=5 // pred_region
        %s5988 = ssub.s32 %s19, 2
      $region72: #{embedding_forward.1} parent=5 // pred_fallthru
        _
    $region6: #{embedding_forward.1} parent=1 // loop_footer
      %s23 = sadd.s32 1, %s19
    $region7: #{embedding_forward.1} parent=1 // loop_footer_branch
      %18 = sbr.rel target = $region3
    $region8: #{embedding_forward.1} parent=1 // loop_exit
      _
    %5989 = vsyncpa [#allocation3], 1
    %s5990 = scalar_lea.sflag [#allocation3], 1
    %5991 = vsyncpa %s5990, 1
    %5992 = vsyncpa [#allocation6], 1
    %s5993 = scalar_lea.sflag [#allocation6], 1
    %5994 = vsyncpa %s5993, 1
    %5995 = vsyncpa [#allocation4], 1
    %s5996 = scalar_lea.sflag [#allocation4], 1
    %5997 = vsyncpa %s5996, 1
    %5998 = vsyncpa [#allocation10], 1

</llo_original>
